<compile_context>
chip_gen: v5e
topology: v5e:2x2
jax: 0.10.0
libtpu: 0.0.40
codegen_flags: <defaults>
</compile_context>

<pallas_src>
import functools

import jax
import jax.numpy as jnp
import numpy as np
from jax.experimental import pallas as pl
from jax.experimental.pallas import tpu as pltpu


def _round_up8(n: int) -> int:
    return max(8, ((n + 7) // 8) * 8)


# ----------------------------------------------------------------------------
# One-hot selection matrix for the conv1 im2col (built once with numpy).
#   column j = ((q*6+h)*6+w)*9 + (kh*3+kw),  q = qh*2+qw  (pool quadrant)
#   row    s = flattened 14x14 input position (2h+qh+kh)*14 + (2w+qw+kw)
# x_flat(B,196) @ S  ==  exact gather of all conv1 patches (no XLA gather op).
# ----------------------------------------------------------------------------
def _conv1_gather_matrix() -> np.ndarray:
    S = np.zeros((196, 4 * 36 * 9), np.float32)
    j = 0
    for qh in range(2):
        for qw in range(2):
            for h in range(6):
                for w in range(6):
                    for kh in range(3):
                        for kw in range(3):
                            s = (2 * h + qh + kh) * 14 + (2 * w + qw + kw)
                            S[s, j] = 1.0
                            j += 1
    return S


# ----------------------------------------------------------------------------
# Fused Pallas kernel: whole forward pass in one invocation
# ----------------------------------------------------------------------------
def _fused_forward_kernel(p1_ref, w1_ref, b1_ref, w2_ref, b2_ref, wf_ref, bf_ref,
                          o_ref, h1_buf, *, batch, bp):
    """Whole forward for a small (row-padded) batch.

    p1_ref : (4*36*Bp, 9) conv1 im2col patches, rows = (quadrant q, pooled h,
             pooled w, padded batch b); (h, w) in 6x6, q = qh*2 + qw.
    w1_ref : (9, 64)    conv1 weight, K order (kh, kw).
    b1_ref : (1, 64)
    w2_ref : (576, 32)  conv2 weight, K order (kh, kw, ci).
    b2_ref : (1, 32)
    wf_ref : (128, 2)   fc weight permuted to (pos=(ph*2+pw), channel) order.
    bf_ref : (1, 2)
    o_ref  : (B, 2)     log-probabilities.
    h1_buf : (36*Bp, 64) scratch: pooled conv1 activations, row=(h*6+w)*Bp + b.
    """
    B, Bp = batch, bp
    f32 = jnp.float32

    w1 = w1_ref[...]                       # (9, 64)   hoisted loads
    b1 = b1_ref[...]                       # (1, 64)

    # ---- conv1 + 2x2 max-pool + bias + relu.
    # Incremental max across the 4 pool quadrants (per review), processed in 4
    # row chunks of 9*Bp so the live accumulator stays ~18 vregs.
    nq = 36 * Bp                           # rows per quadrant
    ck = 9 * Bp                            # rows per chunk (8-aligned)
    for ch in range(4):
        acc = jnp.dot(p1_ref[pl.ds(ch * ck, ck), :], w1,
                      preferred_element_type=f32)
        for q in range(1, 4):
            acc = jnp.maximum(
                acc,
                jnp.dot(p1_ref[pl.ds(q * nq + ch * ck, ck), :], w1,
                        preferred_element_type=f32))
        # max(relu(x + b)) == relu(max(x) + b): bias shared across the window.
        h1_buf[pl.ds(ch * ck, ck), :] = jnp.maximum(acc + b1, 0.0)

    # ---- conv2 as implicit GEMM (no im2col scratch, no masked copies).
    # For pre-pool output row oh2 and tap (kh,kw), the needed h1 rows are one
    # contiguous 8-aligned block of 4*Bp rows: positions (oh2+kh, kw .. kw+3).
    accs = [jnp.zeros((4 * Bp, 32), f32) for _ in range(4)]   # rows = (ow2, b)
    for kh in range(3):
        for kw in range(3):
            wt = w2_ref[pl.ds((kh * 3 + kw) * 64, 64), :]     # (64, 32)
            for oh2 in range(4):
                src = ((oh2 + kh) * 6 + kw) * Bp
                accs[oh2] = accs[oh2] + jnp.dot(
                    h1_buf[pl.ds(src, 4 * Bp), :], wt,
                    preferred_element_type=f32)

    # ---- 2x2 max-pool + bias + relu + fc, accumulated per pooled position
    #      (no h2 / feature scratch buffers).
    b2 = b2_ref[...]                       # (1, 32)
    y = jnp.zeros((Bp, 2), f32)
    for p2h in range(2):
        m = jnp.maximum(accs[2 * p2h], accs[2 * p2h + 1])     # max over q2h
        for p2w in range(2):
            h2 = jnp.maximum(m[2 * p2w * Bp:(2 * p2w + 1) * Bp],
                             m[(2 * p2w + 1) * Bp:(2 * p2w + 2) * Bp])
            h2 = jnp.maximum(h2 + b2, 0.0)                    # (Bp, 32)
            p = p2h * 2 + p2w
            y = y + jnp.dot(h2, wf_ref[pl.ds(p * 32, 32), :],
                            preferred_element_type=f32)
    y = y + bf_ref[...]

    # ---- log_softmax over the 2 classes
    mx = jnp.max(y, axis=1, keepdims=True)
    lse = jnp.log(jnp.sum(jnp.exp(y - mx), axis=1, keepdims=True)) + mx
    o_ref[...] = (y - lse)[:B, :]


# ----------------------------------------------------------------------------
# pallas_call wrapper
# ----------------------------------------------------------------------------
def fused_forward(patches1, w1m, b1m, w2m, b2m, wfm, bfm, batch, bp):
    kernel = functools.partial(_fused_forward_kernel, batch=batch, bp=bp)

    def full(a):
        return pl.BlockSpec(a.shape, lambda i: (0, 0))

    return pl.pallas_call(
        kernel,
        out_shape=jax.ShapeDtypeStruct((batch, 2), jnp.float32),
        grid=(1,),
        in_specs=[full(patches1), full(w1m), full(b1m), full(w2m), full(b2m),
                  full(wfm), full(bfm)],
        out_specs=pl.BlockSpec((batch, 2), lambda i: (0, 0)),
        scratch_shapes=[
            pltpu.VMEM((36 * bp, 64), jnp.float32),   # pooled conv1 activations
        ],
        compiler_params=pltpu.CompilerParams(
            dimension_semantics=("arbitrary",)),      # tiny B: single TC step
    )(patches1, w1m, b1m, w2m, b2m, wfm, bfm)


# ----------------------------------------------------------------------------
# One-time parameter re-layouts (done at init, NOT per forward call)
# ----------------------------------------------------------------------------
def prepare_params(params):
    w1, b1, w2, b2, wf, bf = params
    w1m = w1[:, 0].reshape(64, 9).T                      # (9, 64),  K = (kh, kw)
    b1m = b1.reshape(1, 64)
    w2m = w2.transpose(2, 3, 1, 0).reshape(576, 32)      # (576,32), K = (kh,kw,ci)
    b2m = b2.reshape(1, 32)
    # PyTorch flatten index c*4 + ph*2 + pw  ->  kernel feature (ph*2+pw)*32 + c
    wfm = wf.reshape(2, 32, 4).transpose(2, 1, 0).reshape(128, 2)
    bfm = bf.reshape(1, 2)
    sel = jnp.asarray(_conv1_gather_matrix())            # (196, 1296) one-hot
    return (jnp.asarray(w1m), jnp.asarray(b1m), jnp.asarray(w2m),
            jnp.asarray(b2m), jnp.asarray(wfm), jnp.asarray(bfm), sel)


# ----------------------------------------------------------------------------
# JAX glue: conv1 im2col as one exact selection matmul + one transpose
# ----------------------------------------------------------------------------
def make_forward(prepared):
    w1m, b1m, w2m, b2m, wfm, bfm, sel = prepared

    @jax.jit
    def forward(x):
        """x: (B, 1, 14, 14) NCHW float32. Returns log-probs (B, 2)."""
        B = x.shape[0]
        Bp = _round_up8(B)
        xf = x.reshape(B, 14 * 14)                       # channel dim is 1
        if Bp != B:
            xf = jnp.pad(xf, ((0, Bp - B), (0, 0)))      # zero-pad batch rows
        # exact one-hot gather of all conv1 patches on the MXU (no XLA gather)
        g = jnp.dot(xf, sel, precision=jax.lax.Precision.HIGHEST)  # (Bp, 1296)
        patches1 = jnp.transpose(g.reshape(Bp, 144, 9),
                                 (1, 0, 2)).reshape(144 * Bp, 9)
        return fused_forward(patches1, w1m, b1m, w2m, b2m, wfm, bfm, B, Bp)

    return forward


# ----------------------------------------------------------------------------
# Pure-JAX reference (correctness check only)
# ----------------------------------------------------------------------------
def reference(x, params):
    w1, b1, w2, b2, wf, bf = params
    dn = ('NCHW', 'OIHW', 'NCHW')
    y = jax.lax.conv_general_dilated(x, w1, (1, 1), 'VALID', dimension_numbers=dn)
    y = jnp.maximum(y + b1[None, :, None, None], 0.0)
    y = jax.lax.reduce_window(y, -jnp.inf, jax.lax.max, (1, 1, 2, 2), (1, 1, 2, 2), 'VALID')
    y = jax.lax.conv_general_dilated(y, w2, (1, 1), 'VALID', dimension_numbers=dn)
    y = jnp.maximum(y + b2[None, :, None, None], 0.0)
    y = jax.lax.reduce_window(y, -jnp.inf, jax.lax.max, (1, 1, 2, 2), (1, 1, 2, 2), 'VALID')
    y = y.reshape(y.shape[0], -1)
    y = y @ wf.T + bf
    return jax.nn.log_softmax(y, axis=1)


# ----------------------------------------------------------------------------
if __name__ == "__main__":
    key = jax.random.PRNGKey(0)
    k1, k2, k3, k4, k5, k6, kx = jax.random.split(key, 7)

    # Deterministic synthetic parameters (PyTorch layer shapes).
    w1 = jax.random.normal(k1, (64, 1, 3, 3), jnp.float32) * 0.1    # Conv2d(1, 64, 3)
    b1 = jax.random.normal(k2, (64,), jnp.float32) * 0.1
    w2 = jax.random.normal(k3, (32, 64, 3, 3), jnp.float32) * 0.05  # Conv2d(64, 32, 3)
    b2 = jax.random.normal(k4, (32,), jnp.float32) * 0.05
    wf = jax.random.normal(k5, (2, 128), jnp.float32) * 0.05        # Linear(128, 2)
    bf = jax.random.normal(k6, (2,), jnp.float32) * 0.05
    params = (w1, b1, w2, b2, wf, bf)

    # Input: NCHW, 14x14 single-channel (fc1 in_features=128 => 32*2*2 => 14x14).
    x = jax.random.normal(kx, (2, 1, 14, 14), jnp.float32)

    prepared = prepare_params(params)          # one-time weight re-layouts
    fwd = make_forward(prepared)

    out = jax.block_until_ready(fwd(x))
    ref = jax.block_until_ready(reference(x, params))
    np.testing.assert_allclose(np.asarray(out), np.asarray(ref), rtol=1e-4, atol=1e-4)

    print("KERNEL_OK")
</pallas_src>

<mosaic_0001>
module attributes {stable_mosaic.version = 11 : i64} {
  func.func @_fused_forward_kernel(%arg0: i32, %arg1: memref<1152x9xf32, #tpu.memory_space<vmem>>, %arg2: memref<9x64xf32, #tpu.memory_space<vmem>>, %arg3: memref<1x64xf32, #tpu.memory_space<vmem>>, %arg4: memref<576x32xf32, #tpu.memory_space<vmem>>, %arg5: memref<1x32xf32, #tpu.memory_space<vmem>>, %arg6: memref<128x2xf32, #tpu.memory_space<vmem>>, %arg7: memref<1x2xf32, #tpu.memory_space<vmem>>, %arg8: memref<2x2xf32, #tpu.memory_space<vmem>>, %arg9: memref<288x64xf32, #tpu.memory_space<vmem>>) attributes {dimension_semantics = [#tpu.dimension_semantics<arbitrary>], iteration_bounds = array<i64: 1>, scalar_prefetch = 0 : i64, scratch_operands = 1 : i64, tpu.core_type = #tpu.core_type<tc>, window_params = [{pipeline_mode = #tpu.pipeline_mode<synchronous>, transform_indices = @transform_0, window_bounds = array<i64: 1152, 9>}, {pipeline_mode = #tpu.pipeline_mode<synchronous>, transform_indices = @transform_1, window_bounds = array<i64: 9, 64>}, {pipeline_mode = #tpu.pipeline_mode<synchronous>, transform_indices = @transform_2, window_bounds = array<i64: 1, 64>}, {pipeline_mode = #tpu.pipeline_mode<synchronous>, transform_indices = @transform_3, window_bounds = array<i64: 576, 32>}, {pipeline_mode = #tpu.pipeline_mode<synchronous>, transform_indices = @transform_4, window_bounds = array<i64: 1, 32>}, {pipeline_mode = #tpu.pipeline_mode<synchronous>, transform_indices = @transform_5, window_bounds = array<i64: 128, 2>}, {pipeline_mode = #tpu.pipeline_mode<synchronous>, transform_indices = @transform_6, window_bounds = array<i64: 1, 2>}, {pipeline_mode = #tpu.pipeline_mode<synchronous>, transform_indices = @transform_7, window_bounds = array<i64: 2, 2>}]} {
    %c0 = arith.constant 0 : index
    %c0_0 = arith.constant 0 : index
    %0 = vector.load %arg2[%c0, %c0_0] : memref<9x64xf32, #tpu.memory_space<vmem>>, vector<9x64xf32>
    %c0_1 = arith.constant 0 : index
    %c0_2 = arith.constant 0 : index
    %1 = vector.load %arg3[%c0_1, %c0_2] : memref<1x64xf32, #tpu.memory_space<vmem>>, vector<1x64xf32>
    %c0_3 = arith.constant 0 : index
    %c0_4 = arith.constant 0 : index
    %2 = vector.load %arg1[%c0_3, %c0_4] : memref<1152x9xf32, #tpu.memory_space<vmem>>, vector<72x9xf32>
    %cst = arith.constant dense<0.000000e+00> : vector<72x64xf32>
    %3 = tpu.matmul %2, %0, %cst {dimension_numbers = #tpu.dot_dimension_numbers<[1], [0], [0], [1], [0, 0, 1, 1], [], []>} : vector<72x9xf32>, vector<9x64xf32>, vector<72x64xf32> -> vector<72x64xf32>
    %c288 = arith.constant 288 : index
    %c0_5 = arith.constant 0 : index
    %4 = vector.load %arg1[%c288, %c0_5] : memref<1152x9xf32, #tpu.memory_space<vmem>>, vector<72x9xf32>
    %cst_6 = arith.constant dense<0.000000e+00> : vector<72x64xf32>
    %5 = tpu.matmul %4, %0, %cst_6 {dimension_numbers = #tpu.dot_dimension_numbers<[1], [0], [0], [1], [0, 0, 1, 1], [], []>} : vector<72x9xf32>, vector<9x64xf32>, vector<72x64xf32> -> vector<72x64xf32>
    %6 = arith.maximumf %3, %5 : vector<72x64xf32>
    %c576 = arith.constant 576 : index
    %c0_7 = arith.constant 0 : index
    %7 = vector.load %arg1[%c576, %c0_7] : memref<1152x9xf32, #tpu.memory_space<vmem>>, vector<72x9xf32>
    %cst_8 = arith.constant dense<0.000000e+00> : vector<72x64xf32>
    %8 = tpu.matmul %7, %0, %cst_8 {dimension_numbers = #tpu.dot_dimension_numbers<[1], [0], [0], [1], [0, 0, 1, 1], [], []>} : vector<72x9xf32>, vector<9x64xf32>, vector<72x64xf32> -> vector<72x64xf32>
    %9 = arith.maximumf %6, %8 : vector<72x64xf32>
    %c864 = arith.constant 864 : index
    %c0_9 = arith.constant 0 : index
    %10 = vector.load %arg1[%c864, %c0_9] : memref<1152x9xf32, #tpu.memory_space<vmem>>, vector<72x9xf32>
    %cst_10 = arith.constant dense<0.000000e+00> : vector<72x64xf32>
    %11 = tpu.matmul %10, %0, %cst_10 {dimension_numbers = #tpu.dot_dimension_numbers<[1], [0], [0], [1], [0, 0, 1, 1], [], []>} : vector<72x9xf32>, vector<9x64xf32>, vector<72x64xf32> -> vector<72x64xf32>
    %12 = arith.maximumf %9, %11 : vector<72x64xf32>
    %13 = vector.broadcast %1 : vector<1x64xf32> to vector<72x64xf32>
    %14 = arith.addf %12, %13 : vector<72x64xf32>
    %cst_11 = arith.constant 0.000000e+00 : f32
    %15 = vector.broadcast %cst_11 : f32 to vector<72x64xf32>
    %16 = arith.maximumf %14, %15 : vector<72x64xf32>
    %c0_12 = arith.constant 0 : index
    %c0_13 = arith.constant 0 : index
    %17 = vector.load %arg9[%c0_12, %c0_13] : memref<288x64xf32, #tpu.memory_space<vmem>>, vector<72x64xf32>
    tpu.vector_store %arg9[%c0_12, %c0_13], %16 {strides = array<i32>} : memref<288x64xf32, #tpu.memory_space<vmem>>, vector<72x64xf32>,
    %c72 = arith.constant 72 : index
    %c0_14 = arith.constant 0 : index
    %18 = vector.load %arg1[%c72, %c0_14] : memref<1152x9xf32, #tpu.memory_space<vmem>>, vector<72x9xf32>
    %cst_15 = arith.constant dense<0.000000e+00> : vector<72x64xf32>
    %19 = tpu.matmul %18, %0, %cst_15 {dimension_numbers = #tpu.dot_dimension_numbers<[1], [0], [0], [1], [0, 0, 1, 1], [], []>} : vector<72x9xf32>, vector<9x64xf32>, vector<72x64xf32> -> vector<72x64xf32>
    %c360 = arith.constant 360 : index
    %c0_16 = arith.constant 0 : index
    %20 = vector.load %arg1[%c360, %c0_16] : memref<1152x9xf32, #tpu.memory_space<vmem>>, vector<72x9xf32>
    %cst_17 = arith.constant dense<0.000000e+00> : vector<72x64xf32>
    %21 = tpu.matmul %20, %0, %cst_17 {dimension_numbers = #tpu.dot_dimension_numbers<[1], [0], [0], [1], [0, 0, 1, 1], [], []>} : vector<72x9xf32>, vector<9x64xf32>, vector<72x64xf32> -> vector<72x64xf32>
    %22 = arith.maximumf %19, %21 : vector<72x64xf32>
    %c648 = arith.constant 648 : index
    %c0_18 = arith.constant 0 : index
    %23 = vector.load %arg1[%c648, %c0_18] : memref<1152x9xf32, #tpu.memory_space<vmem>>, vector<72x9xf32>
    %cst_19 = arith.constant dense<0.000000e+00> : vector<72x64xf32>
    %24 = tpu.matmul %23, %0, %cst_19 {dimension_numbers = #tpu.dot_dimension_numbers<[1], [0], [0], [1], [0, 0, 1, 1], [], []>} : vector<72x9xf32>, vector<9x64xf32>, vector<72x64xf32> -> vector<72x64xf32>
    %25 = arith.maximumf %22, %24 : vector<72x64xf32>
    %c936 = arith.constant 936 : index
    %c0_20 = arith.constant 0 : index
    %26 = vector.load %arg1[%c936, %c0_20] : memref<1152x9xf32, #tpu.memory_space<vmem>>, vector<72x9xf32>
    %cst_21 = arith.constant dense<0.000000e+00> : vector<72x64xf32>
    %27 = tpu.matmul %26, %0, %cst_21 {dimension_numbers = #tpu.dot_dimension_numbers<[1], [0], [0], [1], [0, 0, 1, 1], [], []>} : vector<72x9xf32>, vector<9x64xf32>, vector<72x64xf32> -> vector<72x64xf32>
    %28 = arith.maximumf %25, %27 : vector<72x64xf32>
    %29 = vector.broadcast %1 : vector<1x64xf32> to vector<72x64xf32>
    %30 = arith.addf %28, %29 : vector<72x64xf32>
    %cst_22 = arith.constant 0.000000e+00 : f32
    %31 = vector.broadcast %cst_22 : f32 to vector<72x64xf32>
    %32 = arith.maximumf %30, %31 : vector<72x64xf32>
    %c72_23 = arith.constant 72 : index
    %c0_24 = arith.constant 0 : index
    %33 = vector.load %arg9[%c72_23, %c0_24] : memref<288x64xf32, #tpu.memory_space<vmem>>, vector<72x64xf32>
    tpu.vector_store %arg9[%c72_23, %c0_24], %32 {strides = array<i32>} : memref<288x64xf32, #tpu.memory_space<vmem>>, vector<72x64xf32>,
    %c144 = arith.constant 144 : index
    %c0_25 = arith.constant 0 : index
    %34 = vector.load %arg1[%c144, %c0_25] : memref<1152x9xf32, #tpu.memory_space<vmem>>, vector<72x9xf32>
    %cst_26 = arith.constant dense<0.000000e+00> : vector<72x64xf32>
    %35 = tpu.matmul %34, %0, %cst_26 {dimension_numbers = #tpu.dot_dimension_numbers<[1], [0], [0], [1], [0, 0, 1, 1], [], []>} : vector<72x9xf32>, vector<9x64xf32>, vector<72x64xf32> -> vector<72x64xf32>
    %c432 = arith.constant 432 : index
    %c0_27 = arith.constant 0 : index
    %36 = vector.load %arg1[%c432, %c0_27] : memref<1152x9xf32, #tpu.memory_space<vmem>>, vector<72x9xf32>
    %cst_28 = arith.constant dense<0.000000e+00> : vector<72x64xf32>
    %37 = tpu.matmul %36, %0, %cst_28 {dimension_numbers = #tpu.dot_dimension_numbers<[1], [0], [0], [1], [0, 0, 1, 1], [], []>} : vector<72x9xf32>, vector<9x64xf32>, vector<72x64xf32> -> vector<72x64xf32>
    %38 = arith.maximumf %35, %37 : vector<72x64xf32>
    %c720 = arith.constant 720 : index
    %c0_29 = arith.constant 0 : index
    %39 = vector.load %arg1[%c720, %c0_29] : memref<1152x9xf32, #tpu.memory_space<vmem>>, vector<72x9xf32>
    %cst_30 = arith.constant dense<0.000000e+00> : vector<72x64xf32>
    %40 = tpu.matmul %39, %0, %cst_30 {dimension_numbers = #tpu.dot_dimension_numbers<[1], [0], [0], [1], [0, 0, 1, 1], [], []>} : vector<72x9xf32>, vector<9x64xf32>, vector<72x64xf32> -> vector<72x64xf32>
    %41 = arith.maximumf %38, %40 : vector<72x64xf32>
    %c1008 = arith.constant 1008 : index
    %c0_31 = arith.constant 0 : index
    %42 = vector.load %arg1[%c1008, %c0_31] : memref<1152x9xf32, #tpu.memory_space<vmem>>, vector<72x9xf32>
    %cst_32 = arith.constant dense<0.000000e+00> : vector<72x64xf32>
    %43 = tpu.matmul %42, %0, %cst_32 {dimension_numbers = #tpu.dot_dimension_numbers<[1], [0], [0], [1], [0, 0, 1, 1], [], []>} : vector<72x9xf32>, vector<9x64xf32>, vector<72x64xf32> -> vector<72x64xf32>
    %44 = arith.maximumf %41, %43 : vector<72x64xf32>
    %45 = vector.broadcast %1 : vector<1x64xf32> to vector<72x64xf32>
    %46 = arith.addf %44, %45 : vector<72x64xf32>
    %cst_33 = arith.constant 0.000000e+00 : f32
    %47 = vector.broadcast %cst_33 : f32 to vector<72x64xf32>
    %48 = arith.maximumf %46, %47 : vector<72x64xf32>
    %c144_34 = arith.constant 144 : index
    %c0_35 = arith.constant 0 : index
    %49 = vector.load %arg9[%c144_34, %c0_35] : memref<288x64xf32, #tpu.memory_space<vmem>>, vector<72x64xf32>
    tpu.vector_store %arg9[%c144_34, %c0_35], %48 {strides = array<i32>} : memref<288x64xf32, #tpu.memory_space<vmem>>, vector<72x64xf32>,
    %c216 = arith.constant 216 : index
    %c0_36 = arith.constant 0 : index
    %50 = vector.load %arg1[%c216, %c0_36] : memref<1152x9xf32, #tpu.memory_space<vmem>>, vector<72x9xf32>
    %cst_37 = arith.constant dense<0.000000e+00> : vector<72x64xf32>
    %51 = tpu.matmul %50, %0, %cst_37 {dimension_numbers = #tpu.dot_dimension_numbers<[1], [0], [0], [1], [0, 0, 1, 1], [], []>} : vector<72x9xf32>, vector<9x64xf32>, vector<72x64xf32> -> vector<72x64xf32>
    %c504 = arith.constant 504 : index
    %c0_38 = arith.constant 0 : index
    %52 = vector.load %arg1[%c504, %c0_38] : memref<1152x9xf32, #tpu.memory_space<vmem>>, vector<72x9xf32>
    %cst_39 = arith.constant dense<0.000000e+00> : vector<72x64xf32>
    %53 = tpu.matmul %52, %0, %cst_39 {dimension_numbers = #tpu.dot_dimension_numbers<[1], [0], [0], [1], [0, 0, 1, 1], [], []>} : vector<72x9xf32>, vector<9x64xf32>, vector<72x64xf32> -> vector<72x64xf32>
    %54 = arith.maximumf %51, %53 : vector<72x64xf32>
    %c792 = arith.constant 792 : index
    %c0_40 = arith.constant 0 : index
    %55 = vector.load %arg1[%c792, %c0_40] : memref<1152x9xf32, #tpu.memory_space<vmem>>, vector<72x9xf32>
    %cst_41 = arith.constant dense<0.000000e+00> : vector<72x64xf32>
    %56 = tpu.matmul %55, %0, %cst_41 {dimension_numbers = #tpu.dot_dimension_numbers<[1], [0], [0], [1], [0, 0, 1, 1], [], []>} : vector<72x9xf32>, vector<9x64xf32>, vector<72x64xf32> -> vector<72x64xf32>
    %57 = arith.maximumf %54, %56 : vector<72x64xf32>
    %c1080 = arith.constant 1080 : index
    %c0_42 = arith.constant 0 : index
    %58 = vector.load %arg1[%c1080, %c0_42] : memref<1152x9xf32, #tpu.memory_space<vmem>>, vector<72x9xf32>
    %cst_43 = arith.constant dense<0.000000e+00> : vector<72x64xf32>
    %59 = tpu.matmul %58, %0, %cst_43 {dimension_numbers = #tpu.dot_dimension_numbers<[1], [0], [0], [1], [0, 0, 1, 1], [], []>} : vector<72x9xf32>, vector<9x64xf32>, vector<72x64xf32> -> vector<72x64xf32>
    %60 = arith.maximumf %57, %59 : vector<72x64xf32>
    %61 = vector.broadcast %1 : vector<1x64xf32> to vector<72x64xf32>
    %62 = arith.addf %60, %61 : vector<72x64xf32>
    %cst_44 = arith.constant 0.000000e+00 : f32
    %63 = vector.broadcast %cst_44 : f32 to vector<72x64xf32>
    %64 = arith.maximumf %62, %63 : vector<72x64xf32>
    %c216_45 = arith.constant 216 : index
    %c0_46 = arith.constant 0 : index
    %65 = vector.load %arg9[%c216_45, %c0_46] : memref<288x64xf32, #tpu.memory_space<vmem>>, vector<72x64xf32>
    tpu.vector_store %arg9[%c216_45, %c0_46], %64 {strides = array<i32>} : memref<288x64xf32, #tpu.memory_space<vmem>>, vector<72x64xf32>,
    %cst_47 = arith.constant 0.000000e+00 : f32
    %66 = vector.broadcast %cst_47 : f32 to vector<32x32xf32>
    %cst_48 = arith.constant 0.000000e+00 : f32
    %67 = vector.broadcast %cst_48 : f32 to vector<32x32xf32>
    %cst_49 = arith.constant 0.000000e+00 : f32
    %68 = vector.broadcast %cst_49 : f32 to vector<32x32xf32>
    %cst_50 = arith.constant 0.000000e+00 : f32
    %69 = vector.broadcast %cst_50 : f32 to vector<32x32xf32>
    %c0_51 = arith.constant 0 : index
    %c0_52 = arith.constant 0 : index
    %70 = vector.load %arg4[%c0_51, %c0_52] : memref<576x32xf32, #tpu.memory_space<vmem>>, vector<64x32xf32>
    %c0_53 = arith.constant 0 : index
    %c0_54 = arith.constant 0 : index
    %71 = vector.load %arg9[%c0_53, %c0_54] : memref<288x64xf32, #tpu.memory_space<vmem>>, vector<32x64xf32>
    %cst_55 = arith.constant dense<0.000000e+00> : vector<32x32xf32>
    %72 = tpu.matmul %71, %70, %cst_55 {dimension_numbers = #tpu.dot_dimension_numbers<[1], [0], [0], [1], [0, 0, 1, 1], [], []>} : vector<32x64xf32>, vector<64x32xf32>, vector<32x32xf32> -> vector<32x32xf32>
    %73 = arith.addf %66, %72 : vector<32x32xf32>
    %c48 = arith.constant 48 : index
    %c0_56 = arith.constant 0 : index
    %74 = vector.load %arg9[%c48, %c0_56] : memref<288x64xf32, #tpu.memory_space<vmem>>, vector<32x64xf32>
    %cst_57 = arith.constant dense<0.000000e+00> : vector<32x32xf32>
    %75 = tpu.matmul %74, %70, %cst_57 {dimension_numbers = #tpu.dot_dimension_numbers<[1], [0], [0], [1], [0, 0, 1, 1], [], []>} : vector<32x64xf32>, vector<64x32xf32>, vector<32x32xf32> -> vector<32x32xf32>
    %76 = arith.addf %67, %75 : vector<32x32xf32>
    %c96 = arith.constant 96 : index
    %c0_58 = arith.constant 0 : index
    %77 = vector.load %arg9[%c96, %c0_58] : memref<288x64xf32, #tpu.memory_space<vmem>>, vector<32x64xf32>
    %cst_59 = arith.constant dense<0.000000e+00> : vector<32x32xf32>
    %78 = tpu.matmul %77, %70, %cst_59 {dimension_numbers = #tpu.dot_dimension_numbers<[1], [0], [0], [1], [0, 0, 1, 1], [], []>} : vector<32x64xf32>, vector<64x32xf32>, vector<32x32xf32> -> vector<32x32xf32>
    %79 = arith.addf %68, %78 : vector<32x32xf32>
    %c144_60 = arith.constant 144 : index
    %c0_61 = arith.constant 0 : index
    %80 = vector.load %arg9[%c144_60, %c0_61] : memref<288x64xf32, #tpu.memory_space<vmem>>, vector<32x64xf32>
    %cst_62 = arith.constant dense<0.000000e+00> : vector<32x32xf32>
    %81 = tpu.matmul %80, %70, %cst_62 {dimension_numbers = #tpu.dot_dimension_numbers<[1], [0], [0], [1], [0, 0, 1, 1], [], []>} : vector<32x64xf32>, vector<64x32xf32>, vector<32x32xf32> -> vector<32x32xf32>
    %82 = arith.addf %69, %81 : vector<32x32xf32>
    %c64 = arith.constant 64 : index
    %c0_63 = arith.constant 0 : index
    %83 = vector.load %arg4[%c64, %c0_63] : memref<576x32xf32, #tpu.memory_space<vmem>>, vector<64x32xf32>
    %c8 = arith.constant 8 : index
    %c0_64 = arith.constant 0 : index
    %84 = vector.load %arg9[%c8, %c0_64] : memref<288x64xf32, #tpu.memory_space<vmem>>, vector<32x64xf32>
    %cst_65 = arith.constant dense<0.000000e+00> : vector<32x32xf32>
    %85 = tpu.matmul %84, %83, %cst_65 {dimension_numbers = #tpu.dot_dimension_numbers<[1], [0], [0], [1], [0, 0, 1, 1], [], []>} : vector<32x64xf32>, vector<64x32xf32>, vector<32x32xf32> -> vector<32x32xf32>
    %86 = arith.addf %73, %85 : vector<32x32xf32>
    %c56 = arith.constant 56 : index
    %c0_66 = arith.constant 0 : index
    %87 = vector.load %arg9[%c56, %c0_66] : memref<288x64xf32, #tpu.memory_space<vmem>>, vector<32x64xf32>
    %cst_67 = arith.constant dense<0.000000e+00> : vector<32x32xf32>
    %88 = tpu.matmul %87, %83, %cst_67 {dimension_numbers = #tpu.dot_dimension_numbers<[1], [0], [0], [1], [0, 0, 1, 1], [], []>} : vector<32x64xf32>, vector<64x32xf32>, vector<32x32xf32> -> vector<32x32xf32>
    %89 = arith.addf %76, %88 : vector<32x32xf32>
    %c104 = arith.constant 104 : index
    %c0_68 = arith.constant 0 : index
    %90 = vector.load %arg9[%c104, %c0_68] : memref<288x64xf32, #tpu.memory_space<vmem>>, vector<32x64xf32>
    %cst_69 = arith.constant dense<0.000000e+00> : vector<32x32xf32>
    %91 = tpu.matmul %90, %83, %cst_69 {dimension_numbers = #tpu.dot_dimension_numbers<[1], [0], [0], [1], [0, 0, 1, 1], [], []>} : vector<32x64xf32>, vector<64x32xf32>, vector<32x32xf32> -> vector<32x32xf32>
    %92 = arith.addf %79, %91 : vector<32x32xf32>
    %c152 = arith.constant 152 : index
    %c0_70 = arith.constant 0 : index
    %93 = vector.load %arg9[%c152, %c0_70] : memref<288x64xf32, #tpu.memory_space<vmem>>, vector<32x64xf32>
    %cst_71 = arith.constant dense<0.000000e+00> : vector<32x32xf32>
    %94 = tpu.matmul %93, %83, %cst_71 {dimension_numbers = #tpu.dot_dimension_numbers<[1], [0], [0], [1], [0, 0, 1, 1], [], []>} : vector<32x64xf32>, vector<64x32xf32>, vector<32x32xf32> -> vector<32x32xf32>
    %95 = arith.addf %82, %94 : vector<32x32xf32>
    %c128 = arith.constant 128 : index
    %c0_72 = arith.constant 0 : index
    %96 = vector.load %arg4[%c128, %c0_72] : memref<576x32xf32, #tpu.memory_space<vmem>>, vector<64x32xf32>
    %c16 = arith.constant 16 : index
    %c0_73 = arith.constant 0 : index
    %97 = vector.load %arg9[%c16, %c0_73] : memref<288x64xf32, #tpu.memory_space<vmem>>, vector<32x64xf32>
    %cst_74 = arith.constant dense<0.000000e+00> : vector<32x32xf32>
    %98 = tpu.matmul %97, %96, %cst_74 {dimension_numbers = #tpu.dot_dimension_numbers<[1], [0], [0], [1], [0, 0, 1, 1], [], []>} : vector<32x64xf32>, vector<64x32xf32>, vector<32x32xf32> -> vector<32x32xf32>
    %99 = arith.addf %86, %98 : vector<32x32xf32>
    %c64_75 = arith.constant 64 : index
    %c0_76 = arith.constant 0 : index
    %100 = vector.load %arg9[%c64_75, %c0_76] : memref<288x64xf32, #tpu.memory_space<vmem>>, vector<32x64xf32>
    %cst_77 = arith.constant dense<0.000000e+00> : vector<32x32xf32>
    %101 = tpu.matmul %100, %96, %cst_77 {dimension_numbers = #tpu.dot_dimension_numbers<[1], [0], [0], [1], [0, 0, 1, 1], [], []>} : vector<32x64xf32>, vector<64x32xf32>, vector<32x32xf32> -> vector<32x32xf32>
    %102 = arith.addf %89, %101 : vector<32x32xf32>
    %c112 = arith.constant 112 : index
    %c0_78 = arith.constant 0 : index
    %103 = vector.load %arg9[%c112, %c0_78] : memref<288x64xf32, #tpu.memory_space<vmem>>, vector<32x64xf32>
    %cst_79 = arith.constant dense<0.000000e+00> : vector<32x32xf32>
    %104 = tpu.matmul %103, %96, %cst_79 {dimension_numbers = #tpu.dot_dimension_numbers<[1], [0], [0], [1], [0, 0, 1, 1], [], []>} : vector<32x64xf32>, vector<64x32xf32>, vector<32x32xf32> -> vector<32x32xf32>
    %105 = arith.addf %92, %104 : vector<32x32xf32>
    %c160 = arith.constant 160 : index
    %c0_80 = arith.constant 0 : index
    %106 = vector.load %arg9[%c160, %c0_80] : memref<288x64xf32, #tpu.memory_space<vmem>>, vector<32x64xf32>
    %cst_81 = arith.constant dense<0.000000e+00> : vector<32x32xf32>
    %107 = tpu.matmul %106, %96, %cst_81 {dimension_numbers = #tpu.dot_dimension_numbers<[1], [0], [0], [1], [0, 0, 1, 1], [], []>} : vector<32x64xf32>, vector<64x32xf32>, vector<32x32xf32> -> vector<32x32xf32>
    %108 = arith.addf %95, %107 : vector<32x32xf32>
    %c192 = arith.constant 192 : index
    %c0_82 = arith.constant 0 : index
    %109 = vector.load %arg4[%c192, %c0_82] : memref<576x32xf32, #tpu.memory_space<vmem>>, vector<64x32xf32>
    %c48_83 = arith.constant 48 : index
    %c0_84 = arith.constant 0 : index
    %110 = vector.load %arg9[%c48_83, %c0_84] : memref<288x64xf32, #tpu.memory_space<vmem>>, vector<32x64xf32>
    %cst_85 = arith.constant dense<0.000000e+00> : vector<32x32xf32>
    %111 = tpu.matmul %110, %109, %cst_85 {dimension_numbers = #tpu.dot_dimension_numbers<[1], [0], [0], [1], [0, 0, 1, 1], [], []>} : vector<32x64xf32>, vector<64x32xf32>, vector<32x32xf32> -> vector<32x32xf32>
    %112 = arith.addf %99, %111 : vector<32x32xf32>
    %c96_86 = arith.constant 96 : index
    %c0_87 = arith.constant 0 : index
    %113 = vector.load %arg9[%c96_86, %c0_87] : memref<288x64xf32, #tpu.memory_space<vmem>>, vector<32x64xf32>
    %cst_88 = arith.constant dense<0.000000e+00> : vector<32x32xf32>
    %114 = tpu.matmul %113, %109, %cst_88 {dimension_numbers = #tpu.dot_dimension_numbers<[1], [0], [0], [1], [0, 0, 1, 1], [], []>} : vector<32x64xf32>, vector<64x32xf32>, vector<32x32xf32> -> vector<32x32xf32>
    %115 = arith.addf %102, %114 : vector<32x32xf32>
    %c144_89 = arith.constant 144 : index
    %c0_90 = arith.constant 0 : index
    %116 = vector.load %arg9[%c144_89, %c0_90] : memref<288x64xf32, #tpu.memory_space<vmem>>, vector<32x64xf32>
    %cst_91 = arith.constant dense<0.000000e+00> : vector<32x32xf32>
    %117 = tpu.matmul %116, %109, %cst_91 {dimension_numbers = #tpu.dot_dimension_numbers<[1], [0], [0], [1], [0, 0, 1, 1], [], []>} : vector<32x64xf32>, vector<64x32xf32>, vector<32x32xf32> -> vector<32x32xf32>
    %118 = arith.addf %105, %117 : vector<32x32xf32>
    %c192_92 = arith.constant 192 : index
    %c0_93 = arith.constant 0 : index
    %119 = vector.load %arg9[%c192_92, %c0_93] : memref<288x64xf32, #tpu.memory_space<vmem>>, vector<32x64xf32>
    %cst_94 = arith.constant dense<0.000000e+00> : vector<32x32xf32>
    %120 = tpu.matmul %119, %109, %cst_94 {dimension_numbers = #tpu.dot_dimension_numbers<[1], [0], [0], [1], [0, 0, 1, 1], [], []>} : vector<32x64xf32>, vector<64x32xf32>, vector<32x32xf32> -> vector<32x32xf32>
    %121 = arith.addf %108, %120 : vector<32x32xf32>
    %c256 = arith.constant 256 : index
    %c0_95 = arith.constant 0 : index
    %122 = vector.load %arg4[%c256, %c0_95] : memref<576x32xf32, #tpu.memory_space<vmem>>, vector<64x32xf32>
    %c56_96 = arith.constant 56 : index
    %c0_97 = arith.constant 0 : index
    %123 = vector.load %arg9[%c56_96, %c0_97] : memref<288x64xf32, #tpu.memory_space<vmem>>, vector<32x64xf32>
    %cst_98 = arith.constant dense<0.000000e+00> : vector<32x32xf32>
    %124 = tpu.matmul %123, %122, %cst_98 {dimension_numbers = #tpu.dot_dimension_numbers<[1], [0], [0], [1], [0, 0, 1, 1], [], []>} : vector<32x64xf32>, vector<64x32xf32>, vector<32x32xf32> -> vector<32x32xf32>
    %125 = arith.addf %112, %124 : vector<32x32xf32>
    %c104_99 = arith.constant 104 : index
    %c0_100 = arith.constant 0 : index
    %126 = vector.load %arg9[%c104_99, %c0_100] : memref<288x64xf32, #tpu.memory_space<vmem>>, vector<32x64xf32>
    %cst_101 = arith.constant dense<0.000000e+00> : vector<32x32xf32>
    %127 = tpu.matmul %126, %122, %cst_101 {dimension_numbers = #tpu.dot_dimension_numbers<[1], [0], [0], [1], [0, 0, 1, 1], [], []>} : vector<32x64xf32>, vector<64x32xf32>, vector<32x32xf32> -> vector<32x32xf32>
    %128 = arith.addf %115, %127 : vector<32x32xf32>
    %c152_102 = arith.constant 152 : index
    %c0_103 = arith.constant 0 : index
    %129 = vector.load %arg9[%c152_102, %c0_103] : memref<288x64xf32, #tpu.memory_space<vmem>>, vector<32x64xf32>
    %cst_104 = arith.constant dense<0.000000e+00> : vector<32x32xf32>
    %130 = tpu.matmul %129, %122, %cst_104 {dimension_numbers = #tpu.dot_dimension_numbers<[1], [0], [0], [1], [0, 0, 1, 1], [], []>} : vector<32x64xf32>, vector<64x32xf32>, vector<32x32xf32> -> vector<32x32xf32>
    %131 = arith.addf %118, %130 : vector<32x32xf32>
    %c200 = arith.constant 200 : index
    %c0_105 = arith.constant 0 : index
    %132 = vector.load %arg9[%c200, %c0_105] : memref<288x64xf32, #tpu.memory_space<vmem>>, vector<32x64xf32>
    %cst_106 = arith.constant dense<0.000000e+00> : vector<32x32xf32>
    %133 = tpu.matmul %132, %122, %cst_106 {dimension_numbers = #tpu.dot_dimension_numbers<[1], [0], [0], [1], [0, 0, 1, 1], [], []>} : vector<32x64xf32>, vector<64x32xf32>, vector<32x32xf32> -> vector<32x32xf32>
    %134 = arith.addf %121, %133 : vector<32x32xf32>
    %c320 = arith.constant 320 : index
    %c0_107 = arith.constant 0 : index
    %135 = vector.load %arg4[%c320, %c0_107] : memref<576x32xf32, #tpu.memory_space<vmem>>, vector<64x32xf32>
    %c64_108 = arith.constant 64 : index
    %c0_109 = arith.constant 0 : index
    %136 = vector.load %arg9[%c64_108, %c0_109] : memref<288x64xf32, #tpu.memory_space<vmem>>, vector<32x64xf32>
    %cst_110 = arith.constant dense<0.000000e+00> : vector<32x32xf32>
    %137 = tpu.matmul %136, %135, %cst_110 {dimension_numbers = #tpu.dot_dimension_numbers<[1], [0], [0], [1], [0, 0, 1, 1], [], []>} : vector<32x64xf32>, vector<64x32xf32>, vector<32x32xf32> -> vector<32x32xf32>
    %138 = arith.addf %125, %137 : vector<32x32xf32>
    %c112_111 = arith.constant 112 : index
    %c0_112 = arith.constant 0 : index
    %139 = vector.load %arg9[%c112_111, %c0_112] : memref<288x64xf32, #tpu.memory_space<vmem>>, vector<32x64xf32>
    %cst_113 = arith.constant dense<0.000000e+00> : vector<32x32xf32>
    %140 = tpu.matmul %139, %135, %cst_113 {dimension_numbers = #tpu.dot_dimension_numbers<[1], [0], [0], [1], [0, 0, 1, 1], [], []>} : vector<32x64xf32>, vector<64x32xf32>, vector<32x32xf32> -> vector<32x32xf32>
    %141 = arith.addf %128, %140 : vector<32x32xf32>
    %c160_114 = arith.constant 160 : index
    %c0_115 = arith.constant 0 : index
    %142 = vector.load %arg9[%c160_114, %c0_115] : memref<288x64xf32, #tpu.memory_space<vmem>>, vector<32x64xf32>
    %cst_116 = arith.constant dense<0.000000e+00> : vector<32x32xf32>
    %143 = tpu.matmul %142, %135, %cst_116 {dimension_numbers = #tpu.dot_dimension_numbers<[1], [0], [0], [1], [0, 0, 1, 1], [], []>} : vector<32x64xf32>, vector<64x32xf32>, vector<32x32xf32> -> vector<32x32xf32>
    %144 = arith.addf %131, %143 : vector<32x32xf32>
    %c208 = arith.constant 208 : index
    %c0_117 = arith.constant 0 : index
    %145 = vector.load %arg9[%c208, %c0_117] : memref<288x64xf32, #tpu.memory_space<vmem>>, vector<32x64xf32>
    %cst_118 = arith.constant dense<0.000000e+00> : vector<32x32xf32>
    %146 = tpu.matmul %145, %135, %cst_118 {dimension_numbers = #tpu.dot_dimension_numbers<[1], [0], [0], [1], [0, 0, 1, 1], [], []>} : vector<32x64xf32>, vector<64x32xf32>, vector<32x32xf32> -> vector<32x32xf32>
    %147 = arith.addf %134, %146 : vector<32x32xf32>
    %c384 = arith.constant 384 : index
    %c0_119 = arith.constant 0 : index
    %148 = vector.load %arg4[%c384, %c0_119] : memref<576x32xf32, #tpu.memory_space<vmem>>, vector<64x32xf32>
    %c96_120 = arith.constant 96 : index
    %c0_121 = arith.constant 0 : index
    %149 = vector.load %arg9[%c96_120, %c0_121] : memref<288x64xf32, #tpu.memory_space<vmem>>, vector<32x64xf32>
    %cst_122 = arith.constant dense<0.000000e+00> : vector<32x32xf32>
    %150 = tpu.matmul %149, %148, %cst_122 {dimension_numbers = #tpu.dot_dimension_numbers<[1], [0], [0], [1], [0, 0, 1, 1], [], []>} : vector<32x64xf32>, vector<64x32xf32>, vector<32x32xf32> -> vector<32x32xf32>
    %151 = arith.addf %138, %150 : vector<32x32xf32>
    %c144_123 = arith.constant 144 : index
    %c0_124 = arith.constant 0 : index
    %152 = vector.load %arg9[%c144_123, %c0_124] : memref<288x64xf32, #tpu.memory_space<vmem>>, vector<32x64xf32>
    %cst_125 = arith.constant dense<0.000000e+00> : vector<32x32xf32>
    %153 = tpu.matmul %152, %148, %cst_125 {dimension_numbers = #tpu.dot_dimension_numbers<[1], [0], [0], [1], [0, 0, 1, 1], [], []>} : vector<32x64xf32>, vector<64x32xf32>, vector<32x32xf32> -> vector<32x32xf32>
    %154 = arith.addf %141, %153 : vector<32x32xf32>
    %c192_126 = arith.constant 192 : index
    %c0_127 = arith.constant 0 : index
    %155 = vector.load %arg9[%c192_126, %c0_127] : memref<288x64xf32, #tpu.memory_space<vmem>>, vector<32x64xf32>
    %cst_128 = arith.constant dense<0.000000e+00> : vector<32x32xf32>
    %156 = tpu.matmul %155, %148, %cst_128 {dimension_numbers = #tpu.dot_dimension_numbers<[1], [0], [0], [1], [0, 0, 1, 1], [], []>} : vector<32x64xf32>, vector<64x32xf32>, vector<32x32xf32> -> vector<32x32xf32>
    %157 = arith.addf %144, %156 : vector<32x32xf32>
    %c240 = arith.constant 240 : index
    %c0_129 = arith.constant 0 : index
    %158 = vector.load %arg9[%c240, %c0_129] : memref<288x64xf32, #tpu.memory_space<vmem>>, vector<32x64xf32>
    %cst_130 = arith.constant dense<0.000000e+00> : vector<32x32xf32>
    %159 = tpu.matmul %158, %148, %cst_130 {dimension_numbers = #tpu.dot_dimension_numbers<[1], [0], [0], [1], [0, 0, 1, 1], [], []>} : vector<32x64xf32>, vector<64x32xf32>, vector<32x32xf32> -> vector<32x32xf32>
    %160 = arith.addf %147, %159 : vector<32x32xf32>
    %c448 = arith.constant 448 : index
    %c0_131 = arith.constant 0 : index
    %161 = vector.load %arg4[%c448, %c0_131] : memref<576x32xf32, #tpu.memory_space<vmem>>, vector<64x32xf32>
    %c104_132 = arith.constant 104 : index
    %c0_133 = arith.constant 0 : index
    %162 = vector.load %arg9[%c104_132, %c0_133] : memref<288x64xf32, #tpu.memory_space<vmem>>, vector<32x64xf32>
    %cst_134 = arith.constant dense<0.000000e+00> : vector<32x32xf32>
    %163 = tpu.matmul %162, %161, %cst_134 {dimension_numbers = #tpu.dot_dimension_numbers<[1], [0], [0], [1], [0, 0, 1, 1], [], []>} : vector<32x64xf32>, vector<64x32xf32>, vector<32x32xf32> -> vector<32x32xf32>
    %164 = arith.addf %151, %163 : vector<32x32xf32>
    %c152_135 = arith.constant 152 : index
    %c0_136 = arith.constant 0 : index
    %165 = vector.load %arg9[%c152_135, %c0_136] : memref<288x64xf32, #tpu.memory_space<vmem>>, vector<32x64xf32>
    %cst_137 = arith.constant dense<0.000000e+00> : vector<32x32xf32>
    %166 = tpu.matmul %165, %161, %cst_137 {dimension_numbers = #tpu.dot_dimension_numbers<[1], [0], [0], [1], [0, 0, 1, 1], [], []>} : vector<32x64xf32>, vector<64x32xf32>, vector<32x32xf32> -> vector<32x32xf32>
    %167 = arith.addf %154, %166 : vector<32x32xf32>
    %c200_138 = arith.constant 200 : index
    %c0_139 = arith.constant 0 : index
    %168 = vector.load %arg9[%c200_138, %c0_139] : memref<288x64xf32, #tpu.memory_space<vmem>>, vector<32x64xf32>
    %cst_140 = arith.constant dense<0.000000e+00> : vector<32x32xf32>
    %169 = tpu.matmul %168, %161, %cst_140 {dimension_numbers = #tpu.dot_dimension_numbers<[1], [0], [0], [1], [0, 0, 1, 1], [], []>} : vector<32x64xf32>, vector<64x32xf32>, vector<32x32xf32> -> vector<32x32xf32>
    %170 = arith.addf %157, %169 : vector<32x32xf32>
    %c248 = arith.constant 248 : index
    %c0_141 = arith.constant 0 : index
    %171 = vector.load %arg9[%c248, %c0_141] : memref<288x64xf32, #tpu.memory_space<vmem>>, vector<32x64xf32>
    %cst_142 = arith.constant dense<0.000000e+00> : vector<32x32xf32>
    %172 = tpu.matmul %171, %161, %cst_142 {dimension_numbers = #tpu.dot_dimension_numbers<[1], [0], [0], [1], [0, 0, 1, 1], [], []>} : vector<32x64xf32>, vector<64x32xf32>, vector<32x32xf32> -> vector<32x32xf32>
    %173 = arith.addf %160, %172 : vector<32x32xf32>
    %c512 = arith.constant 512 : index
    %c0_143 = arith.constant 0 : index
    %174 = vector.load %arg4[%c512, %c0_143] : memref<576x32xf32, #tpu.memory_space<vmem>>, vector<64x32xf32>
    %c112_144 = arith.constant 112 : index
    %c0_145 = arith.constant 0 : index
    %175 = vector.load %arg9[%c112_144, %c0_145] : memref<288x64xf32, #tpu.memory_space<vmem>>, vector<32x64xf32>
    %cst_146 = arith.constant dense<0.000000e+00> : vector<32x32xf32>
    %176 = tpu.matmul %175, %174, %cst_146 {dimension_numbers = #tpu.dot_dimension_numbers<[1], [0], [0], [1], [0, 0, 1, 1], [], []>} : vector<32x64xf32>, vector<64x32xf32>, vector<32x32xf32> -> vector<32x32xf32>
    %177 = arith.addf %164, %176 : vector<32x32xf32>
    %c160_147 = arith.constant 160 : index
    %c0_148 = arith.constant 0 : index
    %178 = vector.load %arg9[%c160_147, %c0_148] : memref<288x64xf32, #tpu.memory_space<vmem>>, vector<32x64xf32>
    %cst_149 = arith.constant dense<0.000000e+00> : vector<32x32xf32>
    %179 = tpu.matmul %178, %174, %cst_149 {dimension_numbers = #tpu.dot_dimension_numbers<[1], [0], [0], [1], [0, 0, 1, 1], [], []>} : vector<32x64xf32>, vector<64x32xf32>, vector<32x32xf32> -> vector<32x32xf32>
    %180 = arith.addf %167, %179 : vector<32x32xf32>
    %c208_150 = arith.constant 208 : index
    %c0_151 = arith.constant 0 : index
    %181 = vector.load %arg9[%c208_150, %c0_151] : memref<288x64xf32, #tpu.memory_space<vmem>>, vector<32x64xf32>
    %cst_152 = arith.constant dense<0.000000e+00> : vector<32x32xf32>
    %182 = tpu.matmul %181, %174, %cst_152 {dimension_numbers = #tpu.dot_dimension_numbers<[1], [0], [0], [1], [0, 0, 1, 1], [], []>} : vector<32x64xf32>, vector<64x32xf32>, vector<32x32xf32> -> vector<32x32xf32>
    %183 = arith.addf %170, %182 : vector<32x32xf32>
    %c256_153 = arith.constant 256 : index
    %c0_154 = arith.constant 0 : index
    %184 = vector.load %arg9[%c256_153, %c0_154] : memref<288x64xf32, #tpu.memory_space<vmem>>, vector<32x64xf32>
    %cst_155 = arith.constant dense<0.000000e+00> : vector<32x32xf32>
    %185 = tpu.matmul %184, %174, %cst_155 {dimension_numbers = #tpu.dot_dimension_numbers<[1], [0], [0], [1], [0, 0, 1, 1], [], []>} : vector<32x64xf32>, vector<64x32xf32>, vector<32x32xf32> -> vector<32x32xf32>
    %186 = arith.addf %173, %185 : vector<32x32xf32>
    %c0_156 = arith.constant 0 : index
    %c0_157 = arith.constant 0 : index
    %187 = vector.load %arg5[%c0_156, %c0_157] : memref<1x32xf32, #tpu.memory_space<vmem>>, vector<1x32xf32>
    %cst_158 = arith.constant 0.000000e+00 : f32
    %188 = vector.broadcast %cst_158 : f32 to vector<8x2xf32>
    %189 = arith.maximumf %177, %180 : vector<32x32xf32>
    %190 = vector.extract_strided_slice %189 {offsets = [0, 0], sizes = [8, 32], strides = [1, 1]} : vector<32x32xf32> to vector<8x32xf32>
    %191 = vector.extract_strided_slice %189 {offsets = [8, 0], sizes = [8, 32], strides = [1, 1]} : vector<32x32xf32> to vector<8x32xf32>
    %192 = arith.maximumf %190, %191 : vector<8x32xf32>
    %193 = vector.broadcast %187 : vector<1x32xf32> to vector<8x32xf32>
    %194 = arith.addf %192, %193 : vector<8x32xf32>
    %cst_159 = arith.constant 0.000000e+00 : f32
    %195 = vector.broadcast %cst_159 : f32 to vector<8x32xf32>
    %196 = arith.maximumf %194, %195 : vector<8x32xf32>
    %c0_160 = arith.constant 0 : index
    %c0_161 = arith.constant 0 : index
    %197 = vector.load %arg6[%c0_160, %c0_161] : memref<128x2xf32, #tpu.memory_space<vmem>>, vector<32x2xf32>
    %cst_162 = arith.constant dense<0.000000e+00> : vector<8x2xf32>
    %198 = tpu.matmul %196, %197, %cst_162 {dimension_numbers = #tpu.dot_dimension_numbers<[1], [0], [0], [1], [0, 0, 1, 1], [], []>} : vector<8x32xf32>, vector<32x2xf32>, vector<8x2xf32> -> vector<8x2xf32>
    %199 = arith.addf %188, %198 : vector<8x2xf32>
    %200 = vector.extract_strided_slice %189 {offsets = [16, 0], sizes = [8, 32], strides = [1, 1]} : vector<32x32xf32> to vector<8x32xf32>
    %201 = vector.extract_strided_slice %189 {offsets = [24, 0], sizes = [8, 32], strides = [1, 1]} : vector<32x32xf32> to vector<8x32xf32>
    %202 = arith.maximumf %200, %201 : vector<8x32xf32>
    %203 = vector.broadcast %187 : vector<1x32xf32> to vector<8x32xf32>
    %204 = arith.addf %202, %203 : vector<8x32xf32>
    %cst_163 = arith.constant 0.000000e+00 : f32
    %205 = vector.broadcast %cst_163 : f32 to vector<8x32xf32>
    %206 = arith.maximumf %204, %205 : vector<8x32xf32>
    %c32 = arith.constant 32 : index
    %c0_164 = arith.constant 0 : index
    %207 = vector.load %arg6[%c32, %c0_164] : memref<128x2xf32, #tpu.memory_space<vmem>>, vector<32x2xf32>
    %cst_165 = arith.constant dense<0.000000e+00> : vector<8x2xf32>
    %208 = tpu.matmul %206, %207, %cst_165 {dimension_numbers = #tpu.dot_dimension_numbers<[1], [0], [0], [1], [0, 0, 1, 1], [], []>} : vector<8x32xf32>, vector<32x2xf32>, vector<8x2xf32> -> vector<8x2xf32>
    %209 = arith.addf %199, %208 : vector<8x2xf32>
    %210 = arith.maximumf %183, %186 : vector<32x32xf32>
    %211 = vector.extract_strided_slice %210 {offsets = [0, 0], sizes = [8, 32], strides = [1, 1]} : vector<32x32xf32> to vector<8x32xf32>
    %212 = vector.extract_strided_slice %210 {offsets = [8, 0], sizes = [8, 32], strides = [1, 1]} : vector<32x32xf32> to vector<8x32xf32>
    %213 = arith.maximumf %211, %212 : vector<8x32xf32>
    %214 = vector.broadcast %187 : vector<1x32xf32> to vector<8x32xf32>
    %215 = arith.addf %213, %214 : vector<8x32xf32>
    %cst_166 = arith.constant 0.000000e+00 : f32
    %216 = vector.broadcast %cst_166 : f32 to vector<8x32xf32>
    %217 = arith.maximumf %215, %216 : vector<8x32xf32>
    %c64_167 = arith.constant 64 : index
    %c0_168 = arith.constant 0 : index
    %218 = vector.load %arg6[%c64_167, %c0_168] : memref<128x2xf32, #tpu.memory_space<vmem>>, vector<32x2xf32>
    %cst_169 = arith.constant dense<0.000000e+00> : vector<8x2xf32>
    %219 = tpu.matmul %217, %218, %cst_169 {dimension_numbers = #tpu.dot_dimension_numbers<[1], [0], [0], [1], [0, 0, 1, 1], [], []>} : vector<8x32xf32>, vector<32x2xf32>, vector<8x2xf32> -> vector<8x2xf32>
    %220 = arith.addf %209, %219 : vector<8x2xf32>
    %221 = vector.extract_strided_slice %210 {offsets = [16, 0], sizes = [8, 32], strides = [1, 1]} : vector<32x32xf32> to vector<8x32xf32>
    %222 = vector.extract_strided_slice %210 {offsets = [24, 0], sizes = [8, 32], strides = [1, 1]} : vector<32x32xf32> to vector<8x32xf32>
    %223 = arith.maximumf %221, %222 : vector<8x32xf32>
    %224 = vector.broadcast %187 : vector<1x32xf32> to vector<8x32xf32>
    %225 = arith.addf %223, %224 : vector<8x32xf32>
    %cst_170 = arith.constant 0.000000e+00 : f32
    %226 = vector.broadcast %cst_170 : f32 to vector<8x32xf32>
    %227 = arith.maximumf %225, %226 : vector<8x32xf32>
    %c96_171 = arith.constant 96 : index
    %c0_172 = arith.constant 0 : index
    %228 = vector.load %arg6[%c96_171, %c0_172] : memref<128x2xf32, #tpu.memory_space<vmem>>, vector<32x2xf32>
    %cst_173 = arith.constant dense<0.000000e+00> : vector<8x2xf32>
    %229 = tpu.matmul %227, %228, %cst_173 {dimension_numbers = #tpu.dot_dimension_numbers<[1], [0], [0], [1], [0, 0, 1, 1], [], []>} : vector<8x32xf32>, vector<32x2xf32>, vector<8x2xf32> -> vector<8x2xf32>
    %230 = arith.addf %220, %229 : vector<8x2xf32>
    %c0_174 = arith.constant 0 : index
    %c0_175 = arith.constant 0 : index
    %231 = vector.load %arg7[%c0_174, %c0_175] : memref<1x2xf32, #tpu.memory_space<vmem>>, vector<1x2xf32>
    %232 = vector.broadcast %231 : vector<1x2xf32> to vector<8x2xf32>
    %233 = arith.addf %230, %232 : vector<8x2xf32>
    %cst_176 = arith.constant dense<0xFF800000> : vector<8xf32>
    %234 = vector.multi_reduction <maximumf>, %233, %cst_176 [1] : vector<8x2xf32> to vector<8xf32>
    %235 = vector.shape_cast %234 : vector<8xf32> to vector<8x1xf32>
    %236 = vector.broadcast %235 : vector<8x1xf32> to vector<8x2xf32>
    %237 = arith.subf %233, %236 : vector<8x2xf32>
    %238 = math.exp %237 : vector<8x2xf32>
    %cst_177 = arith.constant dense<0.000000e+00> : vector<8xf32>
    %239 = vector.multi_reduction <add>, %238, %cst_177 [1] : vector<8x2xf32> to vector<8xf32>
    %240 = vector.shape_cast %239 : vector<8xf32> to vector<8x1xf32>
    %241 = math.log %240 : vector<8x1xf32>
    %242 = arith.addf %241, %235 : vector<8x1xf32>
    %243 = vector.broadcast %242 : vector<8x1xf32> to vector<8x2xf32>
    %244 = arith.subf %233, %243 : vector<8x2xf32>
    %245 = vector.extract_strided_slice %244 {offsets = [0, 0], sizes = [2, 2], strides = [1, 1]} : vector<8x2xf32> to vector<2x2xf32>
    %c0_178 = arith.constant 0 : index
    %c0_179 = arith.constant 0 : index
    %246 = vector.load %arg8[%c0_178, %c0_179] : memref<2x2xf32, #tpu.memory_space<vmem>>, vector<2x2xf32>
    tpu.vector_store %arg8[%c0_178, %c0_179], %245 {strides = array<i32>} : memref<2x2xf32, #tpu.memory_space<vmem>>, vector<2x2xf32>,
    return
  }
  func.func @transform_0(%arg0: i32) -> (i32, i32) {
    %c0_i32 = arith.constant 0 : i32
    %c0_i32_0 = arith.constant 0 : i32
    %c0_i32_1 = arith.constant 0 : i32
    return %c0_i32, %c0_i32_0 : i32, i32
  }
  func.func @transform_1(%arg0: i32) -> (i32, i32) {
    %c0_i32 = arith.constant 0 : i32
    %c0_i32_0 = arith.constant 0 : i32
    %c0_i32_1 = arith.constant 0 : i32
    return %c0_i32, %c0_i32_0 : i32, i32
  }
  func.func @transform_2(%arg0: i32) -> (i32, i32) {
    %c0_i32 = arith.constant 0 : i32
    %c0_i32_0 = arith.constant 0 : i32
    %c0_i32_1 = arith.constant 0 : i32
    return %c0_i32, %c0_i32_0 : i32, i32
  }
  func.func @transform_3(%arg0: i32) -> (i32, i32) {
    %c0_i32 = arith.constant 0 : i32
    %c0_i32_0 = arith.constant 0 : i32
    %c0_i32_1 = arith.constant 0 : i32
    return %c0_i32, %c0_i32_0 : i32, i32
  }
  func.func @transform_4(%arg0: i32) -> (i32, i32) {
    %c0_i32 = arith.constant 0 : i32
    %c0_i32_0 = arith.constant 0 : i32
    %c0_i32_1 = arith.constant 0 : i32
    return %c0_i32, %c0_i32_0 : i32, i32
  }
  func.func @transform_5(%arg0: i32) -> (i32, i32) {
    %c0_i32 = arith.constant 0 : i32
    %c0_i32_0 = arith.constant 0 : i32
    %c0_i32_1 = arith.constant 0 : i32
    return %c0_i32, %c0_i32_0 : i32, i32
  }
  func.func @transform_6(%arg0: i32) -> (i32, i32) {
    %c0_i32 = arith.constant 0 : i32
    %c0_i32_0 = arith.constant 0 : i32
    %c0_i32_1 = arith.constant 0 : i32
    return %c0_i32, %c0_i32_0 : i32, i32
  }
  func.func @transform_7(%arg0: i32) -> (i32, i32) {
    %c0_i32 = arith.constant 0 : i32
    %c0_i32_0 = arith.constant 0 : i32
    %c0_i32_1 = arith.constant 0 : i32
    return %c0_i32, %c0_i32_0 : i32, i32
  }
}

</mosaic_0001>

<llo_original>
// kernel: forward.1
$region0: #{forward.1}
  #allocation0 [shape = 'u32[]', space=smem, size = 0x4, offset = 0x4, fixed_abs, tag = 'smem constant byte address 0x4 - core index']
  #allocation1 [shape = 'u32[72,128]{1,0:T(1,128)}', space=vmem, size = 0x9000, scoped, tag = 'internal scratch']
  #allocation2 [shape = 'f32[288,64]{1,0:T(8,128)}', space=vmem, size = 0x24000, scoped, tag = 'scratch operand']
  %s0 = inlined_call_operand.vmem [shape: f32[1152,9], index: 0, kind: input, shape index: {}]
  %s1 = inlined_call_operand.vmem [shape: f32[9,64], index: 1, kind: input, shape index: {}]
  %s2 = inlined_call_operand.vmem [shape: f32[1,64], index: 2, kind: input, shape index: {}]
  %s3 = inlined_call_operand.vmem [shape: f32[576,32], index: 3, kind: input, shape index: {}]
  %s4 = inlined_call_operand.vmem [shape: f32[1,32], index: 4, kind: input, shape index: {}]
  %s5 = inlined_call_operand.vmem [shape: f32[128,2], index: 5, kind: input, shape index: {}]
  %s6 = inlined_call_operand.vmem [shape: f32[1,2], index: 6, kind: input, shape index: {}]
  %s7 = inlined_call_operand.hbm [shape: f32[2,2], index: 7, kind: output, shape index: {}]
  %s8 = sld [smem:[#allocation0]]
  $region38: #{forward.1} parent=0
    _
  %s10 = ssub.s32 1, %s8
  %s11 = scalar_select 0, %s10, %s8
  $region1: #{forward.1} parent=0
    #allocation3 [shape = 'u8[1024]{0}', space=vmem, size = 0x400, scoped, tag = 'output window, operand 0, single buffered']
    #allocation4 [shape = 's32[1]{0}', space=sflag, size = 0x4, scoped, tag = 'scoped memory for forward.1']
    %12 = vsyncpa [#allocation4], 0
    // Predicated region
    $region2: #{forward.1} parent=1 // pred_check
      _
    $region3: #{forward.1} parent=1 // pred_check_branch
      %14 = sbr.rel (0) target = $region5
    $region4: #{forward.1} parent=1 // pred_region
      _
    $region5: #{forward.1} parent=1 // pred_fallthru
      _
    // Predicated region
    $region6: #{forward.1} parent=1 // pred_check
      _
    $region7: #{forward.1} parent=1 // pred_check_branch
      %16 = sbr.rel (0) target = $region9
    $region8: #{forward.1} parent=1 // pred_region
      _
    $region9: #{forward.1} parent=1 // pred_fallthru
      _
    // Predicated region
    $region10: #{forward.1} parent=1 // pred_check
      _
    $region11: #{forward.1} parent=1 // pred_check_branch
      %18 = sbr.rel (0) target = $region13
    $region12: #{forward.1} parent=1 // pred_region
      _
    $region13: #{forward.1} parent=1 // pred_fallthru
      _
    // Predicated region
    $region14: #{forward.1} parent=1 // pred_check
      _
    $region15: #{forward.1} parent=1 // pred_check_branch
      %20 = sbr.rel (0) target = $region17
    $region16: #{forward.1} parent=1 // pred_region
      _
    $region17: #{forward.1} parent=1 // pred_fallthru
      _
    // Predicated region
    $region18: #{forward.1} parent=1 // pred_check
      _
    $region19: #{forward.1} parent=1 // pred_check_branch
      %22 = sbr.rel (0) target = $region21
    $region20: #{forward.1} parent=1 // pred_region
      _
    $region21: #{forward.1} parent=1 // pred_fallthru
      _
    // Predicated region
    $region22: #{forward.1} parent=1 // pred_check
      _
    $region23: #{forward.1} parent=1 // pred_check_branch
      %24 = sbr.rel (0) target = $region25
    $region24: #{forward.1} parent=1 // pred_region
      _
    $region25: #{forward.1} parent=1 // pred_fallthru
      _
    // Predicated region
    $region26: #{forward.1} parent=1 // pred_check
      _
    $region27: #{forward.1} parent=1 // pred_check_branch
      %26 = sbr.rel (0) target = $region29
    $region28: #{forward.1} parent=1 // pred_region
      _
    $region29: #{forward.1} parent=1 // pred_fallthru
      _
    %v27 = vld [vmem:[%s1] sm:$0xff]
    %v28 = vld [vmem:[%s1 + $0x8] sm:$0x1]
    %v29 = vld [vmem:[%s2] sm:$0x1]
    %v30 = vld [vmem:[%s0] sm:$0xff]
    %v31 = vld [vmem:[%s0 + $0x8] sm:$0xff]
    %v32 = vld [vmem:[%s0 + $0x10] sm:$0xff]
    %v33 = vld [vmem:[%s0 + $0x18] sm:$0xff]
    %v34 = vld [vmem:[%s0 + $0x20] sm:$0xff]
    %v35 = vld [vmem:[%s0 + $0x28] sm:$0xff]
    %v36 = vld [vmem:[%s0 + $0x30] sm:$0xff]
    %v37 = vld [vmem:[%s0 + $0x38] sm:$0xff]
    %v38 = vld [vmem:[%s0 + $0x40] sm:$0xff]
    %vm39 = vcmask 72704
    %v41 = vsel %vm39, %v30, 0
    %v44 = vsel %vm39, %v31, 0
    %v47 = vsel %vm39, %v32, 0
    %v50 = vsel %vm39, %v33, 0
    %v53 = vsel %vm39, %v34, 0
    %v56 = vsel %vm39, %v35, 0
    %v59 = vsel %vm39, %v36, 0
    %v62 = vsel %vm39, %v37, 0
    %v65 = vsel %vm39, %v38, 0
    %vm67 = vcmask 1040384
    %v69 = vsel %vm67, %v28, 0
    %71 = vmatpush.msra.mxu0 0.0
    %72 = vmatpush.msra.mxu0 0.0
    %73 = vmatpush.msra.mxu0 0.0
    %74 = vmatpush.msra.mxu0 0.0
    %75 = vmatpush.msra.mxu0 0.0
    %76 = vmatpush.msra.mxu0 0.0
    %77 = vmatpush.msra.mxu0 0.0
    %78 = vmatpush.msra.mxu0 0.0
    %79 = vmatpush.msra.mxu0 0.0
    %80 = vmatpush.msra.mxu0 0.0
    %81 = vmatpush.msra.mxu0 0.0
    %82 = vmatpush.msra.mxu0 0.0
    %83 = vmatpush.msra.mxu0 0.0
    %84 = vmatpush.msra.mxu0 0.0
    %85 = vmatpush.msra.mxu0 %v69
    %86 = vmatpush.msra.mxu0 %v27
    %87 = vmatmul.f32.gmra.mxu0 %v41
    %v88 = vpop.f32.mrf.mxu0
    %v89 = vadd.f32 0.0, %v88
    %90 = vmatmul.f32.gmra.mxu0 %v44
    %v91 = vpop.f32.mrf.mxu0
    %v92 = vadd.f32 0.0, %v91
    %93 = vmatmul.f32.gmra.mxu0 %v47
    %v94 = vpop.f32.mrf.mxu0
    %v95 = vadd.f32 0.0, %v94
    %96 = vmatmul.f32.gmra.mxu0 %v50
    %v97 = vpop.f32.mrf.mxu0
    %v98 = vadd.f32 0.0, %v97
    %99 = vmatmul.f32.gmra.mxu0 %v53
    %v100 = vpop.f32.mrf.mxu0
    %v101 = vadd.f32 0.0, %v100
    %102 = vmatmul.f32.gmra.mxu0 %v56
    %v103 = vpop.f32.mrf.mxu0
    %v104 = vadd.f32 0.0, %v103
    %105 = vmatmul.f32.gmra.mxu0 %v59
    %v106 = vpop.f32.mrf.mxu0
    %v107 = vadd.f32 0.0, %v106
    %108 = vmatmul.f32.gmra.mxu0 %v62
    %v109 = vpop.f32.mrf.mxu0
    %v110 = vadd.f32 0.0, %v109
    %111 = vmatmul.f32.gmra.mxu0 %v65
    %v112 = vpop.f32.mrf.mxu0
    %v113 = vadd.f32 0.0, %v112
    %114 = vdwg.mxu0
    %v115 = vld [vmem:[%s0 + $0x120] sm:$0xff]
    %v116 = vld [vmem:[%s0 + $0x128] sm:$0xff]
    %v117 = vld [vmem:[%s0 + $0x130] sm:$0xff]
    %v118 = vld [vmem:[%s0 + $0x138] sm:$0xff]
    %v119 = vld [vmem:[%s0 + $0x140] sm:$0xff]
    %v120 = vld [vmem:[%s0 + $0x148] sm:$0xff]
    %v121 = vld [vmem:[%s0 + $0x150] sm:$0xff]
    %v122 = vld [vmem:[%s0 + $0x158] sm:$0xff]
    %v123 = vld [vmem:[%s0 + $0x160] sm:$0xff]
    %v125 = vsel %vm39, %v115, 0
    %v128 = vsel %vm39, %v116, 0
    %v131 = vsel %vm39, %v117, 0
    %v134 = vsel %vm39, %v118, 0
    %v137 = vsel %vm39, %v119, 0
    %v140 = vsel %vm39, %v120, 0
    %v143 = vsel %vm39, %v121, 0
    %v146 = vsel %vm39, %v122, 0
    %v149 = vsel %vm39, %v123, 0
    %151 = vmatpush.msra.mxu0 0.0
    %152 = vmatpush.msra.mxu0 0.0
    %153 = vmatpush.msra.mxu0 0.0
    %154 = vmatpush.msra.mxu0 0.0
    %155 = vmatpush.msra.mxu0 0.0
    %156 = vmatpush.msra.mxu0 0.0
    %157 = vmatpush.msra.mxu0 0.0
    %158 = vmatpush.msra.mxu0 0.0
    %159 = vmatpush.msra.mxu0 0.0
    %160 = vmatpush.msra.mxu0 0.0
    %161 = vmatpush.msra.mxu0 0.0
    %162 = vmatpush.msra.mxu0 0.0
    %163 = vmatpush.msra.mxu0 0.0
    %164 = vmatpush.msra.mxu0 0.0
    %165 = vmatpush.msra.mxu0 %v69
    %166 = vmatpush.msra.mxu0 %v27
    %167 = vmatmul.f32.gmra.mxu0 %v125
    %v168 = vpop.f32.mrf.mxu0
    %v169 = vadd.f32 0.0, %v168
    %170 = vmatmul.f32.gmra.mxu0 %v128
    %v171 = vpop.f32.mrf.mxu0
    %v172 = vadd.f32 0.0, %v171
    %173 = vmatmul.f32.gmra.mxu0 %v131
    %v174 = vpop.f32.mrf.mxu0
    %v175 = vadd.f32 0.0, %v174
    %176 = vmatmul.f32.gmra.mxu0 %v134
    %v177 = vpop.f32.mrf.mxu0
    %v178 = vadd.f32 0.0, %v177
    %179 = vmatmul.f32.gmra.mxu0 %v137
    %v180 = vpop.f32.mrf.mxu0
    %v181 = vadd.f32 0.0, %v180
    %182 = vmatmul.f32.gmra.mxu0 %v140
    %v183 = vpop.f32.mrf.mxu0
    %v184 = vadd.f32 0.0, %v183
    %185 = vmatmul.f32.gmra.mxu0 %v143
    %v186 = vpop.f32.mrf.mxu0
    %v187 = vadd.f32 0.0, %v186
    %188 = vmatmul.f32.gmra.mxu0 %v146
    %v189 = vpop.f32.mrf.mxu0
    %v190 = vadd.f32 0.0, %v189
    %191 = vmatmul.f32.gmra.mxu0 %v149
    %v192 = vpop.f32.mrf.mxu0
    %v193 = vadd.f32 0.0, %v192
    %194 = vdwg.mxu0
    %v195 = vmax.f32 %v89, %v169
    %v196 = vmax.f32 %v92, %v172
    %v197 = vmax.f32 %v95, %v175
    %v198 = vmax.f32 %v98, %v178
    %v199 = vmax.f32 %v101, %v181
    %v200 = vmax.f32 %v104, %v184
    %v201 = vmax.f32 %v107, %v187
    %v202 = vmax.f32 %v110, %v190
    %v203 = vmax.f32 %v113, %v193
    %v204 = vld [vmem:[%s0 + $0x240] sm:$0xff]
    %v205 = vld [vmem:[%s0 + $0x248] sm:$0xff]
    %v206 = vld [vmem:[%s0 + $0x250] sm:$0xff]
    %v207 = vld [vmem:[%s0 + $0x258] sm:$0xff]
    %v208 = vld [vmem:[%s0 + $0x260] sm:$0xff]
    %v209 = vld [vmem:[%s0 + $0x268] sm:$0xff]
    %v210 = vld [vmem:[%s0 + $0x270] sm:$0xff]
    %v211 = vld [vmem:[%s0 + $0x278] sm:$0xff]
    %v212 = vld [vmem:[%s0 + $0x280] sm:$0xff]
    %v214 = vsel %vm39, %v204, 0
    %v217 = vsel %vm39, %v205, 0
    %v220 = vsel %vm39, %v206, 0
    %v223 = vsel %vm39, %v207, 0
    %v226 = vsel %vm39, %v208, 0
    %v229 = vsel %vm39, %v209, 0
    %v232 = vsel %vm39, %v210, 0
    %v235 = vsel %vm39, %v211, 0
    %v238 = vsel %vm39, %v212, 0
    %240 = vmatpush.msra.mxu0 0.0
    %241 = vmatpush.msra.mxu0 0.0
    %242 = vmatpush.msra.mxu0 0.0
    %243 = vmatpush.msra.mxu0 0.0
    %244 = vmatpush.msra.mxu0 0.0
    %245 = vmatpush.msra.mxu0 0.0
    %246 = vmatpush.msra.mxu0 0.0
    %247 = vmatpush.msra.mxu0 0.0
    %248 = vmatpush.msra.mxu0 0.0
    %249 = vmatpush.msra.mxu0 0.0
    %250 = vmatpush.msra.mxu0 0.0
    %251 = vmatpush.msra.mxu0 0.0
    %252 = vmatpush.msra.mxu0 0.0
    %253 = vmatpush.msra.mxu0 0.0
    %254 = vmatpush.msra.mxu0 %v69
    %255 = vmatpush.msra.mxu0 %v27
    %256 = vmatmul.f32.gmra.mxu0 %v214
    %v257 = vpop.f32.mrf.mxu0
    %v258 = vadd.f32 0.0, %v257
    %259 = vmatmul.f32.gmra.mxu0 %v217
    %v260 = vpop.f32.mrf.mxu0
    %v261 = vadd.f32 0.0, %v260
    %262 = vmatmul.f32.gmra.mxu0 %v220
    %v263 = vpop.f32.mrf.mxu0
    %v264 = vadd.f32 0.0, %v263
    %265 = vmatmul.f32.gmra.mxu0 %v223
    %v266 = vpop.f32.mrf.mxu0
    %v267 = vadd.f32 0.0, %v266
    %268 = vmatmul.f32.gmra.mxu0 %v226
    %v269 = vpop.f32.mrf.mxu0
    %v270 = vadd.f32 0.0, %v269
    %271 = vmatmul.f32.gmra.mxu0 %v229
    %v272 = vpop.f32.mrf.mxu0
    %v273 = vadd.f32 0.0, %v272
    %274 = vmatmul.f32.gmra.mxu0 %v232
    %v275 = vpop.f32.mrf.mxu0
    %v276 = vadd.f32 0.0, %v275
    %277 = vmatmul.f32.gmra.mxu0 %v235
    %v278 = vpop.f32.mrf.mxu0
    %v279 = vadd.f32 0.0, %v278
    %280 = vmatmul.f32.gmra.mxu0 %v238
    %v281 = vpop.f32.mrf.mxu0
    %v282 = vadd.f32 0.0, %v281
    %283 = vdwg.mxu0
    %v284 = vmax.f32 %v195, %v258
    %v285 = vmax.f32 %v196, %v261
    %v286 = vmax.f32 %v197, %v264
    %v287 = vmax.f32 %v198, %v267
    %v288 = vmax.f32 %v199, %v270
    %v289 = vmax.f32 %v200, %v273
    %v290 = vmax.f32 %v201, %v276
    %v291 = vmax.f32 %v202, %v279
    %v292 = vmax.f32 %v203, %v282
    %v293 = vld [vmem:[%s0 + $0x360] sm:$0xff]
    %v294 = vld [vmem:[%s0 + $0x368] sm:$0xff]
    %v295 = vld [vmem:[%s0 + $0x370] sm:$0xff]
    %v296 = vld [vmem:[%s0 + $0x378] sm:$0xff]
    %v297 = vld [vmem:[%s0 + $0x380] sm:$0xff]
    %v298 = vld [vmem:[%s0 + $0x388] sm:$0xff]
    %v299 = vld [vmem:[%s0 + $0x390] sm:$0xff]
    %v300 = vld [vmem:[%s0 + $0x398] sm:$0xff]
    %v301 = vld [vmem:[%s0 + $0x3a0] sm:$0xff]
    %v303 = vsel %vm39, %v293, 0
    %v306 = vsel %vm39, %v294, 0
    %v309 = vsel %vm39, %v295, 0
    %v312 = vsel %vm39, %v296, 0
    %v315 = vsel %vm39, %v297, 0
    %v318 = vsel %vm39, %v298, 0
    %v321 = vsel %vm39, %v299, 0
    %v324 = vsel %vm39, %v300, 0
    %v327 = vsel %vm39, %v301, 0
    %329 = vmatpush.msra.mxu0 0.0
    %330 = vmatpush.msra.mxu0 0.0
    %331 = vmatpush.msra.mxu0 0.0
    %332 = vmatpush.msra.mxu0 0.0
    %333 = vmatpush.msra.mxu0 0.0
    %334 = vmatpush.msra.mxu0 0.0
    %335 = vmatpush.msra.mxu0 0.0
    %336 = vmatpush.msra.mxu0 0.0
    %337 = vmatpush.msra.mxu0 0.0
    %338 = vmatpush.msra.mxu0 0.0
    %339 = vmatpush.msra.mxu0 0.0
    %340 = vmatpush.msra.mxu0 0.0
    %341 = vmatpush.msra.mxu0 0.0
    %342 = vmatpush.msra.mxu0 0.0
    %343 = vmatpush.msra.mxu0 %v69
    %344 = vmatpush.msra.mxu0 %v27
    %345 = vmatmul.f32.gmra.mxu0 %v303
    %v346 = vpop.f32.mrf.mxu0
    %v347 = vadd.f32 0.0, %v346
    %348 = vmatmul.f32.gmra.mxu0 %v306
    %v349 = vpop.f32.mrf.mxu0
    %v350 = vadd.f32 0.0, %v349
    %351 = vmatmul.f32.gmra.mxu0 %v309
    %v352 = vpop.f32.mrf.mxu0
    %v353 = vadd.f32 0.0, %v352
    %354 = vmatmul.f32.gmra.mxu0 %v312
    %v355 = vpop.f32.mrf.mxu0
    %v356 = vadd.f32 0.0, %v355
    %357 = vmatmul.f32.gmra.mxu0 %v315
    %v358 = vpop.f32.mrf.mxu0
    %v359 = vadd.f32 0.0, %v358
    %360 = vmatmul.f32.gmra.mxu0 %v318
    %v361 = vpop.f32.mrf.mxu0
    %v362 = vadd.f32 0.0, %v361
    %363 = vmatmul.f32.gmra.mxu0 %v321
    %v364 = vpop.f32.mrf.mxu0
    %v365 = vadd.f32 0.0, %v364
    %366 = vmatmul.f32.gmra.mxu0 %v324
    %v367 = vpop.f32.mrf.mxu0
    %v368 = vadd.f32 0.0, %v367
    %369 = vmatmul.f32.gmra.mxu0 %v327
    %v370 = vpop.f32.mrf.mxu0
    %v371 = vadd.f32 0.0, %v370
    %372 = vdwg.mxu0
    %v373 = vmax.f32 %v284, %v347
    %v374 = vmax.f32 %v285, %v350
    %v375 = vmax.f32 %v286, %v353
    %v376 = vmax.f32 %v287, %v356
    %v377 = vmax.f32 %v288, %v359
    %v378 = vmax.f32 %v289, %v362
    %v379 = vmax.f32 %v290, %v365
    %v380 = vmax.f32 %v291, %v368
    %v381 = vmax.f32 %v292, %v371
    %v383 = vperm.slane %v29, 0
    %v385 = vadd.f32 %v373, %v383
    %v386 = vadd.f32 %v374, %v383
    %v387 = vadd.f32 %v375, %v383
    %v388 = vadd.f32 %v376, %v383
    %v389 = vadd.f32 %v377, %v383
    %v390 = vadd.f32 %v378, %v383
    %v391 = vadd.f32 %v379, %v383
    %v392 = vadd.f32 %v380, %v383
    %v393 = vadd.f32 %v381, %v383
    %v394 = vmax.f32 %v385, 0.0
    %v395 = vmax.f32 %v386, 0.0
    %v396 = vmax.f32 %v387, 0.0
    %v397 = vmax.f32 %v388, 0.0
    %v398 = vmax.f32 %v389, 0.0
    %v399 = vmax.f32 %v390, 0.0
    %v400 = vmax.f32 %v391, 0.0
    %v401 = vmax.f32 %v392, 0.0
    %v402 = vmax.f32 %v393, 0.0
    %vm403 = vcmask 523264
    %404 = vst.msk [vmem:[#allocation2] sm:$0xff] %vm403, %v394
    %405 = vst.msk [vmem:[#allocation2 + $0x8] sm:$0xff] %vm403, %v395
    %406 = vst.msk [vmem:[#allocation2 + $0x10] sm:$0xff] %vm403, %v396
    %407 = vst.msk [vmem:[#allocation2 + $0x18] sm:$0xff] %vm403, %v397
    %408 = vst.msk [vmem:[#allocation2 + $0x20] sm:$0xff] %vm403, %v398
    %409 = vst.msk [vmem:[#allocation2 + $0x28] sm:$0xff] %vm403, %v399
    %410 = vst.msk [vmem:[#allocation2 + $0x30] sm:$0xff] %vm403, %v400
    %411 = vst.msk [vmem:[#allocation2 + $0x38] sm:$0xff] %vm403, %v401
    %412 = vst.msk [vmem:[#allocation2 + $0x40] sm:$0xff] %vm403, %v402
    %v413 = vld [vmem:[%s0 + $0x48] sm:$0xff]
    %v414 = vld [vmem:[%s0 + $0x50] sm:$0xff]
    %v415 = vld [vmem:[%s0 + $0x58] sm:$0xff]
    %v416 = vld [vmem:[%s0 + $0x60] sm:$0xff]
    %v417 = vld [vmem:[%s0 + $0x68] sm:$0xff]
    %v418 = vld [vmem:[%s0 + $0x70] sm:$0xff]
    %v419 = vld [vmem:[%s0 + $0x78] sm:$0xff]
    %v420 = vld [vmem:[%s0 + $0x80] sm:$0xff]
    %v421 = vld [vmem:[%s0 + $0x88] sm:$0xff]
    %v423 = vsel %vm39, %v413, 0
    %v426 = vsel %vm39, %v414, 0
    %v429 = vsel %vm39, %v415, 0
    %v432 = vsel %vm39, %v416, 0
    %v435 = vsel %vm39, %v417, 0
    %v438 = vsel %vm39, %v418, 0
    %v441 = vsel %vm39, %v419, 0
    %v444 = vsel %vm39, %v420, 0
    %v447 = vsel %vm39, %v421, 0
    %449 = vmatpush.msra.mxu0 0.0
    %450 = vmatpush.msra.mxu0 0.0
    %451 = vmatpush.msra.mxu0 0.0
    %452 = vmatpush.msra.mxu0 0.0
    %453 = vmatpush.msra.mxu0 0.0
    %454 = vmatpush.msra.mxu0 0.0
    %455 = vmatpush.msra.mxu0 0.0
    %456 = vmatpush.msra.mxu0 0.0
    %457 = vmatpush.msra.mxu0 0.0
    %458 = vmatpush.msra.mxu0 0.0
    %459 = vmatpush.msra.mxu0 0.0
    %460 = vmatpush.msra.mxu0 0.0
    %461 = vmatpush.msra.mxu0 0.0
    %462 = vmatpush.msra.mxu0 0.0
    %463 = vmatpush.msra.mxu0 %v69
    %464 = vmatpush.msra.mxu0 %v27
    %465 = vmatmul.f32.gmra.mxu0 %v423
    %v466 = vpop.f32.mrf.mxu0
    %v467 = vadd.f32 0.0, %v466
    %468 = vmatmul.f32.gmra.mxu0 %v426
    %v469 = vpop.f32.mrf.mxu0
    %v470 = vadd.f32 0.0, %v469
    %471 = vmatmul.f32.gmra.mxu0 %v429
    %v472 = vpop.f32.mrf.mxu0
    %v473 = vadd.f32 0.0, %v472
    %474 = vmatmul.f32.gmra.mxu0 %v432
    %v475 = vpop.f32.mrf.mxu0
    %v476 = vadd.f32 0.0, %v475
    %477 = vmatmul.f32.gmra.mxu0 %v435
    %v478 = vpop.f32.mrf.mxu0
    %v479 = vadd.f32 0.0, %v478
    %480 = vmatmul.f32.gmra.mxu0 %v438
    %v481 = vpop.f32.mrf.mxu0
    %v482 = vadd.f32 0.0, %v481
    %483 = vmatmul.f32.gmra.mxu0 %v441
    %v484 = vpop.f32.mrf.mxu0
    %v485 = vadd.f32 0.0, %v484
    %486 = vmatmul.f32.gmra.mxu0 %v444
    %v487 = vpop.f32.mrf.mxu0
    %v488 = vadd.f32 0.0, %v487
    %489 = vmatmul.f32.gmra.mxu0 %v447
    %v490 = vpop.f32.mrf.mxu0
    %v491 = vadd.f32 0.0, %v490
    %492 = vdwg.mxu0
    %v493 = vld [vmem:[%s0 + $0x168] sm:$0xff]
    %v494 = vld [vmem:[%s0 + $0x170] sm:$0xff]
    %v495 = vld [vmem:[%s0 + $0x178] sm:$0xff]
    %v496 = vld [vmem:[%s0 + $0x180] sm:$0xff]
    %v497 = vld [vmem:[%s0 + $0x188] sm:$0xff]
    %v498 = vld [vmem:[%s0 + $0x190] sm:$0xff]
    %v499 = vld [vmem:[%s0 + $0x198] sm:$0xff]
    %v500 = vld [vmem:[%s0 + $0x1a0] sm:$0xff]
    %v501 = vld [vmem:[%s0 + $0x1a8] sm:$0xff]
    %v503 = vsel %vm39, %v493, 0
    %v506 = vsel %vm39, %v494, 0
    %v509 = vsel %vm39, %v495, 0
    %v512 = vsel %vm39, %v496, 0
    %v515 = vsel %vm39, %v497, 0
    %v518 = vsel %vm39, %v498, 0
    %v521 = vsel %vm39, %v499, 0
    %v524 = vsel %vm39, %v500, 0
    %v527 = vsel %vm39, %v501, 0
    %529 = vmatpush.msra.mxu0 0.0
    %530 = vmatpush.msra.mxu0 0.0
    %531 = vmatpush.msra.mxu0 0.0
    %532 = vmatpush.msra.mxu0 0.0
    %533 = vmatpush.msra.mxu0 0.0
    %534 = vmatpush.msra.mxu0 0.0
    %535 = vmatpush.msra.mxu0 0.0
    %536 = vmatpush.msra.mxu0 0.0
    %537 = vmatpush.msra.mxu0 0.0
    %538 = vmatpush.msra.mxu0 0.0
    %539 = vmatpush.msra.mxu0 0.0
    %540 = vmatpush.msra.mxu0 0.0
    %541 = vmatpush.msra.mxu0 0.0
    %542 = vmatpush.msra.mxu0 0.0
    %543 = vmatpush.msra.mxu0 %v69
    %544 = vmatpush.msra.mxu0 %v27
    %545 = vmatmul.f32.gmra.mxu0 %v503
    %v546 = vpop.f32.mrf.mxu0
    %v547 = vadd.f32 0.0, %v546
    %548 = vmatmul.f32.gmra.mxu0 %v506
    %v549 = vpop.f32.mrf.mxu0
    %v550 = vadd.f32 0.0, %v549
    %551 = vmatmul.f32.gmra.mxu0 %v509
    %v552 = vpop.f32.mrf.mxu0
    %v553 = vadd.f32 0.0, %v552
    %554 = vmatmul.f32.gmra.mxu0 %v512
    %v555 = vpop.f32.mrf.mxu0
    %v556 = vadd.f32 0.0, %v555
    %557 = vmatmul.f32.gmra.mxu0 %v515
    %v558 = vpop.f32.mrf.mxu0
    %v559 = vadd.f32 0.0, %v558
    %560 = vmatmul.f32.gmra.mxu0 %v518
    %v561 = vpop.f32.mrf.mxu0
    %v562 = vadd.f32 0.0, %v561
    %563 = vmatmul.f32.gmra.mxu0 %v521
    %v564 = vpop.f32.mrf.mxu0
    %v565 = vadd.f32 0.0, %v564
    %566 = vmatmul.f32.gmra.mxu0 %v524
    %v567 = vpop.f32.mrf.mxu0
    %v568 = vadd.f32 0.0, %v567
    %569 = vmatmul.f32.gmra.mxu0 %v527
    %v570 = vpop.f32.mrf.mxu0
    %v571 = vadd.f32 0.0, %v570
    %572 = vdwg.mxu0
    %v573 = vmax.f32 %v467, %v547
    %v574 = vmax.f32 %v470, %v550
    %v575 = vmax.f32 %v473, %v553
    %v576 = vmax.f32 %v476, %v556
    %v577 = vmax.f32 %v479, %v559
    %v578 = vmax.f32 %v482, %v562
    %v579 = vmax.f32 %v485, %v565
    %v580 = vmax.f32 %v488, %v568
    %v581 = vmax.f32 %v491, %v571
    %v582 = vld [vmem:[%s0 + $0x288] sm:$0xff]
    %v583 = vld [vmem:[%s0 + $0x290] sm:$0xff]
    %v584 = vld [vmem:[%s0 + $0x298] sm:$0xff]
    %v585 = vld [vmem:[%s0 + $0x2a0] sm:$0xff]
    %v586 = vld [vmem:[%s0 + $0x2a8] sm:$0xff]
    %v587 = vld [vmem:[%s0 + $0x2b0] sm:$0xff]
    %v588 = vld [vmem:[%s0 + $0x2b8] sm:$0xff]
    %v589 = vld [vmem:[%s0 + $0x2c0] sm:$0xff]
    %v590 = vld [vmem:[%s0 + $0x2c8] sm:$0xff]
    %v592 = vsel %vm39, %v582, 0
    %v595 = vsel %vm39, %v583, 0
    %v598 = vsel %vm39, %v584, 0
    %v601 = vsel %vm39, %v585, 0
    %v604 = vsel %vm39, %v586, 0
    %v607 = vsel %vm39, %v587, 0
    %v610 = vsel %vm39, %v588, 0
    %v613 = vsel %vm39, %v589, 0
    %v616 = vsel %vm39, %v590, 0
    %618 = vmatpush.msra.mxu0 0.0
    %619 = vmatpush.msra.mxu0 0.0
    %620 = vmatpush.msra.mxu0 0.0
    %621 = vmatpush.msra.mxu0 0.0
    %622 = vmatpush.msra.mxu0 0.0
    %623 = vmatpush.msra.mxu0 0.0
    %624 = vmatpush.msra.mxu0 0.0
    %625 = vmatpush.msra.mxu0 0.0
    %626 = vmatpush.msra.mxu0 0.0
    %627 = vmatpush.msra.mxu0 0.0
    %628 = vmatpush.msra.mxu0 0.0
    %629 = vmatpush.msra.mxu0 0.0
    %630 = vmatpush.msra.mxu0 0.0
    %631 = vmatpush.msra.mxu0 0.0
    %632 = vmatpush.msra.mxu0 %v69
    %633 = vmatpush.msra.mxu0 %v27
    %634 = vmatmul.f32.gmra.mxu0 %v592
    %v635 = vpop.f32.mrf.mxu0
    %v636 = vadd.f32 0.0, %v635
    %637 = vmatmul.f32.gmra.mxu0 %v595
    %v638 = vpop.f32.mrf.mxu0
    %v639 = vadd.f32 0.0, %v638
    %640 = vmatmul.f32.gmra.mxu0 %v598
    %v641 = vpop.f32.mrf.mxu0
    %v642 = vadd.f32 0.0, %v641
    %643 = vmatmul.f32.gmra.mxu0 %v601
    %v644 = vpop.f32.mrf.mxu0
    %v645 = vadd.f32 0.0, %v644
    %646 = vmatmul.f32.gmra.mxu0 %v604
    %v647 = vpop.f32.mrf.mxu0
    %v648 = vadd.f32 0.0, %v647
    %649 = vmatmul.f32.gmra.mxu0 %v607
    %v650 = vpop.f32.mrf.mxu0
    %v651 = vadd.f32 0.0, %v650
    %652 = vmatmul.f32.gmra.mxu0 %v610
    %v653 = vpop.f32.mrf.mxu0
    %v654 = vadd.f32 0.0, %v653
    %655 = vmatmul.f32.gmra.mxu0 %v613
    %v656 = vpop.f32.mrf.mxu0
    %v657 = vadd.f32 0.0, %v656
    %658 = vmatmul.f32.gmra.mxu0 %v616
    %v659 = vpop.f32.mrf.mxu0
    %v660 = vadd.f32 0.0, %v659
    %661 = vdwg.mxu0
    %v662 = vmax.f32 %v573, %v636
    %v663 = vmax.f32 %v574, %v639
    %v664 = vmax.f32 %v575, %v642
    %v665 = vmax.f32 %v576, %v645
    %v666 = vmax.f32 %v577, %v648
    %v667 = vmax.f32 %v578, %v651
    %v668 = vmax.f32 %v579, %v654
    %v669 = vmax.f32 %v580, %v657
    %v670 = vmax.f32 %v581, %v660
    %v671 = vld [vmem:[%s0 + $0x3a8] sm:$0xff]
    %v672 = vld [vmem:[%s0 + $0x3b0] sm:$0xff]
    %v673 = vld [vmem:[%s0 + $0x3b8] sm:$0xff]
    %v674 = vld [vmem:[%s0 + $0x3c0] sm:$0xff]
    %v675 = vld [vmem:[%s0 + $0x3c8] sm:$0xff]
    %v676 = vld [vmem:[%s0 + $0x3d0] sm:$0xff]
    %v677 = vld [vmem:[%s0 + $0x3d8] sm:$0xff]
    %v678 = vld [vmem:[%s0 + $0x3e0] sm:$0xff]
    %v679 = vld [vmem:[%s0 + $0x3e8] sm:$0xff]
    %v681 = vsel %vm39, %v671, 0
    %v684 = vsel %vm39, %v672, 0
    %v687 = vsel %vm39, %v673, 0
    %v690 = vsel %vm39, %v674, 0
    %v693 = vsel %vm39, %v675, 0
    %v696 = vsel %vm39, %v676, 0
    %v699 = vsel %vm39, %v677, 0
    %v702 = vsel %vm39, %v678, 0
    %v705 = vsel %vm39, %v679, 0
    %707 = vmatpush.msra.mxu0 0.0
    %708 = vmatpush.msra.mxu0 0.0
    %709 = vmatpush.msra.mxu0 0.0
    %710 = vmatpush.msra.mxu0 0.0
    %711 = vmatpush.msra.mxu0 0.0
    %712 = vmatpush.msra.mxu0 0.0
    %713 = vmatpush.msra.mxu0 0.0
    %714 = vmatpush.msra.mxu0 0.0
    %715 = vmatpush.msra.mxu0 0.0
    %716 = vmatpush.msra.mxu0 0.0
    %717 = vmatpush.msra.mxu0 0.0
    %718 = vmatpush.msra.mxu0 0.0
    %719 = vmatpush.msra.mxu0 0.0
    %720 = vmatpush.msra.mxu0 0.0
    %721 = vmatpush.msra.mxu0 %v69
    %722 = vmatpush.msra.mxu0 %v27
    %723 = vmatmul.f32.gmra.mxu0 %v681
    %v724 = vpop.f32.mrf.mxu0
    %v725 = vadd.f32 0.0, %v724
    %726 = vmatmul.f32.gmra.mxu0 %v684
    %v727 = vpop.f32.mrf.mxu0
    %v728 = vadd.f32 0.0, %v727
    %729 = vmatmul.f32.gmra.mxu0 %v687
    %v730 = vpop.f32.mrf.mxu0
    %v731 = vadd.f32 0.0, %v730
    %732 = vmatmul.f32.gmra.mxu0 %v690
    %v733 = vpop.f32.mrf.mxu0
    %v734 = vadd.f32 0.0, %v733
    %735 = vmatmul.f32.gmra.mxu0 %v693
    %v736 = vpop.f32.mrf.mxu0
    %v737 = vadd.f32 0.0, %v736
    %738 = vmatmul.f32.gmra.mxu0 %v696
    %v739 = vpop.f32.mrf.mxu0
    %v740 = vadd.f32 0.0, %v739
    %741 = vmatmul.f32.gmra.mxu0 %v699
    %v742 = vpop.f32.mrf.mxu0
    %v743 = vadd.f32 0.0, %v742
    %744 = vmatmul.f32.gmra.mxu0 %v702
    %v745 = vpop.f32.mrf.mxu0
    %v746 = vadd.f32 0.0, %v745
    %747 = vmatmul.f32.gmra.mxu0 %v705
    %v748 = vpop.f32.mrf.mxu0
    %v749 = vadd.f32 0.0, %v748
    %750 = vdwg.mxu0
    %v751 = vmax.f32 %v662, %v725
    %v752 = vmax.f32 %v663, %v728
    %v753 = vmax.f32 %v664, %v731
    %v754 = vmax.f32 %v665, %v734
    %v755 = vmax.f32 %v666, %v737
    %v756 = vmax.f32 %v667, %v740
    %v757 = vmax.f32 %v668, %v743
    %v758 = vmax.f32 %v669, %v746
    %v759 = vmax.f32 %v670, %v749
    %v760 = vadd.f32 %v751, %v383
    %v761 = vadd.f32 %v752, %v383
    %v762 = vadd.f32 %v753, %v383
    %v763 = vadd.f32 %v754, %v383
    %v764 = vadd.f32 %v755, %v383
    %v765 = vadd.f32 %v756, %v383
    %v766 = vadd.f32 %v757, %v383
    %v767 = vadd.f32 %v758, %v383
    %v768 = vadd.f32 %v759, %v383
    %v769 = vmax.f32 %v760, 0.0
    %v770 = vmax.f32 %v761, 0.0
    %v771 = vmax.f32 %v762, 0.0
    %v772 = vmax.f32 %v763, 0.0
    %v773 = vmax.f32 %v764, 0.0
    %v774 = vmax.f32 %v765, 0.0
    %v775 = vmax.f32 %v766, 0.0
    %v776 = vmax.f32 %v767, 0.0
    %v777 = vmax.f32 %v768, 0.0
    %778 = vst.msk [vmem:[#allocation2 + $0x48] sm:$0xff] %vm403, %v769
    %779 = vst.msk [vmem:[#allocation2 + $0x50] sm:$0xff] %vm403, %v770
    %780 = vst.msk [vmem:[#allocation2 + $0x58] sm:$0xff] %vm403, %v771
    %781 = vst.msk [vmem:[#allocation2 + $0x60] sm:$0xff] %vm403, %v772
    %782 = vst.msk [vmem:[#allocation2 + $0x68] sm:$0xff] %vm403, %v773
    %783 = vst.msk [vmem:[#allocation2 + $0x70] sm:$0xff] %vm403, %v774
    %784 = vst.msk [vmem:[#allocation2 + $0x78] sm:$0xff] %vm403, %v775
    %785 = vst.msk [vmem:[#allocation2 + $0x80] sm:$0xff] %vm403, %v776
    %786 = vst.msk [vmem:[#allocation2 + $0x88] sm:$0xff] %vm403, %v777
    %v787 = vld [vmem:[%s0 + $0x90] sm:$0xff]
    %v788 = vld [vmem:[%s0 + $0x98] sm:$0xff]
    %v789 = vld [vmem:[%s0 + $0xa0] sm:$0xff]
    %v790 = vld [vmem:[%s0 + $0xa8] sm:$0xff]
    %v791 = vld [vmem:[%s0 + $0xb0] sm:$0xff]
    %v792 = vld [vmem:[%s0 + $0xb8] sm:$0xff]
    %v793 = vld [vmem:[%s0 + $0xc0] sm:$0xff]
    %v794 = vld [vmem:[%s0 + $0xc8] sm:$0xff]
    %v795 = vld [vmem:[%s0 + $0xd0] sm:$0xff]
    %v797 = vsel %vm39, %v787, 0
    %v800 = vsel %vm39, %v788, 0
    %v803 = vsel %vm39, %v789, 0
    %v806 = vsel %vm39, %v790, 0
    %v809 = vsel %vm39, %v791, 0
    %v812 = vsel %vm39, %v792, 0
    %v815 = vsel %vm39, %v793, 0
    %v818 = vsel %vm39, %v794, 0
    %v821 = vsel %vm39, %v795, 0
    %823 = vmatpush.msra.mxu0 0.0
    %824 = vmatpush.msra.mxu0 0.0
    %825 = vmatpush.msra.mxu0 0.0
    %826 = vmatpush.msra.mxu0 0.0
    %827 = vmatpush.msra.mxu0 0.0
    %828 = vmatpush.msra.mxu0 0.0
    %829 = vmatpush.msra.mxu0 0.0
    %830 = vmatpush.msra.mxu0 0.0
    %831 = vmatpush.msra.mxu0 0.0
    %832 = vmatpush.msra.mxu0 0.0
    %833 = vmatpush.msra.mxu0 0.0
    %834 = vmatpush.msra.mxu0 0.0
    %835 = vmatpush.msra.mxu0 0.0
    %836 = vmatpush.msra.mxu0 0.0
    %837 = vmatpush.msra.mxu0 %v69
    %838 = vmatpush.msra.mxu0 %v27
    %839 = vmatmul.f32.gmra.mxu0 %v797
    %v840 = vpop.f32.mrf.mxu0
    %v841 = vadd.f32 0.0, %v840
    %842 = vmatmul.f32.gmra.mxu0 %v800
    %v843 = vpop.f32.mrf.mxu0
    %v844 = vadd.f32 0.0, %v843
    %845 = vmatmul.f32.gmra.mxu0 %v803
    %v846 = vpop.f32.mrf.mxu0
    %v847 = vadd.f32 0.0, %v846
    %848 = vmatmul.f32.gmra.mxu0 %v806
    %v849 = vpop.f32.mrf.mxu0
    %v850 = vadd.f32 0.0, %v849
    %851 = vmatmul.f32.gmra.mxu0 %v809
    %v852 = vpop.f32.mrf.mxu0
    %v853 = vadd.f32 0.0, %v852
    %854 = vmatmul.f32.gmra.mxu0 %v812
    %v855 = vpop.f32.mrf.mxu0
    %v856 = vadd.f32 0.0, %v855
    %857 = vmatmul.f32.gmra.mxu0 %v815
    %v858 = vpop.f32.mrf.mxu0
    %v859 = vadd.f32 0.0, %v858
    %860 = vmatmul.f32.gmra.mxu0 %v818
    %v861 = vpop.f32.mrf.mxu0
    %v862 = vadd.f32 0.0, %v861
    %863 = vmatmul.f32.gmra.mxu0 %v821
    %v864 = vpop.f32.mrf.mxu0
    %v865 = vadd.f32 0.0, %v864
    %866 = vdwg.mxu0
    %v867 = vld [vmem:[%s0 + $0x1b0] sm:$0xff]
    %v868 = vld [vmem:[%s0 + $0x1b8] sm:$0xff]
    %v869 = vld [vmem:[%s0 + $0x1c0] sm:$0xff]
    %v870 = vld [vmem:[%s0 + $0x1c8] sm:$0xff]
    %v871 = vld [vmem:[%s0 + $0x1d0] sm:$0xff]
    %v872 = vld [vmem:[%s0 + $0x1d8] sm:$0xff]
    %v873 = vld [vmem:[%s0 + $0x1e0] sm:$0xff]
    %v874 = vld [vmem:[%s0 + $0x1e8] sm:$0xff]
    %v875 = vld [vmem:[%s0 + $0x1f0] sm:$0xff]
    %v877 = vsel %vm39, %v867, 0
    %v880 = vsel %vm39, %v868, 0
    %v883 = vsel %vm39, %v869, 0
    %v886 = vsel %vm39, %v870, 0
    %v889 = vsel %vm39, %v871, 0
    %v892 = vsel %vm39, %v872, 0
    %v895 = vsel %vm39, %v873, 0
    %v898 = vsel %vm39, %v874, 0
    %v901 = vsel %vm39, %v875, 0
    %903 = vmatpush.msra.mxu0 0.0
    %904 = vmatpush.msra.mxu0 0.0
    %905 = vmatpush.msra.mxu0 0.0
    %906 = vmatpush.msra.mxu0 0.0
    %907 = vmatpush.msra.mxu0 0.0
    %908 = vmatpush.msra.mxu0 0.0
    %909 = vmatpush.msra.mxu0 0.0
    %910 = vmatpush.msra.mxu0 0.0
    %911 = vmatpush.msra.mxu0 0.0
    %912 = vmatpush.msra.mxu0 0.0
    %913 = vmatpush.msra.mxu0 0.0
    %914 = vmatpush.msra.mxu0 0.0
    %915 = vmatpush.msra.mxu0 0.0
    %916 = vmatpush.msra.mxu0 0.0
    %917 = vmatpush.msra.mxu0 %v69
    %918 = vmatpush.msra.mxu0 %v27
    %919 = vmatmul.f32.gmra.mxu0 %v877
    %v920 = vpop.f32.mrf.mxu0
    %v921 = vadd.f32 0.0, %v920
    %922 = vmatmul.f32.gmra.mxu0 %v880
    %v923 = vpop.f32.mrf.mxu0
    %v924 = vadd.f32 0.0, %v923
    %925 = vmatmul.f32.gmra.mxu0 %v883
    %v926 = vpop.f32.mrf.mxu0
    %v927 = vadd.f32 0.0, %v926
    %928 = vmatmul.f32.gmra.mxu0 %v886
    %v929 = vpop.f32.mrf.mxu0
    %v930 = vadd.f32 0.0, %v929
    %931 = vmatmul.f32.gmra.mxu0 %v889
    %v932 = vpop.f32.mrf.mxu0
    %v933 = vadd.f32 0.0, %v932
    %934 = vmatmul.f32.gmra.mxu0 %v892
    %v935 = vpop.f32.mrf.mxu0
    %v936 = vadd.f32 0.0, %v935
    %937 = vmatmul.f32.gmra.mxu0 %v895
    %v938 = vpop.f32.mrf.mxu0
    %v939 = vadd.f32 0.0, %v938
    %940 = vmatmul.f32.gmra.mxu0 %v898
    %v941 = vpop.f32.mrf.mxu0
    %v942 = vadd.f32 0.0, %v941
    %943 = vmatmul.f32.gmra.mxu0 %v901
    %v944 = vpop.f32.mrf.mxu0
    %v945 = vadd.f32 0.0, %v944
    %946 = vdwg.mxu0
    %v947 = vmax.f32 %v841, %v921
    %v948 = vmax.f32 %v844, %v924
    %v949 = vmax.f32 %v847, %v927
    %v950 = vmax.f32 %v850, %v930
    %v951 = vmax.f32 %v853, %v933
    %v952 = vmax.f32 %v856, %v936
    %v953 = vmax.f32 %v859, %v939
    %v954 = vmax.f32 %v862, %v942
    %v955 = vmax.f32 %v865, %v945
    %v956 = vld [vmem:[%s0 + $0x2d0] sm:$0xff]
    %v957 = vld [vmem:[%s0 + $0x2d8] sm:$0xff]
    %v958 = vld [vmem:[%s0 + $0x2e0] sm:$0xff]
    %v959 = vld [vmem:[%s0 + $0x2e8] sm:$0xff]
    %v960 = vld [vmem:[%s0 + $0x2f0] sm:$0xff]
    %v961 = vld [vmem:[%s0 + $0x2f8] sm:$0xff]
    %v962 = vld [vmem:[%s0 + $0x300] sm:$0xff]
    %v963 = vld [vmem:[%s0 + $0x308] sm:$0xff]
    %v964 = vld [vmem:[%s0 + $0x310] sm:$0xff]
    %v966 = vsel %vm39, %v956, 0
    %v969 = vsel %vm39, %v957, 0
    %v972 = vsel %vm39, %v958, 0
    %v975 = vsel %vm39, %v959, 0
    %v978 = vsel %vm39, %v960, 0
    %v981 = vsel %vm39, %v961, 0
    %v984 = vsel %vm39, %v962, 0
    %v987 = vsel %vm39, %v963, 0
    %v990 = vsel %vm39, %v964, 0
    %992 = vmatpush.msra.mxu0 0.0
    %993 = vmatpush.msra.mxu0 0.0
    %994 = vmatpush.msra.mxu0 0.0
    %995 = vmatpush.msra.mxu0 0.0
    %996 = vmatpush.msra.mxu0 0.0
    %997 = vmatpush.msra.mxu0 0.0
    %998 = vmatpush.msra.mxu0 0.0
    %999 = vmatpush.msra.mxu0 0.0
    %1000 = vmatpush.msra.mxu0 0.0
    %1001 = vmatpush.msra.mxu0 0.0
    %1002 = vmatpush.msra.mxu0 0.0
    %1003 = vmatpush.msra.mxu0 0.0
    %1004 = vmatpush.msra.mxu0 0.0
    %1005 = vmatpush.msra.mxu0 0.0
    %1006 = vmatpush.msra.mxu0 %v69
    %1007 = vmatpush.msra.mxu0 %v27
    %1008 = vmatmul.f32.gmra.mxu0 %v966
    %v1009 = vpop.f32.mrf.mxu0
    %v1010 = vadd.f32 0.0, %v1009
    %1011 = vmatmul.f32.gmra.mxu0 %v969
    %v1012 = vpop.f32.mrf.mxu0
    %v1013 = vadd.f32 0.0, %v1012
    %1014 = vmatmul.f32.gmra.mxu0 %v972
    %v1015 = vpop.f32.mrf.mxu0
    %v1016 = vadd.f32 0.0, %v1015
    %1017 = vmatmul.f32.gmra.mxu0 %v975
    %v1018 = vpop.f32.mrf.mxu0
    %v1019 = vadd.f32 0.0, %v1018
    %1020 = vmatmul.f32.gmra.mxu0 %v978
    %v1021 = vpop.f32.mrf.mxu0
    %v1022 = vadd.f32 0.0, %v1021
    %1023 = vmatmul.f32.gmra.mxu0 %v981
    %v1024 = vpop.f32.mrf.mxu0
    %v1025 = vadd.f32 0.0, %v1024
    %1026 = vmatmul.f32.gmra.mxu0 %v984
    %v1027 = vpop.f32.mrf.mxu0
    %v1028 = vadd.f32 0.0, %v1027
    %1029 = vmatmul.f32.gmra.mxu0 %v987
    %v1030 = vpop.f32.mrf.mxu0
    %v1031 = vadd.f32 0.0, %v1030
    %1032 = vmatmul.f32.gmra.mxu0 %v990
    %v1033 = vpop.f32.mrf.mxu0
    %v1034 = vadd.f32 0.0, %v1033
    %1035 = vdwg.mxu0
    %v1036 = vmax.f32 %v947, %v1010
    %v1037 = vmax.f32 %v948, %v1013
    %v1038 = vmax.f32 %v949, %v1016
    %v1039 = vmax.f32 %v950, %v1019
    %v1040 = vmax.f32 %v951, %v1022
    %v1041 = vmax.f32 %v952, %v1025
    %v1042 = vmax.f32 %v953, %v1028
    %v1043 = vmax.f32 %v954, %v1031
    %v1044 = vmax.f32 %v955, %v1034
    %v1045 = vld [vmem:[%s0 + $0x3f0] sm:$0xff]
    %v1046 = vld [vmem:[%s0 + $0x3f8] sm:$0xff]
    %v1047 = vld [vmem:[%s0 + $0x400] sm:$0xff]
    %v1048 = vld [vmem:[%s0 + $0x408] sm:$0xff]
    %v1049 = vld [vmem:[%s0 + $0x410] sm:$0xff]
    %v1050 = vld [vmem:[%s0 + $0x418] sm:$0xff]
    %v1051 = vld [vmem:[%s0 + $0x420] sm:$0xff]
    %v1052 = vld [vmem:[%s0 + $0x428] sm:$0xff]
    %v1053 = vld [vmem:[%s0 + $0x430] sm:$0xff]
    %v1055 = vsel %vm39, %v1045, 0
    %v1058 = vsel %vm39, %v1046, 0
    %v1061 = vsel %vm39, %v1047, 0
    %v1064 = vsel %vm39, %v1048, 0
    %v1067 = vsel %vm39, %v1049, 0
    %v1070 = vsel %vm39, %v1050, 0
    %v1073 = vsel %vm39, %v1051, 0
    %v1076 = vsel %vm39, %v1052, 0
    %v1079 = vsel %vm39, %v1053, 0
    %1081 = vmatpush.msra.mxu0 0.0
    %1082 = vmatpush.msra.mxu0 0.0
    %1083 = vmatpush.msra.mxu0 0.0
    %1084 = vmatpush.msra.mxu0 0.0
    %1085 = vmatpush.msra.mxu0 0.0
    %1086 = vmatpush.msra.mxu0 0.0
    %1087 = vmatpush.msra.mxu0 0.0
    %1088 = vmatpush.msra.mxu0 0.0
    %1089 = vmatpush.msra.mxu0 0.0
    %1090 = vmatpush.msra.mxu0 0.0
    %1091 = vmatpush.msra.mxu0 0.0
    %1092 = vmatpush.msra.mxu0 0.0
    %1093 = vmatpush.msra.mxu0 0.0
    %1094 = vmatpush.msra.mxu0 0.0
    %1095 = vmatpush.msra.mxu0 %v69
    %1096 = vmatpush.msra.mxu0 %v27
    %1097 = vmatmul.f32.gmra.mxu0 %v1055
    %v1098 = vpop.f32.mrf.mxu0
    %v1099 = vadd.f32 0.0, %v1098
    %1100 = vmatmul.f32.gmra.mxu0 %v1058
    %v1101 = vpop.f32.mrf.mxu0
    %v1102 = vadd.f32 0.0, %v1101
    %1103 = vmatmul.f32.gmra.mxu0 %v1061
    %v1104 = vpop.f32.mrf.mxu0
    %v1105 = vadd.f32 0.0, %v1104
    %1106 = vmatmul.f32.gmra.mxu0 %v1064
    %v1107 = vpop.f32.mrf.mxu0
    %v1108 = vadd.f32 0.0, %v1107
    %1109 = vmatmul.f32.gmra.mxu0 %v1067
    %v1110 = vpop.f32.mrf.mxu0
    %v1111 = vadd.f32 0.0, %v1110
    %1112 = vmatmul.f32.gmra.mxu0 %v1070
    %v1113 = vpop.f32.mrf.mxu0
    %v1114 = vadd.f32 0.0, %v1113
    %1115 = vmatmul.f32.gmra.mxu0 %v1073
    %v1116 = vpop.f32.mrf.mxu0
    %v1117 = vadd.f32 0.0, %v1116
    %1118 = vmatmul.f32.gmra.mxu0 %v1076
    %v1119 = vpop.f32.mrf.mxu0
    %v1120 = vadd.f32 0.0, %v1119
    %1121 = vmatmul.f32.gmra.mxu0 %v1079
    %v1122 = vpop.f32.mrf.mxu0
    %v1123 = vadd.f32 0.0, %v1122
    %1124 = vdwg.mxu0
    %v1125 = vmax.f32 %v1036, %v1099
    %v1126 = vmax.f32 %v1037, %v1102
    %v1127 = vmax.f32 %v1038, %v1105
    %v1128 = vmax.f32 %v1039, %v1108
    %v1129 = vmax.f32 %v1040, %v1111
    %v1130 = vmax.f32 %v1041, %v1114
    %v1131 = vmax.f32 %v1042, %v1117
    %v1132 = vmax.f32 %v1043, %v1120
    %v1133 = vmax.f32 %v1044, %v1123
    %v1134 = vadd.f32 %v1125, %v383
    %v1135 = vadd.f32 %v1126, %v383
    %v1136 = vadd.f32 %v1127, %v383
    %v1137 = vadd.f32 %v1128, %v383
    %v1138 = vadd.f32 %v1129, %v383
    %v1139 = vadd.f32 %v1130, %v383
    %v1140 = vadd.f32 %v1131, %v383
    %v1141 = vadd.f32 %v1132, %v383
    %v1142 = vadd.f32 %v1133, %v383
    %v1143 = vmax.f32 %v1134, 0.0
    %v1144 = vmax.f32 %v1135, 0.0
    %v1145 = vmax.f32 %v1136, 0.0
    %v1146 = vmax.f32 %v1137, 0.0
    %v1147 = vmax.f32 %v1138, 0.0
    %v1148 = vmax.f32 %v1139, 0.0
    %v1149 = vmax.f32 %v1140, 0.0
    %v1150 = vmax.f32 %v1141, 0.0
    %v1151 = vmax.f32 %v1142, 0.0
    %1152 = vst.msk [vmem:[#allocation2 + $0x90] sm:$0xff] %vm403, %v1143
    %1153 = vst.msk [vmem:[#allocation2 + $0x98] sm:$0xff] %vm403, %v1144
    %1154 = vst.msk [vmem:[#allocation2 + $0xa0] sm:$0xff] %vm403, %v1145
    %1155 = vst.msk [vmem:[#allocation2 + $0xa8] sm:$0xff] %vm403, %v1146
    %1156 = vst.msk [vmem:[#allocation2 + $0xb0] sm:$0xff] %vm403, %v1147
    %1157 = vst.msk [vmem:[#allocation2 + $0xb8] sm:$0xff] %vm403, %v1148
    %1158 = vst.msk [vmem:[#allocation2 + $0xc0] sm:$0xff] %vm403, %v1149
    %1159 = vst.msk [vmem:[#allocation2 + $0xc8] sm:$0xff] %vm403, %v1150
    %1160 = vst.msk [vmem:[#allocation2 + $0xd0] sm:$0xff] %vm403, %v1151
    %v1161 = vld [vmem:[%s0 + $0xd8] sm:$0xff]
    %v1162 = vld [vmem:[%s0 + $0xe0] sm:$0xff]
    %v1163 = vld [vmem:[%s0 + $0xe8] sm:$0xff]
    %v1164 = vld [vmem:[%s0 + $0xf0] sm:$0xff]
    %v1165 = vld [vmem:[%s0 + $0xf8] sm:$0xff]
    %v1166 = vld [vmem:[%s0 + $0x100] sm:$0xff]
    %v1167 = vld [vmem:[%s0 + $0x108] sm:$0xff]
    %v1168 = vld [vmem:[%s0 + $0x110] sm:$0xff]
    %v1169 = vld [vmem:[%s0 + $0x118] sm:$0xff]
    %v1171 = vsel %vm39, %v1161, 0
    %v1174 = vsel %vm39, %v1162, 0
    %v1177 = vsel %vm39, %v1163, 0
    %v1180 = vsel %vm39, %v1164, 0
    %v1183 = vsel %vm39, %v1165, 0
    %v1186 = vsel %vm39, %v1166, 0
    %v1189 = vsel %vm39, %v1167, 0
    %v1192 = vsel %vm39, %v1168, 0
    %v1195 = vsel %vm39, %v1169, 0
    %1197 = vmatpush.msra.mxu0 0.0
    %1198 = vmatpush.msra.mxu0 0.0
    %1199 = vmatpush.msra.mxu0 0.0
    %1200 = vmatpush.msra.mxu0 0.0
    %1201 = vmatpush.msra.mxu0 0.0
    %1202 = vmatpush.msra.mxu0 0.0
    %1203 = vmatpush.msra.mxu0 0.0
    %1204 = vmatpush.msra.mxu0 0.0
    %1205 = vmatpush.msra.mxu0 0.0
    %1206 = vmatpush.msra.mxu0 0.0
    %1207 = vmatpush.msra.mxu0 0.0
    %1208 = vmatpush.msra.mxu0 0.0
    %1209 = vmatpush.msra.mxu0 0.0
    %1210 = vmatpush.msra.mxu0 0.0
    %1211 = vmatpush.msra.mxu0 %v69
    %1212 = vmatpush.msra.mxu0 %v27
    %1213 = vmatmul.f32.gmra.mxu0 %v1171
    %v1214 = vpop.f32.mrf.mxu0
    %v1215 = vadd.f32 0.0, %v1214
    %1216 = vmatmul.f32.gmra.mxu0 %v1174
    %v1217 = vpop.f32.mrf.mxu0
    %v1218 = vadd.f32 0.0, %v1217
    %1219 = vmatmul.f32.gmra.mxu0 %v1177
    %v1220 = vpop.f32.mrf.mxu0
    %v1221 = vadd.f32 0.0, %v1220
    %1222 = vmatmul.f32.gmra.mxu0 %v1180
    %v1223 = vpop.f32.mrf.mxu0
    %v1224 = vadd.f32 0.0, %v1223
    %1225 = vmatmul.f32.gmra.mxu0 %v1183
    %v1226 = vpop.f32.mrf.mxu0
    %v1227 = vadd.f32 0.0, %v1226
    %1228 = vmatmul.f32.gmra.mxu0 %v1186
    %v1229 = vpop.f32.mrf.mxu0
    %v1230 = vadd.f32 0.0, %v1229
    %1231 = vmatmul.f32.gmra.mxu0 %v1189
    %v1232 = vpop.f32.mrf.mxu0
    %v1233 = vadd.f32 0.0, %v1232
    %1234 = vmatmul.f32.gmra.mxu0 %v1192
    %v1235 = vpop.f32.mrf.mxu0
    %v1236 = vadd.f32 0.0, %v1235
    %1237 = vmatmul.f32.gmra.mxu0 %v1195
    %v1238 = vpop.f32.mrf.mxu0
    %v1239 = vadd.f32 0.0, %v1238
    %1240 = vdwg.mxu0
    %v1241 = vld [vmem:[%s0 + $0x1f8] sm:$0xff]
    %v1242 = vld [vmem:[%s0 + $0x200] sm:$0xff]
    %v1243 = vld [vmem:[%s0 + $0x208] sm:$0xff]
    %v1244 = vld [vmem:[%s0 + $0x210] sm:$0xff]
    %v1245 = vld [vmem:[%s0 + $0x218] sm:$0xff]
    %v1246 = vld [vmem:[%s0 + $0x220] sm:$0xff]
    %v1247 = vld [vmem:[%s0 + $0x228] sm:$0xff]
    %v1248 = vld [vmem:[%s0 + $0x230] sm:$0xff]
    %v1249 = vld [vmem:[%s0 + $0x238] sm:$0xff]
    %v1251 = vsel %vm39, %v1241, 0
    %v1254 = vsel %vm39, %v1242, 0
    %v1257 = vsel %vm39, %v1243, 0
    %v1260 = vsel %vm39, %v1244, 0
    %v1263 = vsel %vm39, %v1245, 0
    %v1266 = vsel %vm39, %v1246, 0
    %v1269 = vsel %vm39, %v1247, 0
    %v1272 = vsel %vm39, %v1248, 0
    %v1275 = vsel %vm39, %v1249, 0
    %1277 = vmatpush.msra.mxu0 0.0
    %1278 = vmatpush.msra.mxu0 0.0
    %1279 = vmatpush.msra.mxu0 0.0
    %1280 = vmatpush.msra.mxu0 0.0
    %1281 = vmatpush.msra.mxu0 0.0
    %1282 = vmatpush.msra.mxu0 0.0
    %1283 = vmatpush.msra.mxu0 0.0
    %1284 = vmatpush.msra.mxu0 0.0
    %1285 = vmatpush.msra.mxu0 0.0
    %1286 = vmatpush.msra.mxu0 0.0
    %1287 = vmatpush.msra.mxu0 0.0
    %1288 = vmatpush.msra.mxu0 0.0
    %1289 = vmatpush.msra.mxu0 0.0
    %1290 = vmatpush.msra.mxu0 0.0
    %1291 = vmatpush.msra.mxu0 %v69
    %1292 = vmatpush.msra.mxu0 %v27
    %1293 = vmatmul.f32.gmra.mxu0 %v1251
    %v1294 = vpop.f32.mrf.mxu0
    %v1295 = vadd.f32 0.0, %v1294
    %1296 = vmatmul.f32.gmra.mxu0 %v1254
    %v1297 = vpop.f32.mrf.mxu0
    %v1298 = vadd.f32 0.0, %v1297
    %1299 = vmatmul.f32.gmra.mxu0 %v1257
    %v1300 = vpop.f32.mrf.mxu0
    %v1301 = vadd.f32 0.0, %v1300
    %1302 = vmatmul.f32.gmra.mxu0 %v1260
    %v1303 = vpop.f32.mrf.mxu0
    %v1304 = vadd.f32 0.0, %v1303
    %1305 = vmatmul.f32.gmra.mxu0 %v1263
    %v1306 = vpop.f32.mrf.mxu0
    %v1307 = vadd.f32 0.0, %v1306
    %1308 = vmatmul.f32.gmra.mxu0 %v1266
    %v1309 = vpop.f32.mrf.mxu0
    %v1310 = vadd.f32 0.0, %v1309
    %1311 = vmatmul.f32.gmra.mxu0 %v1269
    %v1312 = vpop.f32.mrf.mxu0
    %v1313 = vadd.f32 0.0, %v1312
    %1314 = vmatmul.f32.gmra.mxu0 %v1272
    %v1315 = vpop.f32.mrf.mxu0
    %v1316 = vadd.f32 0.0, %v1315
    %1317 = vmatmul.f32.gmra.mxu0 %v1275
    %v1318 = vpop.f32.mrf.mxu0
    %v1319 = vadd.f32 0.0, %v1318
    %1320 = vdwg.mxu0
    %v1321 = vmax.f32 %v1215, %v1295
    %v1322 = vmax.f32 %v1218, %v1298
    %v1323 = vmax.f32 %v1221, %v1301
    %v1324 = vmax.f32 %v1224, %v1304
    %v1325 = vmax.f32 %v1227, %v1307
    %v1326 = vmax.f32 %v1230, %v1310
    %v1327 = vmax.f32 %v1233, %v1313
    %v1328 = vmax.f32 %v1236, %v1316
    %v1329 = vmax.f32 %v1239, %v1319
    %v1330 = vld [vmem:[%s0 + $0x318] sm:$0xff]
    %v1331 = vld [vmem:[%s0 + $0x320] sm:$0xff]
    %v1332 = vld [vmem:[%s0 + $0x328] sm:$0xff]
    %v1333 = vld [vmem:[%s0 + $0x330] sm:$0xff]
    %v1334 = vld [vmem:[%s0 + $0x338] sm:$0xff]
    %v1335 = vld [vmem:[%s0 + $0x340] sm:$0xff]
    %v1336 = vld [vmem:[%s0 + $0x348] sm:$0xff]
    %v1337 = vld [vmem:[%s0 + $0x350] sm:$0xff]
    %v1338 = vld [vmem:[%s0 + $0x358] sm:$0xff]
    %v1340 = vsel %vm39, %v1330, 0
    %v1343 = vsel %vm39, %v1331, 0
    %v1346 = vsel %vm39, %v1332, 0
    %v1349 = vsel %vm39, %v1333, 0
    %v1352 = vsel %vm39, %v1334, 0
    %v1355 = vsel %vm39, %v1335, 0
    %v1358 = vsel %vm39, %v1336, 0
    %v1361 = vsel %vm39, %v1337, 0
    %v1364 = vsel %vm39, %v1338, 0
    %1366 = vmatpush.msra.mxu0 0.0
    %1367 = vmatpush.msra.mxu0 0.0
    %1368 = vmatpush.msra.mxu0 0.0
    %1369 = vmatpush.msra.mxu0 0.0
    %1370 = vmatpush.msra.mxu0 0.0
    %1371 = vmatpush.msra.mxu0 0.0
    %1372 = vmatpush.msra.mxu0 0.0
    %1373 = vmatpush.msra.mxu0 0.0
    %1374 = vmatpush.msra.mxu0 0.0
    %1375 = vmatpush.msra.mxu0 0.0
    %1376 = vmatpush.msra.mxu0 0.0
    %1377 = vmatpush.msra.mxu0 0.0
    %1378 = vmatpush.msra.mxu0 0.0
    %1379 = vmatpush.msra.mxu0 0.0
    %1380 = vmatpush.msra.mxu0 %v69
    %1381 = vmatpush.msra.mxu0 %v27
    %1382 = vmatmul.f32.gmra.mxu0 %v1340
    %v1383 = vpop.f32.mrf.mxu0
    %v1384 = vadd.f32 0.0, %v1383
    %1385 = vmatmul.f32.gmra.mxu0 %v1343
    %v1386 = vpop.f32.mrf.mxu0
    %v1387 = vadd.f32 0.0, %v1386
    %1388 = vmatmul.f32.gmra.mxu0 %v1346
    %v1389 = vpop.f32.mrf.mxu0
    %v1390 = vadd.f32 0.0, %v1389
    %1391 = vmatmul.f32.gmra.mxu0 %v1349
    %v1392 = vpop.f32.mrf.mxu0
    %v1393 = vadd.f32 0.0, %v1392
    %1394 = vmatmul.f32.gmra.mxu0 %v1352
    %v1395 = vpop.f32.mrf.mxu0
    %v1396 = vadd.f32 0.0, %v1395
    %1397 = vmatmul.f32.gmra.mxu0 %v1355
    %v1398 = vpop.f32.mrf.mxu0
    %v1399 = vadd.f32 0.0, %v1398
    %1400 = vmatmul.f32.gmra.mxu0 %v1358
    %v1401 = vpop.f32.mrf.mxu0
    %v1402 = vadd.f32 0.0, %v1401
    %1403 = vmatmul.f32.gmra.mxu0 %v1361
    %v1404 = vpop.f32.mrf.mxu0
    %v1405 = vadd.f32 0.0, %v1404
    %1406 = vmatmul.f32.gmra.mxu0 %v1364
    %v1407 = vpop.f32.mrf.mxu0
    %v1408 = vadd.f32 0.0, %v1407
    %1409 = vdwg.mxu0
    %v1410 = vmax.f32 %v1321, %v1384
    %v1411 = vmax.f32 %v1322, %v1387
    %v1412 = vmax.f32 %v1323, %v1390
    %v1413 = vmax.f32 %v1324, %v1393
    %v1414 = vmax.f32 %v1325, %v1396
    %v1415 = vmax.f32 %v1326, %v1399
    %v1416 = vmax.f32 %v1327, %v1402
    %v1417 = vmax.f32 %v1328, %v1405
    %v1418 = vmax.f32 %v1329, %v1408
    %v1419 = vld [vmem:[%s0 + $0x438] sm:$0xff]
    %v1420 = vld [vmem:[%s0 + $0x440] sm:$0xff]
    %v1421 = vld [vmem:[%s0 + $0x448] sm:$0xff]
    %v1422 = vld [vmem:[%s0 + $0x450] sm:$0xff]
    %v1423 = vld [vmem:[%s0 + $0x458] sm:$0xff]
    %v1424 = vld [vmem:[%s0 + $0x460] sm:$0xff]
    %v1425 = vld [vmem:[%s0 + $0x468] sm:$0xff]
    %v1426 = vld [vmem:[%s0 + $0x470] sm:$0xff]
    %v1427 = vld [vmem:[%s0 + $0x478] sm:$0xff]
    %v1429 = vsel %vm39, %v1419, 0
    %v1432 = vsel %vm39, %v1420, 0
    %v1435 = vsel %vm39, %v1421, 0
    %v1438 = vsel %vm39, %v1422, 0
    %v1441 = vsel %vm39, %v1423, 0
    %v1444 = vsel %vm39, %v1424, 0
    %v1447 = vsel %vm39, %v1425, 0
    %v1450 = vsel %vm39, %v1426, 0
    %v1453 = vsel %vm39, %v1427, 0
    %1455 = vmatpush.msra.mxu0 0.0
    %1456 = vmatpush.msra.mxu0 0.0
    %1457 = vmatpush.msra.mxu0 0.0
    %1458 = vmatpush.msra.mxu0 0.0
    %1459 = vmatpush.msra.mxu0 0.0
    %1460 = vmatpush.msra.mxu0 0.0
    %1461 = vmatpush.msra.mxu0 0.0
    %1462 = vmatpush.msra.mxu0 0.0
    %1463 = vmatpush.msra.mxu0 0.0
    %1464 = vmatpush.msra.mxu0 0.0
    %1465 = vmatpush.msra.mxu0 0.0
    %1466 = vmatpush.msra.mxu0 0.0
    %1467 = vmatpush.msra.mxu0 0.0
    %1468 = vmatpush.msra.mxu0 0.0
    %1469 = vmatpush.msra.mxu0 %v69
    %1470 = vmatpush.msra.mxu0 %v27
    %1471 = vmatmul.f32.gmra.mxu0 %v1429
    %v1472 = vpop.f32.mrf.mxu0
    %v1473 = vadd.f32 0.0, %v1472
    %1474 = vmatmul.f32.gmra.mxu0 %v1432
    %v1475 = vpop.f32.mrf.mxu0
    %v1476 = vadd.f32 0.0, %v1475
    %1477 = vmatmul.f32.gmra.mxu0 %v1435
    %v1478 = vpop.f32.mrf.mxu0
    %v1479 = vadd.f32 0.0, %v1478
    %1480 = vmatmul.f32.gmra.mxu0 %v1438
    %v1481 = vpop.f32.mrf.mxu0
    %v1482 = vadd.f32 0.0, %v1481
    %1483 = vmatmul.f32.gmra.mxu0 %v1441
    %v1484 = vpop.f32.mrf.mxu0
    %v1485 = vadd.f32 0.0, %v1484
    %1486 = vmatmul.f32.gmra.mxu0 %v1444
    %v1487 = vpop.f32.mrf.mxu0
    %v1488 = vadd.f32 0.0, %v1487
    %1489 = vmatmul.f32.gmra.mxu0 %v1447
    %v1490 = vpop.f32.mrf.mxu0
    %v1491 = vadd.f32 0.0, %v1490
    %1492 = vmatmul.f32.gmra.mxu0 %v1450
    %v1493 = vpop.f32.mrf.mxu0
    %v1494 = vadd.f32 0.0, %v1493
    %1495 = vmatmul.f32.gmra.mxu0 %v1453
    %v1496 = vpop.f32.mrf.mxu0
    %v1497 = vadd.f32 0.0, %v1496
    %1498 = vdwg.mxu0
    %v1499 = vmax.f32 %v1410, %v1473
    %v1500 = vmax.f32 %v1411, %v1476
    %v1501 = vmax.f32 %v1412, %v1479
    %v1502 = vmax.f32 %v1413, %v1482
    %v1503 = vmax.f32 %v1414, %v1485
    %v1504 = vmax.f32 %v1415, %v1488
    %v1505 = vmax.f32 %v1416, %v1491
    %v1506 = vmax.f32 %v1417, %v1494
    %v1507 = vmax.f32 %v1418, %v1497
    %v1508 = vadd.f32 %v1499, %v383
    %v1509 = vadd.f32 %v1500, %v383
    %v1510 = vadd.f32 %v1501, %v383
    %v1511 = vadd.f32 %v1502, %v383
    %v1512 = vadd.f32 %v1503, %v383
    %v1513 = vadd.f32 %v1504, %v383
    %v1514 = vadd.f32 %v1505, %v383
    %v1515 = vadd.f32 %v1506, %v383
    %v1516 = vadd.f32 %v1507, %v383
    %v1517 = vmax.f32 %v1508, 0.0
    %v1518 = vmax.f32 %v1509, 0.0
    %v1519 = vmax.f32 %v1510, 0.0
    %v1520 = vmax.f32 %v1511, 0.0
    %v1521 = vmax.f32 %v1512, 0.0
    %v1522 = vmax.f32 %v1513, 0.0
    %v1523 = vmax.f32 %v1514, 0.0
    %v1524 = vmax.f32 %v1515, 0.0
    %v1525 = vmax.f32 %v1516, 0.0
    %1526 = vst.msk [vmem:[#allocation2 + $0xd8] sm:$0xff] %vm403, %v1517
    %1527 = vst.msk [vmem:[#allocation2 + $0xe0] sm:$0xff] %vm403, %v1518
    %1528 = vst.msk [vmem:[#allocation2 + $0xe8] sm:$0xff] %vm403, %v1519
    %1529 = vst.msk [vmem:[#allocation2 + $0xf0] sm:$0xff] %vm403, %v1520
    %1530 = vst.msk [vmem:[#allocation2 + $0xf8] sm:$0xff] %vm403, %v1521
    %1531 = vst.msk [vmem:[#allocation2 + $0x100] sm:$0xff] %vm403, %v1522
    %1532 = vst.msk [vmem:[#allocation2 + $0x108] sm:$0xff] %vm403, %v1523
    %1533 = vst.msk [vmem:[#allocation2 + $0x110] sm:$0xff] %vm403, %v1524
    %1534 = vst.msk [vmem:[#allocation2 + $0x118] sm:$0xff] %vm403, %v1525
    %v1535 = vld [vmem:[%s3] sm:$0xff]
    %v1536 = vld [vmem:[%s3 + $0x8] sm:$0xff]
    %v1537 = vld [vmem:[%s3 + $0x10] sm:$0xff]
    %v1538 = vld [vmem:[%s3 + $0x18] sm:$0xff]
    %v1539 = vld [vmem:[%s3 + $0x20] sm:$0xff]
    %v1540 = vld [vmem:[%s3 + $0x28] sm:$0xff]
    %v1541 = vld [vmem:[%s3 + $0x30] sm:$0xff]
    %v1542 = vld [vmem:[%s3 + $0x38] sm:$0xff]
    %v1543 = vld [vmem:[#allocation2] sm:$0xff]
    %v1544 = vld [vmem:[#allocation2 + $0x8] sm:$0xff]
    %v1545 = vld [vmem:[#allocation2 + $0x10] sm:$0xff]
    %v1546 = vld [vmem:[#allocation2 + $0x18] sm:$0xff]
    %v1547 = vld [vmem:[#allocation2 + $0x30] sm:$0xff]
    %v1548 = vld [vmem:[#allocation2 + $0x38] sm:$0xff]
    %v1549 = vld [vmem:[#allocation2 + $0x40] sm:$0xff]
    %v1550 = vld [vmem:[#allocation2 + $0x48] sm:$0xff]
    %v1551 = vld [vmem:[#allocation2 + $0x60] sm:$0xff]
    %v1552 = vld [vmem:[#allocation2 + $0x68] sm:$0xff]
    %v1553 = vld [vmem:[#allocation2 + $0x70] sm:$0xff]
    %v1554 = vld [vmem:[#allocation2 + $0x78] sm:$0xff]
    %v1555 = vld [vmem:[#allocation2 + $0x90] sm:$0xff]
    %v1556 = vld [vmem:[#allocation2 + $0x98] sm:$0xff]
    %v1557 = vld [vmem:[#allocation2 + $0xa0] sm:$0xff]
    %v1558 = vld [vmem:[#allocation2 + $0xa8] sm:$0xff]
    %v1559 = vld [vmem:[%s3 + $0x40] sm:$0xff]
    %v1560 = vld [vmem:[%s3 + $0x48] sm:$0xff]
    %v1561 = vld [vmem:[%s3 + $0x50] sm:$0xff]
    %v1562 = vld [vmem:[%s3 + $0x58] sm:$0xff]
    %v1563 = vld [vmem:[%s3 + $0x60] sm:$0xff]
    %v1564 = vld [vmem:[%s3 + $0x68] sm:$0xff]
    %v1565 = vld [vmem:[%s3 + $0x70] sm:$0xff]
    %v1566 = vld [vmem:[%s3 + $0x78] sm:$0xff]
    %v1567 = vld [vmem:[#allocation2 + $0x20] sm:$0xff]
    %v1569 = vsel %vm403, %v1544, 0
    %v1572 = vsel %vm403, %v1545, 0
    %v1575 = vsel %vm403, %v1546, 0
    %v1578 = vsel %vm403, %v1567, 0
    %1580 = vmatpush.msra.mxu0 0.0
    %1581 = vmatpush.msra.mxu0 0.0
    %1582 = vmatpush.msra.mxu0 0.0
    %1583 = vmatpush.msra.mxu0 0.0
    %1584 = vmatpush.msra.mxu0 0.0
    %1585 = vmatpush.msra.mxu0 0.0
    %1586 = vmatpush.msra.mxu0 0.0
    %1587 = vmatpush.msra.mxu0 0.0
    %1588 = vmatpush.msra.mxu0 %v1566
    %1589 = vmatpush.msra.mxu0 %v1565
    %1590 = vmatpush.msra.mxu0 %v1564
    %1591 = vmatpush.msra.mxu0 %v1563
    %1592 = vmatpush.msra.mxu0 %v1562
    %1593 = vmatpush.msra.mxu0 %v1561
    %1594 = vmatpush.msra.mxu0 %v1560
    %1595 = vmatpush.msra.mxu0 %v1559
    %1596 = vmatmul.f32.gmra.mxu0 %v1569
    %v1597 = vpop.f32.mrf.mxu0
    %v1598 = vadd.f32 0.0, %v1597
    %1599 = vmatmul.f32.gmra.mxu0 %v1572
    %v1600 = vpop.f32.mrf.mxu0
    %v1601 = vadd.f32 0.0, %v1600
    %1602 = vmatmul.f32.gmra.mxu0 %v1575
    %v1603 = vpop.f32.mrf.mxu0
    %v1604 = vadd.f32 0.0, %v1603
    %1605 = vmatmul.f32.gmra.mxu0 %v1578
    %v1606 = vpop.f32.mrf.mxu0
    %v1607 = vadd.f32 0.0, %v1606
    %1608 = vdwg.mxu0
    %v1610 = vsel %vm403, %v1543, 0
    %1612 = vmatpush.msra.mxu0 0.0
    %1613 = vmatpush.msra.mxu0 0.0
    %1614 = vmatpush.msra.mxu0 0.0
    %1615 = vmatpush.msra.mxu0 0.0
    %1616 = vmatpush.msra.mxu0 0.0
    %1617 = vmatpush.msra.mxu0 0.0
    %1618 = vmatpush.msra.mxu0 0.0
    %1619 = vmatpush.msra.mxu0 0.0
    %1620 = vmatpush.msra.mxu0 %v1542
    %1621 = vmatpush.msra.mxu0 %v1541
    %1622 = vmatpush.msra.mxu0 %v1540
    %1623 = vmatpush.msra.mxu0 %v1539
    %1624 = vmatpush.msra.mxu0 %v1538
    %1625 = vmatpush.msra.mxu0 %v1537
    %1626 = vmatpush.msra.mxu0 %v1536
    %1627 = vmatpush.msra.mxu0 %v1535
    %1628 = vmatmul.f32.gmra.mxu0 %v1610
    %v1629 = vpop.f32.mrf.mxu0
    %v1630 = vadd.f32 %v1598, %v1629
    %1631 = vmatmul.f32.gmra.mxu0 %v1569
    %v1632 = vpop.f32.mrf.mxu0
    %v1633 = vadd.f32 %v1601, %v1632
    %1634 = vmatmul.f32.gmra.mxu0 %v1572
    %v1635 = vpop.f32.mrf.mxu0
    %v1636 = vadd.f32 %v1604, %v1635
    %1637 = vmatmul.f32.gmra.mxu0 %v1575
    %v1638 = vpop.f32.mrf.mxu0
    %v1639 = vadd.f32 %v1607, %v1638
    %1640 = vdwg.mxu0
    %v1641 = vld [vmem:[#allocation2 + $0x38] sm:$0xff]
    %v1642 = vld [vmem:[#allocation2 + $0x40] sm:$0xff]
    %v1643 = vld [vmem:[#allocation2 + $0x48] sm:$0xff]
    %v1644 = vld [vmem:[#allocation2 + $0x50] sm:$0xff]
    %v1646 = vsel %vm403, %v1641, 0
    %v1649 = vsel %vm403, %v1642, 0
    %v1652 = vsel %vm403, %v1643, 0
    %v1655 = vsel %vm403, %v1644, 0
    %1657 = vmatpush.msra.mxu0 0.0
    %1658 = vmatpush.msra.mxu0 0.0
    %1659 = vmatpush.msra.mxu0 0.0
    %1660 = vmatpush.msra.mxu0 0.0
    %1661 = vmatpush.msra.mxu0 0.0
    %1662 = vmatpush.msra.mxu0 0.0
    %1663 = vmatpush.msra.mxu0 0.0
    %1664 = vmatpush.msra.mxu0 0.0
    %1665 = vmatpush.msra.mxu0 %v1566
    %1666 = vmatpush.msra.mxu0 %v1565
    %1667 = vmatpush.msra.mxu0 %v1564
    %1668 = vmatpush.msra.mxu0 %v1563
    %1669 = vmatpush.msra.mxu0 %v1562
    %1670 = vmatpush.msra.mxu0 %v1561
    %1671 = vmatpush.msra.mxu0 %v1560
    %1672 = vmatpush.msra.mxu0 %v1559
    %1673 = vmatmul.f32.gmra.mxu0 %v1646
    %v1674 = vpop.f32.mrf.mxu0
    %v1675 = vadd.f32 0.0, %v1674
    %1676 = vmatmul.f32.gmra.mxu0 %v1649
    %v1677 = vpop.f32.mrf.mxu0
    %v1678 = vadd.f32 0.0, %v1677
    %1679 = vmatmul.f32.gmra.mxu0 %v1652
    %v1680 = vpop.f32.mrf.mxu0
    %v1681 = vadd.f32 0.0, %v1680
    %1682 = vmatmul.f32.gmra.mxu0 %v1655
    %v1683 = vpop.f32.mrf.mxu0
    %v1684 = vadd.f32 0.0, %v1683
    %1685 = vdwg.mxu0
    %v1687 = vsel %vm403, %v1547, 0
    %v1690 = vsel %vm403, %v1548, 0
    %v1693 = vsel %vm403, %v1549, 0
    %v1696 = vsel %vm403, %v1550, 0
    %1698 = vmatpush.msra.mxu0 0.0
    %1699 = vmatpush.msra.mxu0 0.0
    %1700 = vmatpush.msra.mxu0 0.0
    %1701 = vmatpush.msra.mxu0 0.0
    %1702 = vmatpush.msra.mxu0 0.0
    %1703 = vmatpush.msra.mxu0 0.0
    %1704 = vmatpush.msra.mxu0 0.0
    %1705 = vmatpush.msra.mxu0 0.0
    %1706 = vmatpush.msra.mxu0 %v1542
    %1707 = vmatpush.msra.mxu0 %v1541
    %1708 = vmatpush.msra.mxu0 %v1540
    %1709 = vmatpush.msra.mxu0 %v1539
    %1710 = vmatpush.msra.mxu0 %v1538
    %1711 = vmatpush.msra.mxu0 %v1537
    %1712 = vmatpush.msra.mxu0 %v1536
    %1713 = vmatpush.msra.mxu0 %v1535
    %1714 = vmatmul.f32.gmra.mxu0 %v1687
    %v1715 = vpop.f32.mrf.mxu0
    %v1716 = vadd.f32 %v1675, %v1715
    %1717 = vmatmul.f32.gmra.mxu0 %v1690
    %v1718 = vpop.f32.mrf.mxu0
    %v1719 = vadd.f32 %v1678, %v1718
    %1720 = vmatmul.f32.gmra.mxu0 %v1693
    %v1721 = vpop.f32.mrf.mxu0
    %v1722 = vadd.f32 %v1681, %v1721
    %1723 = vmatmul.f32.gmra.mxu0 %v1696
    %v1724 = vpop.f32.mrf.mxu0
    %v1725 = vadd.f32 %v1684, %v1724
    %1726 = vdwg.mxu0
    %v1727 = vld [vmem:[#allocation2 + $0x68] sm:$0xff]
    %v1728 = vld [vmem:[#allocation2 + $0x70] sm:$0xff]
    %v1729 = vld [vmem:[#allocation2 + $0x78] sm:$0xff]
    %v1730 = vld [vmem:[#allocation2 + $0x80] sm:$0xff]
    %v1732 = vsel %vm403, %v1727, 0
    %v1735 = vsel %vm403, %v1728, 0
    %v1738 = vsel %vm403, %v1729, 0
    %v1741 = vsel %vm403, %v1730, 0
    %1743 = vmatpush.msra.mxu0 0.0
    %1744 = vmatpush.msra.mxu0 0.0
    %1745 = vmatpush.msra.mxu0 0.0
    %1746 = vmatpush.msra.mxu0 0.0
    %1747 = vmatpush.msra.mxu0 0.0
    %1748 = vmatpush.msra.mxu0 0.0
    %1749 = vmatpush.msra.mxu0 0.0
    %1750 = vmatpush.msra.mxu0 0.0
    %1751 = vmatpush.msra.mxu0 %v1566
    %1752 = vmatpush.msra.mxu0 %v1565
    %1753 = vmatpush.msra.mxu0 %v1564
    %1754 = vmatpush.msra.mxu0 %v1563
    %1755 = vmatpush.msra.mxu0 %v1562
    %1756 = vmatpush.msra.mxu0 %v1561
    %1757 = vmatpush.msra.mxu0 %v1560
    %1758 = vmatpush.msra.mxu0 %v1559
    %1759 = vmatmul.f32.gmra.mxu0 %v1732
    %v1760 = vpop.f32.mrf.mxu0
    %v1761 = vadd.f32 0.0, %v1760
    %1762 = vmatmul.f32.gmra.mxu0 %v1735
    %v1763 = vpop.f32.mrf.mxu0
    %v1764 = vadd.f32 0.0, %v1763
    %1765 = vmatmul.f32.gmra.mxu0 %v1738
    %v1766 = vpop.f32.mrf.mxu0
    %v1767 = vadd.f32 0.0, %v1766
    %1768 = vmatmul.f32.gmra.mxu0 %v1741
    %v1769 = vpop.f32.mrf.mxu0
    %v1770 = vadd.f32 0.0, %v1769
    %1771 = vdwg.mxu0
    %v1773 = vsel %vm403, %v1551, 0
    %v1776 = vsel %vm403, %v1552, 0
    %v1779 = vsel %vm403, %v1553, 0
    %v1782 = vsel %vm403, %v1554, 0
    %1784 = vmatpush.msra.mxu0 0.0
    %1785 = vmatpush.msra.mxu0 0.0
    %1786 = vmatpush.msra.mxu0 0.0
    %1787 = vmatpush.msra.mxu0 0.0
    %1788 = vmatpush.msra.mxu0 0.0
    %1789 = vmatpush.msra.mxu0 0.0
    %1790 = vmatpush.msra.mxu0 0.0
    %1791 = vmatpush.msra.mxu0 0.0
    %1792 = vmatpush.msra.mxu0 %v1542
    %1793 = vmatpush.msra.mxu0 %v1541
    %1794 = vmatpush.msra.mxu0 %v1540
    %1795 = vmatpush.msra.mxu0 %v1539
    %1796 = vmatpush.msra.mxu0 %v1538
    %1797 = vmatpush.msra.mxu0 %v1537
    %1798 = vmatpush.msra.mxu0 %v1536
    %1799 = vmatpush.msra.mxu0 %v1535
    %1800 = vmatmul.f32.gmra.mxu0 %v1773
    %v1801 = vpop.f32.mrf.mxu0
    %v1802 = vadd.f32 %v1761, %v1801
    %1803 = vmatmul.f32.gmra.mxu0 %v1776
    %v1804 = vpop.f32.mrf.mxu0
    %v1805 = vadd.f32 %v1764, %v1804
    %1806 = vmatmul.f32.gmra.mxu0 %v1779
    %v1807 = vpop.f32.mrf.mxu0
    %v1808 = vadd.f32 %v1767, %v1807
    %1809 = vmatmul.f32.gmra.mxu0 %v1782
    %v1810 = vpop.f32.mrf.mxu0
    %v1811 = vadd.f32 %v1770, %v1810
    %1812 = vdwg.mxu0
    %v1813 = vld [vmem:[#allocation2 + $0x98] sm:$0xff]
    %v1814 = vld [vmem:[#allocation2 + $0xa0] sm:$0xff]
    %v1815 = vld [vmem:[#allocation2 + $0xa8] sm:$0xff]
    %v1816 = vld [vmem:[#allocation2 + $0xb0] sm:$0xff]
    %v1818 = vsel %vm403, %v1813, 0
    %v1821 = vsel %vm403, %v1814, 0
    %v1824 = vsel %vm403, %v1815, 0
    %v1827 = vsel %vm403, %v1816, 0
    %1829 = vmatpush.msra.mxu0 0.0
    %1830 = vmatpush.msra.mxu0 0.0
    %1831 = vmatpush.msra.mxu0 0.0
    %1832 = vmatpush.msra.mxu0 0.0
    %1833 = vmatpush.msra.mxu0 0.0
    %1834 = vmatpush.msra.mxu0 0.0
    %1835 = vmatpush.msra.mxu0 0.0
    %1836 = vmatpush.msra.mxu0 0.0
    %1837 = vmatpush.msra.mxu0 %v1566
    %1838 = vmatpush.msra.mxu0 %v1565
    %1839 = vmatpush.msra.mxu0 %v1564
    %1840 = vmatpush.msra.mxu0 %v1563
    %1841 = vmatpush.msra.mxu0 %v1562
    %1842 = vmatpush.msra.mxu0 %v1561
    %1843 = vmatpush.msra.mxu0 %v1560
    %1844 = vmatpush.msra.mxu0 %v1559
    %1845 = vmatmul.f32.gmra.mxu0 %v1818
    %v1846 = vpop.f32.mrf.mxu0
    %v1847 = vadd.f32 0.0, %v1846
    %1848 = vmatmul.f32.gmra.mxu0 %v1821
    %v1849 = vpop.f32.mrf.mxu0
    %v1850 = vadd.f32 0.0, %v1849
    %1851 = vmatmul.f32.gmra.mxu0 %v1824
    %v1852 = vpop.f32.mrf.mxu0
    %v1853 = vadd.f32 0.0, %v1852
    %1854 = vmatmul.f32.gmra.mxu0 %v1827
    %v1855 = vpop.f32.mrf.mxu0
    %v1856 = vadd.f32 0.0, %v1855
    %1857 = vdwg.mxu0
    %v1859 = vsel %vm403, %v1555, 0
    %v1862 = vsel %vm403, %v1556, 0
    %v1865 = vsel %vm403, %v1557, 0
    %v1868 = vsel %vm403, %v1558, 0
    %1870 = vmatpush.msra.mxu0 0.0
    %1871 = vmatpush.msra.mxu0 0.0
    %1872 = vmatpush.msra.mxu0 0.0
    %1873 = vmatpush.msra.mxu0 0.0
    %1874 = vmatpush.msra.mxu0 0.0
    %1875 = vmatpush.msra.mxu0 0.0
    %1876 = vmatpush.msra.mxu0 0.0
    %1877 = vmatpush.msra.mxu0 0.0
    %1878 = vmatpush.msra.mxu0 %v1542
    %1879 = vmatpush.msra.mxu0 %v1541
    %1880 = vmatpush.msra.mxu0 %v1540
    %1881 = vmatpush.msra.mxu0 %v1539
    %1882 = vmatpush.msra.mxu0 %v1538
    %1883 = vmatpush.msra.mxu0 %v1537
    %1884 = vmatpush.msra.mxu0 %v1536
    %1885 = vmatpush.msra.mxu0 %v1535
    %1886 = vmatmul.f32.gmra.mxu0 %v1859
    %v1887 = vpop.f32.mrf.mxu0
    %v1888 = vadd.f32 %v1847, %v1887
    %1889 = vmatmul.f32.gmra.mxu0 %v1862
    %v1890 = vpop.f32.mrf.mxu0
    %v1891 = vadd.f32 %v1850, %v1890
    %1892 = vmatmul.f32.gmra.mxu0 %v1865
    %v1893 = vpop.f32.mrf.mxu0
    %v1894 = vadd.f32 %v1853, %v1893
    %1895 = vmatmul.f32.gmra.mxu0 %v1868
    %v1896 = vpop.f32.mrf.mxu0
    %v1897 = vadd.f32 %v1856, %v1896
    %1898 = vdwg.mxu0
    %v1899 = vld [vmem:[%s3 + $0x80] sm:$0xff]
    %v1900 = vld [vmem:[%s3 + $0x88] sm:$0xff]
    %v1901 = vld [vmem:[%s3 + $0x90] sm:$0xff]
    %v1902 = vld [vmem:[%s3 + $0x98] sm:$0xff]
    %v1903 = vld [vmem:[%s3 + $0xa0] sm:$0xff]
    %v1904 = vld [vmem:[%s3 + $0xa8] sm:$0xff]
    %v1905 = vld [vmem:[%s3 + $0xb0] sm:$0xff]
    %v1906 = vld [vmem:[%s3 + $0xb8] sm:$0xff]
    %v1907 = vld [vmem:[#allocation2 + $0x10] sm:$0xff]
    %v1908 = vld [vmem:[#allocation2 + $0x18] sm:$0xff]
    %v1909 = vld [vmem:[#allocation2 + $0x20] sm:$0xff]
    %v1910 = vld [vmem:[#allocation2 + $0x28] sm:$0xff]
    %v1912 = vsel %vm403, %v1907, 0
    %v1915 = vsel %vm403, %v1908, 0
    %v1918 = vsel %vm403, %v1909, 0
    %v1921 = vsel %vm403, %v1910, 0
    %1923 = vmatpush.msra.mxu0 0.0
    %1924 = vmatpush.msra.mxu0 0.0
    %1925 = vmatpush.msra.mxu0 0.0
    %1926 = vmatpush.msra.mxu0 0.0
    %1927 = vmatpush.msra.mxu0 0.0
    %1928 = vmatpush.msra.mxu0 0.0
    %1929 = vmatpush.msra.mxu0 0.0
    %1930 = vmatpush.msra.mxu0 0.0
    %1931 = vmatpush.msra.mxu0 %v1906
    %1932 = vmatpush.msra.mxu0 %v1905
    %1933 = vmatpush.msra.mxu0 %v1904
    %1934 = vmatpush.msra.mxu0 %v1903
    %1935 = vmatpush.msra.mxu0 %v1902
    %1936 = vmatpush.msra.mxu0 %v1901
    %1937 = vmatpush.msra.mxu0 %v1900
    %1938 = vmatpush.msra.mxu0 %v1899
    %1939 = vmatmul.f32.gmra.mxu0 %v1912
    %v1940 = vpop.f32.mrf.mxu0
    %v1941 = vadd.f32 0.0, %v1940
    %1942 = vmatmul.f32.gmra.mxu0 %v1915
    %v1943 = vpop.f32.mrf.mxu0
    %v1944 = vadd.f32 0.0, %v1943
    %1945 = vmatmul.f32.gmra.mxu0 %v1918
    %v1946 = vpop.f32.mrf.mxu0
    %v1947 = vadd.f32 0.0, %v1946
    %1948 = vmatmul.f32.gmra.mxu0 %v1921
    %v1949 = vpop.f32.mrf.mxu0
    %v1950 = vadd.f32 0.0, %v1949
    %1951 = vdwg.mxu0
    %v1952 = vadd.f32 %v1630, %v1941
    %v1953 = vadd.f32 %v1633, %v1944
    %v1954 = vadd.f32 %v1636, %v1947
    %v1955 = vadd.f32 %v1639, %v1950
    %v1956 = vld [vmem:[#allocation2 + $0x40] sm:$0xff]
    %v1957 = vld [vmem:[#allocation2 + $0x48] sm:$0xff]
    %v1958 = vld [vmem:[#allocation2 + $0x50] sm:$0xff]
    %v1959 = vld [vmem:[#allocation2 + $0x58] sm:$0xff]
    %v1961 = vsel %vm403, %v1956, 0
    %v1964 = vsel %vm403, %v1957, 0
    %v1967 = vsel %vm403, %v1958, 0
    %v1970 = vsel %vm403, %v1959, 0
    %1972 = vmatpush.msra.mxu0 0.0
    %1973 = vmatpush.msra.mxu0 0.0
    %1974 = vmatpush.msra.mxu0 0.0
    %1975 = vmatpush.msra.mxu0 0.0
    %1976 = vmatpush.msra.mxu0 0.0
    %1977 = vmatpush.msra.mxu0 0.0
    %1978 = vmatpush.msra.mxu0 0.0
    %1979 = vmatpush.msra.mxu0 0.0
    %1980 = vmatpush.msra.mxu0 %v1906
    %1981 = vmatpush.msra.mxu0 %v1905
    %1982 = vmatpush.msra.mxu0 %v1904
    %1983 = vmatpush.msra.mxu0 %v1903
    %1984 = vmatpush.msra.mxu0 %v1902
    %1985 = vmatpush.msra.mxu0 %v1901
    %1986 = vmatpush.msra.mxu0 %v1900
    %1987 = vmatpush.msra.mxu0 %v1899
    %1988 = vmatmul.f32.gmra.mxu0 %v1961
    %v1989 = vpop.f32.mrf.mxu0
    %v1990 = vadd.f32 0.0, %v1989
    %1991 = vmatmul.f32.gmra.mxu0 %v1964
    %v1992 = vpop.f32.mrf.mxu0
    %v1993 = vadd.f32 0.0, %v1992
    %1994 = vmatmul.f32.gmra.mxu0 %v1967
    %v1995 = vpop.f32.mrf.mxu0
    %v1996 = vadd.f32 0.0, %v1995
    %1997 = vmatmul.f32.gmra.mxu0 %v1970
    %v1998 = vpop.f32.mrf.mxu0
    %v1999 = vadd.f32 0.0, %v1998
    %2000 = vdwg.mxu0
    %v2001 = vadd.f32 %v1716, %v1990
    %v2002 = vadd.f32 %v1719, %v1993
    %v2003 = vadd.f32 %v1722, %v1996
    %v2004 = vadd.f32 %v1725, %v1999
    %v2005 = vld [vmem:[#allocation2 + $0x70] sm:$0xff]
    %v2006 = vld [vmem:[#allocation2 + $0x78] sm:$0xff]
    %v2007 = vld [vmem:[#allocation2 + $0x80] sm:$0xff]
    %v2008 = vld [vmem:[#allocation2 + $0x88] sm:$0xff]
    %v2010 = vsel %vm403, %v2005, 0
    %v2013 = vsel %vm403, %v2006, 0
    %v2016 = vsel %vm403, %v2007, 0
    %v2019 = vsel %vm403, %v2008, 0
    %2021 = vmatpush.msra.mxu0 0.0
    %2022 = vmatpush.msra.mxu0 0.0
    %2023 = vmatpush.msra.mxu0 0.0
    %2024 = vmatpush.msra.mxu0 0.0
    %2025 = vmatpush.msra.mxu0 0.0
    %2026 = vmatpush.msra.mxu0 0.0
    %2027 = vmatpush.msra.mxu0 0.0
    %2028 = vmatpush.msra.mxu0 0.0
    %2029 = vmatpush.msra.mxu0 %v1906
    %2030 = vmatpush.msra.mxu0 %v1905
    %2031 = vmatpush.msra.mxu0 %v1904
    %2032 = vmatpush.msra.mxu0 %v1903
    %2033 = vmatpush.msra.mxu0 %v1902
    %2034 = vmatpush.msra.mxu0 %v1901
    %2035 = vmatpush.msra.mxu0 %v1900
    %2036 = vmatpush.msra.mxu0 %v1899
    %2037 = vmatmul.f32.gmra.mxu0 %v2010
    %v2038 = vpop.f32.mrf.mxu0
    %v2039 = vadd.f32 0.0, %v2038
    %2040 = vmatmul.f32.gmra.mxu0 %v2013
    %v2041 = vpop.f32.mrf.mxu0
    %v2042 = vadd.f32 0.0, %v2041
    %2043 = vmatmul.f32.gmra.mxu0 %v2016
    %v2044 = vpop.f32.mrf.mxu0
    %v2045 = vadd.f32 0.0, %v2044
    %2046 = vmatmul.f32.gmra.mxu0 %v2019
    %v2047 = vpop.f32.mrf.mxu0
    %v2048 = vadd.f32 0.0, %v2047
    %2049 = vdwg.mxu0
    %v2050 = vadd.f32 %v1802, %v2039
    %v2051 = vadd.f32 %v1805, %v2042
    %v2052 = vadd.f32 %v1808, %v2045
    %v2053 = vadd.f32 %v1811, %v2048
    %v2054 = vld [vmem:[#allocation2 + $0xa0] sm:$0xff]
    %v2055 = vld [vmem:[#allocation2 + $0xa8] sm:$0xff]
    %v2056 = vld [vmem:[#allocation2 + $0xb0] sm:$0xff]
    %v2057 = vld [vmem:[#allocation2 + $0xb8] sm:$0xff]
    %v2059 = vsel %vm403, %v2054, 0
    %v2062 = vsel %vm403, %v2055, 0
    %v2065 = vsel %vm403, %v2056, 0
    %v2068 = vsel %vm403, %v2057, 0
    %2070 = vmatpush.msra.mxu0 0.0
    %2071 = vmatpush.msra.mxu0 0.0
    %2072 = vmatpush.msra.mxu0 0.0
    %2073 = vmatpush.msra.mxu0 0.0
    %2074 = vmatpush.msra.mxu0 0.0
    %2075 = vmatpush.msra.mxu0 0.0
    %2076 = vmatpush.msra.mxu0 0.0
    %2077 = vmatpush.msra.mxu0 0.0
    %2078 = vmatpush.msra.mxu0 %v1906
    %2079 = vmatpush.msra.mxu0 %v1905
    %2080 = vmatpush.msra.mxu0 %v1904
    %2081 = vmatpush.msra.mxu0 %v1903
    %2082 = vmatpush.msra.mxu0 %v1902
    %2083 = vmatpush.msra.mxu0 %v1901
    %2084 = vmatpush.msra.mxu0 %v1900
    %2085 = vmatpush.msra.mxu0 %v1899
    %2086 = vmatmul.f32.gmra.mxu0 %v2059
    %v2087 = vpop.f32.mrf.mxu0
    %v2088 = vadd.f32 0.0, %v2087
    %2089 = vmatmul.f32.gmra.mxu0 %v2062
    %v2090 = vpop.f32.mrf.mxu0
    %v2091 = vadd.f32 0.0, %v2090
    %2092 = vmatmul.f32.gmra.mxu0 %v2065
    %v2093 = vpop.f32.mrf.mxu0
    %v2094 = vadd.f32 0.0, %v2093
    %2095 = vmatmul.f32.gmra.mxu0 %v2068
    %v2096 = vpop.f32.mrf.mxu0
    %v2097 = vadd.f32 0.0, %v2096
    %2098 = vdwg.mxu0
    %v2099 = vadd.f32 %v1888, %v2088
    %v2100 = vadd.f32 %v1891, %v2091
    %v2101 = vadd.f32 %v1894, %v2094
    %v2102 = vadd.f32 %v1897, %v2097
    %v2103 = vld [vmem:[%s3 + $0xc0] sm:$0xff]
    %v2104 = vld [vmem:[%s3 + $0xc8] sm:$0xff]
    %v2105 = vld [vmem:[%s3 + $0xd0] sm:$0xff]
    %v2106 = vld [vmem:[%s3 + $0xd8] sm:$0xff]
    %v2107 = vld [vmem:[%s3 + $0xe0] sm:$0xff]
    %v2108 = vld [vmem:[%s3 + $0xe8] sm:$0xff]
    %v2109 = vld [vmem:[%s3 + $0xf0] sm:$0xff]
    %v2110 = vld [vmem:[%s3 + $0xf8] sm:$0xff]
    %2111 = vmatpush.msra.mxu0 0.0
    %2112 = vmatpush.msra.mxu0 0.0
    %2113 = vmatpush.msra.mxu0 0.0
    %2114 = vmatpush.msra.mxu0 0.0
    %2115 = vmatpush.msra.mxu0 0.0
    %2116 = vmatpush.msra.mxu0 0.0
    %2117 = vmatpush.msra.mxu0 0.0
    %2118 = vmatpush.msra.mxu0 0.0
    %2119 = vmatpush.msra.mxu0 %v2110
    %2120 = vmatpush.msra.mxu0 %v2109
    %2121 = vmatpush.msra.mxu0 %v2108
    %2122 = vmatpush.msra.mxu0 %v2107
    %2123 = vmatpush.msra.mxu0 %v2106
    %2124 = vmatpush.msra.mxu0 %v2105
    %2125 = vmatpush.msra.mxu0 %v2104
    %2126 = vmatpush.msra.mxu0 %v2103
    %2127 = vmatmul.f32.gmra.mxu0 %v1687
    %v2128 = vpop.f32.mrf.mxu0
    %v2129 = vadd.f32 0.0, %v2128
    %2130 = vmatmul.f32.gmra.mxu0 %v1690
    %v2131 = vpop.f32.mrf.mxu0
    %v2132 = vadd.f32 0.0, %v2131
    %2133 = vmatmul.f32.gmra.mxu0 %v1693
    %v2134 = vpop.f32.mrf.mxu0
    %v2135 = vadd.f32 0.0, %v2134
    %2136 = vmatmul.f32.gmra.mxu0 %v1696
    %v2137 = vpop.f32.mrf.mxu0
    %v2138 = vadd.f32 0.0, %v2137
    %2139 = vdwg.mxu0
    %v2140 = vadd.f32 %v1952, %v2129
    %v2141 = vadd.f32 %v1953, %v2132
    %v2142 = vadd.f32 %v1954, %v2135
    %v2143 = vadd.f32 %v1955, %v2138
    %2144 = vmatpush.msra.mxu0 0.0
    %2145 = vmatpush.msra.mxu0 0.0
    %2146 = vmatpush.msra.mxu0 0.0
    %2147 = vmatpush.msra.mxu0 0.0
    %2148 = vmatpush.msra.mxu0 0.0
    %2149 = vmatpush.msra.mxu0 0.0
    %2150 = vmatpush.msra.mxu0 0.0
    %2151 = vmatpush.msra.mxu0 0.0
    %2152 = vmatpush.msra.mxu0 %v2110
    %2153 = vmatpush.msra.mxu0 %v2109
    %2154 = vmatpush.msra.mxu0 %v2108
    %2155 = vmatpush.msra.mxu0 %v2107
    %2156 = vmatpush.msra.mxu0 %v2106
    %2157 = vmatpush.msra.mxu0 %v2105
    %2158 = vmatpush.msra.mxu0 %v2104
    %2159 = vmatpush.msra.mxu0 %v2103
    %2160 = vmatmul.f32.gmra.mxu0 %v1773
    %v2161 = vpop.f32.mrf.mxu0
    %v2162 = vadd.f32 0.0, %v2161
    %2163 = vmatmul.f32.gmra.mxu0 %v1776
    %v2164 = vpop.f32.mrf.mxu0
    %v2165 = vadd.f32 0.0, %v2164
    %2166 = vmatmul.f32.gmra.mxu0 %v1779
    %v2167 = vpop.f32.mrf.mxu0
    %v2168 = vadd.f32 0.0, %v2167
    %2169 = vmatmul.f32.gmra.mxu0 %v1782
    %v2170 = vpop.f32.mrf.mxu0
    %v2171 = vadd.f32 0.0, %v2170
    %2172 = vdwg.mxu0
    %v2173 = vadd.f32 %v2001, %v2162
    %v2174 = vadd.f32 %v2002, %v2165
    %v2175 = vadd.f32 %v2003, %v2168
    %v2176 = vadd.f32 %v2004, %v2171
    %2177 = vmatpush.msra.mxu0 0.0
    %2178 = vmatpush.msra.mxu0 0.0
    %2179 = vmatpush.msra.mxu0 0.0
    %2180 = vmatpush.msra.mxu0 0.0
    %2181 = vmatpush.msra.mxu0 0.0
    %2182 = vmatpush.msra.mxu0 0.0
    %2183 = vmatpush.msra.mxu0 0.0
    %2184 = vmatpush.msra.mxu0 0.0
    %2185 = vmatpush.msra.mxu0 %v2110
    %2186 = vmatpush.msra.mxu0 %v2109
    %2187 = vmatpush.msra.mxu0 %v2108
    %2188 = vmatpush.msra.mxu0 %v2107
    %2189 = vmatpush.msra.mxu0 %v2106
    %2190 = vmatpush.msra.mxu0 %v2105
    %2191 = vmatpush.msra.mxu0 %v2104
    %2192 = vmatpush.msra.mxu0 %v2103
    %2193 = vmatmul.f32.gmra.mxu0 %v1859
    %v2194 = vpop.f32.mrf.mxu0
    %v2195 = vadd.f32 0.0, %v2194
    %2196 = vmatmul.f32.gmra.mxu0 %v1862
    %v2197 = vpop.f32.mrf.mxu0
    %v2198 = vadd.f32 0.0, %v2197
    %2199 = vmatmul.f32.gmra.mxu0 %v1865
    %v2200 = vpop.f32.mrf.mxu0
    %v2201 = vadd.f32 0.0, %v2200
    %2202 = vmatmul.f32.gmra.mxu0 %v1868
    %v2203 = vpop.f32.mrf.mxu0
    %v2204 = vadd.f32 0.0, %v2203
    %2205 = vdwg.mxu0
    %v2206 = vadd.f32 %v2050, %v2195
    %v2207 = vadd.f32 %v2051, %v2198
    %v2208 = vadd.f32 %v2052, %v2201
    %v2209 = vadd.f32 %v2053, %v2204
    %v2210 = vld [vmem:[#allocation2 + $0xc0] sm:$0xff]
    %v2211 = vld [vmem:[#allocation2 + $0xc8] sm:$0xff]
    %v2212 = vld [vmem:[#allocation2 + $0xd0] sm:$0xff]
    %v2213 = vld [vmem:[#allocation2 + $0xd8] sm:$0xff]
    %v2215 = vsel %vm403, %v2210, 0
    %v2218 = vsel %vm403, %v2211, 0
    %v2221 = vsel %vm403, %v2212, 0
    %v2224 = vsel %vm403, %v2213, 0
    %2226 = vmatpush.msra.mxu0 0.0
    %2227 = vmatpush.msra.mxu0 0.0
    %2228 = vmatpush.msra.mxu0 0.0
    %2229 = vmatpush.msra.mxu0 0.0
    %2230 = vmatpush.msra.mxu0 0.0
    %2231 = vmatpush.msra.mxu0 0.0
    %2232 = vmatpush.msra.mxu0 0.0
    %2233 = vmatpush.msra.mxu0 0.0
    %2234 = vmatpush.msra.mxu0 %v2110
    %2235 = vmatpush.msra.mxu0 %v2109
    %2236 = vmatpush.msra.mxu0 %v2108
    %2237 = vmatpush.msra.mxu0 %v2107
    %2238 = vmatpush.msra.mxu0 %v2106
    %2239 = vmatpush.msra.mxu0 %v2105
    %2240 = vmatpush.msra.mxu0 %v2104
    %2241 = vmatpush.msra.mxu0 %v2103
    %2242 = vmatmul.f32.gmra.mxu0 %v2215
    %v2243 = vpop.f32.mrf.mxu0
    %v2244 = vadd.f32 0.0, %v2243
    %2245 = vmatmul.f32.gmra.mxu0 %v2218
    %v2246 = vpop.f32.mrf.mxu0
    %v2247 = vadd.f32 0.0, %v2246
    %2248 = vmatmul.f32.gmra.mxu0 %v2221
    %v2249 = vpop.f32.mrf.mxu0
    %v2250 = vadd.f32 0.0, %v2249
    %2251 = vmatmul.f32.gmra.mxu0 %v2224
    %v2252 = vpop.f32.mrf.mxu0
    %v2253 = vadd.f32 0.0, %v2252
    %2254 = vdwg.mxu0
    %v2255 = vadd.f32 %v2099, %v2244
    %v2256 = vadd.f32 %v2100, %v2247
    %v2257 = vadd.f32 %v2101, %v2250
    %v2258 = vadd.f32 %v2102, %v2253
    %v2259 = vld [vmem:[%s3 + $0x100] sm:$0xff]
    %v2260 = vld [vmem:[%s3 + $0x108] sm:$0xff]
    %v2261 = vld [vmem:[%s3 + $0x110] sm:$0xff]
    %v2262 = vld [vmem:[%s3 + $0x118] sm:$0xff]
    %v2263 = vld [vmem:[%s3 + $0x120] sm:$0xff]
    %v2264 = vld [vmem:[%s3 + $0x128] sm:$0xff]
    %v2265 = vld [vmem:[%s3 + $0x130] sm:$0xff]
    %v2266 = vld [vmem:[%s3 + $0x138] sm:$0xff]
    %2267 = vmatpush.msra.mxu0 0.0
    %2268 = vmatpush.msra.mxu0 0.0
    %2269 = vmatpush.msra.mxu0 0.0
    %2270 = vmatpush.msra.mxu0 0.0
    %2271 = vmatpush.msra.mxu0 0.0
    %2272 = vmatpush.msra.mxu0 0.0
    %2273 = vmatpush.msra.mxu0 0.0
    %2274 = vmatpush.msra.mxu0 0.0
    %2275 = vmatpush.msra.mxu0 %v2266
    %2276 = vmatpush.msra.mxu0 %v2265
    %2277 = vmatpush.msra.mxu0 %v2264
    %2278 = vmatpush.msra.mxu0 %v2263
    %2279 = vmatpush.msra.mxu0 %v2262
    %2280 = vmatpush.msra.mxu0 %v2261
    %2281 = vmatpush.msra.mxu0 %v2260
    %2282 = vmatpush.msra.mxu0 %v2259
    %2283 = vmatmul.f32.gmra.mxu0 %v1646
    %v2284 = vpop.f32.mrf.mxu0
    %v2285 = vadd.f32 0.0, %v2284
    %2286 = vmatmul.f32.gmra.mxu0 %v1649
    %v2287 = vpop.f32.mrf.mxu0
    %v2288 = vadd.f32 0.0, %v2287
    %2289 = vmatmul.f32.gmra.mxu0 %v1652
    %v2290 = vpop.f32.mrf.mxu0
    %v2291 = vadd.f32 0.0, %v2290
    %2292 = vmatmul.f32.gmra.mxu0 %v1655
    %v2293 = vpop.f32.mrf.mxu0
    %v2294 = vadd.f32 0.0, %v2293
    %2295 = vdwg.mxu0
    %v2296 = vadd.f32 %v2140, %v2285
    %v2297 = vadd.f32 %v2141, %v2288
    %v2298 = vadd.f32 %v2142, %v2291
    %v2299 = vadd.f32 %v2143, %v2294
    %2300 = vmatpush.msra.mxu0 0.0
    %2301 = vmatpush.msra.mxu0 0.0
    %2302 = vmatpush.msra.mxu0 0.0
    %2303 = vmatpush.msra.mxu0 0.0
    %2304 = vmatpush.msra.mxu0 0.0
    %2305 = vmatpush.msra.mxu0 0.0
    %2306 = vmatpush.msra.mxu0 0.0
    %2307 = vmatpush.msra.mxu0 0.0
    %2308 = vmatpush.msra.mxu0 %v2266
    %2309 = vmatpush.msra.mxu0 %v2265
    %2310 = vmatpush.msra.mxu0 %v2264
    %2311 = vmatpush.msra.mxu0 %v2263
    %2312 = vmatpush.msra.mxu0 %v2262
    %2313 = vmatpush.msra.mxu0 %v2261
    %2314 = vmatpush.msra.mxu0 %v2260
    %2315 = vmatpush.msra.mxu0 %v2259
    %2316 = vmatmul.f32.gmra.mxu0 %v1732
    %v2317 = vpop.f32.mrf.mxu0
    %v2318 = vadd.f32 0.0, %v2317
    %2319 = vmatmul.f32.gmra.mxu0 %v1735
    %v2320 = vpop.f32.mrf.mxu0
    %v2321 = vadd.f32 0.0, %v2320
    %2322 = vmatmul.f32.gmra.mxu0 %v1738
    %v2323 = vpop.f32.mrf.mxu0
    %v2324 = vadd.f32 0.0, %v2323
    %2325 = vmatmul.f32.gmra.mxu0 %v1741
    %v2326 = vpop.f32.mrf.mxu0
    %v2327 = vadd.f32 0.0, %v2326
    %2328 = vdwg.mxu0
    %v2329 = vadd.f32 %v2173, %v2318
    %v2330 = vadd.f32 %v2174, %v2321
    %v2331 = vadd.f32 %v2175, %v2324
    %v2332 = vadd.f32 %v2176, %v2327
    %2333 = vmatpush.msra.mxu0 0.0
    %2334 = vmatpush.msra.mxu0 0.0
    %2335 = vmatpush.msra.mxu0 0.0
    %2336 = vmatpush.msra.mxu0 0.0
    %2337 = vmatpush.msra.mxu0 0.0
    %2338 = vmatpush.msra.mxu0 0.0
    %2339 = vmatpush.msra.mxu0 0.0
    %2340 = vmatpush.msra.mxu0 0.0
    %2341 = vmatpush.msra.mxu0 %v2266
    %2342 = vmatpush.msra.mxu0 %v2265
    %2343 = vmatpush.msra.mxu0 %v2264
    %2344 = vmatpush.msra.mxu0 %v2263
    %2345 = vmatpush.msra.mxu0 %v2262
    %2346 = vmatpush.msra.mxu0 %v2261
    %2347 = vmatpush.msra.mxu0 %v2260
    %2348 = vmatpush.msra.mxu0 %v2259
    %2349 = vmatmul.f32.gmra.mxu0 %v1818
    %v2350 = vpop.f32.mrf.mxu0
    %v2351 = vadd.f32 0.0, %v2350
    %2352 = vmatmul.f32.gmra.mxu0 %v1821
    %v2353 = vpop.f32.mrf.mxu0
    %v2354 = vadd.f32 0.0, %v2353
    %2355 = vmatmul.f32.gmra.mxu0 %v1824
    %v2356 = vpop.f32.mrf.mxu0
    %v2357 = vadd.f32 0.0, %v2356
    %2358 = vmatmul.f32.gmra.mxu0 %v1827
    %v2359 = vpop.f32.mrf.mxu0
    %v2360 = vadd.f32 0.0, %v2359
    %2361 = vdwg.mxu0
    %v2362 = vadd.f32 %v2206, %v2351
    %v2363 = vadd.f32 %v2207, %v2354
    %v2364 = vadd.f32 %v2208, %v2357
    %v2365 = vadd.f32 %v2209, %v2360
    %v2366 = vld [vmem:[#allocation2 + $0xc8] sm:$0xff]
    %v2367 = vld [vmem:[#allocation2 + $0xd0] sm:$0xff]
    %v2368 = vld [vmem:[#allocation2 + $0xd8] sm:$0xff]
    %v2369 = vld [vmem:[#allocation2 + $0xe0] sm:$0xff]
    %v2371 = vsel %vm403, %v2366, 0
    %v2374 = vsel %vm403, %v2367, 0
    %v2377 = vsel %vm403, %v2368, 0
    %v2380 = vsel %vm403, %v2369, 0
    %2382 = vmatpush.msra.mxu0 0.0
    %2383 = vmatpush.msra.mxu0 0.0
    %2384 = vmatpush.msra.mxu0 0.0
    %2385 = vmatpush.msra.mxu0 0.0
    %2386 = vmatpush.msra.mxu0 0.0
    %2387 = vmatpush.msra.mxu0 0.0
    %2388 = vmatpush.msra.mxu0 0.0
    %2389 = vmatpush.msra.mxu0 0.0
    %2390 = vmatpush.msra.mxu0 %v2266
    %2391 = vmatpush.msra.mxu0 %v2265
    %2392 = vmatpush.msra.mxu0 %v2264
    %2393 = vmatpush.msra.mxu0 %v2263
    %2394 = vmatpush.msra.mxu0 %v2262
    %2395 = vmatpush.msra.mxu0 %v2261
    %2396 = vmatpush.msra.mxu0 %v2260
    %2397 = vmatpush.msra.mxu0 %v2259
    %2398 = vmatmul.f32.gmra.mxu0 %v2371
    %v2399 = vpop.f32.mrf.mxu0
    %v2400 = vadd.f32 0.0, %v2399
    %2401 = vmatmul.f32.gmra.mxu0 %v2374
    %v2402 = vpop.f32.mrf.mxu0
    %v2403 = vadd.f32 0.0, %v2402
    %2404 = vmatmul.f32.gmra.mxu0 %v2377
    %v2405 = vpop.f32.mrf.mxu0
    %v2406 = vadd.f32 0.0, %v2405
    %2407 = vmatmul.f32.gmra.mxu0 %v2380
    %v2408 = vpop.f32.mrf.mxu0
    %v2409 = vadd.f32 0.0, %v2408
    %2410 = vdwg.mxu0
    %v2411 = vadd.f32 %v2255, %v2400
    %v2412 = vadd.f32 %v2256, %v2403
    %v2413 = vadd.f32 %v2257, %v2406
    %v2414 = vadd.f32 %v2258, %v2409
    %v2415 = vld [vmem:[%s3 + $0x140] sm:$0xff]
    %v2416 = vld [vmem:[%s3 + $0x148] sm:$0xff]
    %v2417 = vld [vmem:[%s3 + $0x150] sm:$0xff]
    %v2418 = vld [vmem:[%s3 + $0x158] sm:$0xff]
    %v2419 = vld [vmem:[%s3 + $0x160] sm:$0xff]
    %v2420 = vld [vmem:[%s3 + $0x168] sm:$0xff]
    %v2421 = vld [vmem:[%s3 + $0x170] sm:$0xff]
    %v2422 = vld [vmem:[%s3 + $0x178] sm:$0xff]
    %2423 = vmatpush.msra.mxu0 0.0
    %2424 = vmatpush.msra.mxu0 0.0
    %2425 = vmatpush.msra.mxu0 0.0
    %2426 = vmatpush.msra.mxu0 0.0
    %2427 = vmatpush.msra.mxu0 0.0
    %2428 = vmatpush.msra.mxu0 0.0
    %2429 = vmatpush.msra.mxu0 0.0
    %2430 = vmatpush.msra.mxu0 0.0
    %2431 = vmatpush.msra.mxu0 %v2422
    %2432 = vmatpush.msra.mxu0 %v2421
    %2433 = vmatpush.msra.mxu0 %v2420
    %2434 = vmatpush.msra.mxu0 %v2419
    %2435 = vmatpush.msra.mxu0 %v2418
    %2436 = vmatpush.msra.mxu0 %v2417
    %2437 = vmatpush.msra.mxu0 %v2416
    %2438 = vmatpush.msra.mxu0 %v2415
    %2439 = vmatmul.f32.gmra.mxu0 %v1961
    %v2440 = vpop.f32.mrf.mxu0
    %v2441 = vadd.f32 0.0, %v2440
    %2442 = vmatmul.f32.gmra.mxu0 %v1964
    %v2443 = vpop.f32.mrf.mxu0
    %v2444 = vadd.f32 0.0, %v2443
    %2445 = vmatmul.f32.gmra.mxu0 %v1967
    %v2446 = vpop.f32.mrf.mxu0
    %v2447 = vadd.f32 0.0, %v2446
    %2448 = vmatmul.f32.gmra.mxu0 %v1970
    %v2449 = vpop.f32.mrf.mxu0
    %v2450 = vadd.f32 0.0, %v2449
    %2451 = vdwg.mxu0
    %v2452 = vadd.f32 %v2296, %v2441
    %v2453 = vadd.f32 %v2297, %v2444
    %v2454 = vadd.f32 %v2298, %v2447
    %v2455 = vadd.f32 %v2299, %v2450
    %2456 = vmatpush.msra.mxu0 0.0
    %2457 = vmatpush.msra.mxu0 0.0
    %2458 = vmatpush.msra.mxu0 0.0
    %2459 = vmatpush.msra.mxu0 0.0
    %2460 = vmatpush.msra.mxu0 0.0
    %2461 = vmatpush.msra.mxu0 0.0
    %2462 = vmatpush.msra.mxu0 0.0
    %2463 = vmatpush.msra.mxu0 0.0
    %2464 = vmatpush.msra.mxu0 %v2422
    %2465 = vmatpush.msra.mxu0 %v2421
    %2466 = vmatpush.msra.mxu0 %v2420
    %2467 = vmatpush.msra.mxu0 %v2419
    %2468 = vmatpush.msra.mxu0 %v2418
    %2469 = vmatpush.msra.mxu0 %v2417
    %2470 = vmatpush.msra.mxu0 %v2416
    %2471 = vmatpush.msra.mxu0 %v2415
    %2472 = vmatmul.f32.gmra.mxu0 %v2010
    %v2473 = vpop.f32.mrf.mxu0
    %v2474 = vadd.f32 0.0, %v2473
    %2475 = vmatmul.f32.gmra.mxu0 %v2013
    %v2476 = vpop.f32.mrf.mxu0
    %v2477 = vadd.f32 0.0, %v2476
    %2478 = vmatmul.f32.gmra.mxu0 %v2016
    %v2479 = vpop.f32.mrf.mxu0
    %v2480 = vadd.f32 0.0, %v2479
    %2481 = vmatmul.f32.gmra.mxu0 %v2019
    %v2482 = vpop.f32.mrf.mxu0
    %v2483 = vadd.f32 0.0, %v2482
    %2484 = vdwg.mxu0
    %v2485 = vadd.f32 %v2329, %v2474
    %v2486 = vadd.f32 %v2330, %v2477
    %v2487 = vadd.f32 %v2331, %v2480
    %v2488 = vadd.f32 %v2332, %v2483
    %2489 = vmatpush.msra.mxu0 0.0
    %2490 = vmatpush.msra.mxu0 0.0
    %2491 = vmatpush.msra.mxu0 0.0
    %2492 = vmatpush.msra.mxu0 0.0
    %2493 = vmatpush.msra.mxu0 0.0
    %2494 = vmatpush.msra.mxu0 0.0
    %2495 = vmatpush.msra.mxu0 0.0
    %2496 = vmatpush.msra.mxu0 0.0
    %2497 = vmatpush.msra.mxu0 %v2422
    %2498 = vmatpush.msra.mxu0 %v2421
    %2499 = vmatpush.msra.mxu0 %v2420
    %2500 = vmatpush.msra.mxu0 %v2419
    %2501 = vmatpush.msra.mxu0 %v2418
    %2502 = vmatpush.msra.mxu0 %v2417
    %2503 = vmatpush.msra.mxu0 %v2416
    %2504 = vmatpush.msra.mxu0 %v2415
    %2505 = vmatmul.f32.gmra.mxu0 %v2059
    %v2506 = vpop.f32.mrf.mxu0
    %v2507 = vadd.f32 0.0, %v2506
    %2508 = vmatmul.f32.gmra.mxu0 %v2062
    %v2509 = vpop.f32.mrf.mxu0
    %v2510 = vadd.f32 0.0, %v2509
    %2511 = vmatmul.f32.gmra.mxu0 %v2065
    %v2512 = vpop.f32.mrf.mxu0
    %v2513 = vadd.f32 0.0, %v2512
    %2514 = vmatmul.f32.gmra.mxu0 %v2068
    %v2515 = vpop.f32.mrf.mxu0
    %v2516 = vadd.f32 0.0, %v2515
    %2517 = vdwg.mxu0
    %v2518 = vadd.f32 %v2362, %v2507
    %v2519 = vadd.f32 %v2363, %v2510
    %v2520 = vadd.f32 %v2364, %v2513
    %v2521 = vadd.f32 %v2365, %v2516
    %v2522 = vld [vmem:[#allocation2 + $0xd0] sm:$0xff]
    %v2523 = vld [vmem:[#allocation2 + $0xd8] sm:$0xff]
    %v2524 = vld [vmem:[#allocation2 + $0xe0] sm:$0xff]
    %v2525 = vld [vmem:[#allocation2 + $0xe8] sm:$0xff]
    %v2527 = vsel %vm403, %v2522, 0
    %v2530 = vsel %vm403, %v2523, 0
    %v2533 = vsel %vm403, %v2524, 0
    %v2536 = vsel %vm403, %v2525, 0
    %2538 = vmatpush.msra.mxu0 0.0
    %2539 = vmatpush.msra.mxu0 0.0
    %2540 = vmatpush.msra.mxu0 0.0
    %2541 = vmatpush.msra.mxu0 0.0
    %2542 = vmatpush.msra.mxu0 0.0
    %2543 = vmatpush.msra.mxu0 0.0
    %2544 = vmatpush.msra.mxu0 0.0
    %2545 = vmatpush.msra.mxu0 0.0
    %2546 = vmatpush.msra.mxu0 %v2422
    %2547 = vmatpush.msra.mxu0 %v2421
    %2548 = vmatpush.msra.mxu0 %v2420
    %2549 = vmatpush.msra.mxu0 %v2419
    %2550 = vmatpush.msra.mxu0 %v2418
    %2551 = vmatpush.msra.mxu0 %v2417
    %2552 = vmatpush.msra.mxu0 %v2416
    %2553 = vmatpush.msra.mxu0 %v2415
    %2554 = vmatmul.f32.gmra.mxu0 %v2527
    %v2555 = vpop.f32.mrf.mxu0
    %v2556 = vadd.f32 0.0, %v2555
    %2557 = vmatmul.f32.gmra.mxu0 %v2530
    %v2558 = vpop.f32.mrf.mxu0
    %v2559 = vadd.f32 0.0, %v2558
    %2560 = vmatmul.f32.gmra.mxu0 %v2533
    %v2561 = vpop.f32.mrf.mxu0
    %v2562 = vadd.f32 0.0, %v2561
    %2563 = vmatmul.f32.gmra.mxu0 %v2536
    %v2564 = vpop.f32.mrf.mxu0
    %v2565 = vadd.f32 0.0, %v2564
    %2566 = vdwg.mxu0
    %v2567 = vadd.f32 %v2411, %v2556
    %v2568 = vadd.f32 %v2412, %v2559
    %v2569 = vadd.f32 %v2413, %v2562
    %v2570 = vadd.f32 %v2414, %v2565
    %v2571 = vld [vmem:[%s3 + $0x180] sm:$0xff]
    %v2572 = vld [vmem:[%s3 + $0x188] sm:$0xff]
    %v2573 = vld [vmem:[%s3 + $0x190] sm:$0xff]
    %v2574 = vld [vmem:[%s3 + $0x198] sm:$0xff]
    %v2575 = vld [vmem:[%s3 + $0x1a0] sm:$0xff]
    %v2576 = vld [vmem:[%s3 + $0x1a8] sm:$0xff]
    %v2577 = vld [vmem:[%s3 + $0x1b0] sm:$0xff]
    %v2578 = vld [vmem:[%s3 + $0x1b8] sm:$0xff]
    %2579 = vmatpush.msra.mxu0 0.0
    %2580 = vmatpush.msra.mxu0 0.0
    %2581 = vmatpush.msra.mxu0 0.0
    %2582 = vmatpush.msra.mxu0 0.0
    %2583 = vmatpush.msra.mxu0 0.0
    %2584 = vmatpush.msra.mxu0 0.0
    %2585 = vmatpush.msra.mxu0 0.0
    %2586 = vmatpush.msra.mxu0 0.0
    %2587 = vmatpush.msra.mxu0 %v2578
    %2588 = vmatpush.msra.mxu0 %v2577
    %2589 = vmatpush.msra.mxu0 %v2576
    %2590 = vmatpush.msra.mxu0 %v2575
    %2591 = vmatpush.msra.mxu0 %v2574
    %2592 = vmatpush.msra.mxu0 %v2573
    %2593 = vmatpush.msra.mxu0 %v2572
    %2594 = vmatpush.msra.mxu0 %v2571
    %2595 = vmatmul.f32.gmra.mxu0 %v1773
    %v2596 = vpop.f32.mrf.mxu0
    %v2597 = vadd.f32 0.0, %v2596
    %2598 = vmatmul.f32.gmra.mxu0 %v1776
    %v2599 = vpop.f32.mrf.mxu0
    %v2600 = vadd.f32 0.0, %v2599
    %2601 = vmatmul.f32.gmra.mxu0 %v1779
    %v2602 = vpop.f32.mrf.mxu0
    %v2603 = vadd.f32 0.0, %v2602
    %2604 = vmatmul.f32.gmra.mxu0 %v1782
    %v2605 = vpop.f32.mrf.mxu0
    %v2606 = vadd.f32 0.0, %v2605
    %2607 = vdwg.mxu0
    %v2608 = vadd.f32 %v2452, %v2597
    %v2609 = vadd.f32 %v2453, %v2600
    %v2610 = vadd.f32 %v2454, %v2603
    %v2611 = vadd.f32 %v2455, %v2606
    %2612 = vmatpush.msra.mxu0 0.0
    %2613 = vmatpush.msra.mxu0 0.0
    %2614 = vmatpush.msra.mxu0 0.0
    %2615 = vmatpush.msra.mxu0 0.0
    %2616 = vmatpush.msra.mxu0 0.0
    %2617 = vmatpush.msra.mxu0 0.0
    %2618 = vmatpush.msra.mxu0 0.0
    %2619 = vmatpush.msra.mxu0 0.0
    %2620 = vmatpush.msra.mxu0 %v2578
    %2621 = vmatpush.msra.mxu0 %v2577
    %2622 = vmatpush.msra.mxu0 %v2576
    %2623 = vmatpush.msra.mxu0 %v2575
    %2624 = vmatpush.msra.mxu0 %v2574
    %2625 = vmatpush.msra.mxu0 %v2573
    %2626 = vmatpush.msra.mxu0 %v2572
    %2627 = vmatpush.msra.mxu0 %v2571
    %2628 = vmatmul.f32.gmra.mxu0 %v1859
    %v2629 = vpop.f32.mrf.mxu0
    %v2630 = vadd.f32 0.0, %v2629
    %2631 = vmatmul.f32.gmra.mxu0 %v1862
    %v2632 = vpop.f32.mrf.mxu0
    %v2633 = vadd.f32 0.0, %v2632
    %2634 = vmatmul.f32.gmra.mxu0 %v1865
    %v2635 = vpop.f32.mrf.mxu0
    %v2636 = vadd.f32 0.0, %v2635
    %2637 = vmatmul.f32.gmra.mxu0 %v1868
    %v2638 = vpop.f32.mrf.mxu0
    %v2639 = vadd.f32 0.0, %v2638
    %2640 = vdwg.mxu0
    %v2641 = vadd.f32 %v2485, %v2630
    %v2642 = vadd.f32 %v2486, %v2633
    %v2643 = vadd.f32 %v2487, %v2636
    %v2644 = vadd.f32 %v2488, %v2639
    %2645 = vmatpush.msra.mxu0 0.0
    %2646 = vmatpush.msra.mxu0 0.0
    %2647 = vmatpush.msra.mxu0 0.0
    %2648 = vmatpush.msra.mxu0 0.0
    %2649 = vmatpush.msra.mxu0 0.0
    %2650 = vmatpush.msra.mxu0 0.0
    %2651 = vmatpush.msra.mxu0 0.0
    %2652 = vmatpush.msra.mxu0 0.0
    %2653 = vmatpush.msra.mxu0 %v2578
    %2654 = vmatpush.msra.mxu0 %v2577
    %2655 = vmatpush.msra.mxu0 %v2576
    %2656 = vmatpush.msra.mxu0 %v2575
    %2657 = vmatpush.msra.mxu0 %v2574
    %2658 = vmatpush.msra.mxu0 %v2573
    %2659 = vmatpush.msra.mxu0 %v2572
    %2660 = vmatpush.msra.mxu0 %v2571
    %2661 = vmatmul.f32.gmra.mxu0 %v2215
    %v2662 = vpop.f32.mrf.mxu0
    %v2663 = vadd.f32 0.0, %v2662
    %2664 = vmatmul.f32.gmra.mxu0 %v2218
    %v2665 = vpop.f32.mrf.mxu0
    %v2666 = vadd.f32 0.0, %v2665
    %2667 = vmatmul.f32.gmra.mxu0 %v2221
    %v2668 = vpop.f32.mrf.mxu0
    %v2669 = vadd.f32 0.0, %v2668
    %2670 = vmatmul.f32.gmra.mxu0 %v2224
    %v2671 = vpop.f32.mrf.mxu0
    %v2672 = vadd.f32 0.0, %v2671
    %2673 = vdwg.mxu0
    %v2674 = vadd.f32 %v2518, %v2663
    %v2675 = vadd.f32 %v2519, %v2666
    %v2676 = vadd.f32 %v2520, %v2669
    %v2677 = vadd.f32 %v2521, %v2672
    %v2678 = vld [vmem:[#allocation2 + $0xf0] sm:$0xff]
    %v2679 = vld [vmem:[#allocation2 + $0xf8] sm:$0xff]
    %v2680 = vld [vmem:[#allocation2 + $0x100] sm:$0xff]
    %v2681 = vld [vmem:[#allocation2 + $0x108] sm:$0xff]
    %v2683 = vsel %vm403, %v2678, 0
    %v2686 = vsel %vm403, %v2679, 0
    %v2689 = vsel %vm403, %v2680, 0
    %v2692 = vsel %vm403, %v2681, 0
    %2694 = vmatpush.msra.mxu0 0.0
    %2695 = vmatpush.msra.mxu0 0.0
    %2696 = vmatpush.msra.mxu0 0.0
    %2697 = vmatpush.msra.mxu0 0.0
    %2698 = vmatpush.msra.mxu0 0.0
    %2699 = vmatpush.msra.mxu0 0.0
    %2700 = vmatpush.msra.mxu0 0.0
    %2701 = vmatpush.msra.mxu0 0.0
    %2702 = vmatpush.msra.mxu0 %v2578
    %2703 = vmatpush.msra.mxu0 %v2577
    %2704 = vmatpush.msra.mxu0 %v2576
    %2705 = vmatpush.msra.mxu0 %v2575
    %2706 = vmatpush.msra.mxu0 %v2574
    %2707 = vmatpush.msra.mxu0 %v2573
    %2708 = vmatpush.msra.mxu0 %v2572
    %2709 = vmatpush.msra.mxu0 %v2571
    %2710 = vmatmul.f32.gmra.mxu0 %v2683
    %v2711 = vpop.f32.mrf.mxu0
    %v2712 = vadd.f32 0.0, %v2711
    %2713 = vmatmul.f32.gmra.mxu0 %v2686
    %v2714 = vpop.f32.mrf.mxu0
    %v2715 = vadd.f32 0.0, %v2714
    %2716 = vmatmul.f32.gmra.mxu0 %v2689
    %v2717 = vpop.f32.mrf.mxu0
    %v2718 = vadd.f32 0.0, %v2717
    %2719 = vmatmul.f32.gmra.mxu0 %v2692
    %v2720 = vpop.f32.mrf.mxu0
    %v2721 = vadd.f32 0.0, %v2720
    %2722 = vdwg.mxu0
    %v2723 = vadd.f32 %v2567, %v2712
    %v2724 = vadd.f32 %v2568, %v2715
    %v2725 = vadd.f32 %v2569, %v2718
    %v2726 = vadd.f32 %v2570, %v2721
    %v2727 = vld [vmem:[%s3 + $0x1c0] sm:$0xff]
    %v2728 = vld [vmem:[%s3 + $0x1c8] sm:$0xff]
    %v2729 = vld [vmem:[%s3 + $0x1d0] sm:$0xff]
    %v2730 = vld [vmem:[%s3 + $0x1d8] sm:$0xff]
    %v2731 = vld [vmem:[%s3 + $0x1e0] sm:$0xff]
    %v2732 = vld [vmem:[%s3 + $0x1e8] sm:$0xff]
    %v2733 = vld [vmem:[%s3 + $0x1f0] sm:$0xff]
    %v2734 = vld [vmem:[%s3 + $0x1f8] sm:$0xff]
    %2735 = vmatpush.msra.mxu0 0.0
    %2736 = vmatpush.msra.mxu0 0.0
    %2737 = vmatpush.msra.mxu0 0.0
    %2738 = vmatpush.msra.mxu0 0.0
    %2739 = vmatpush.msra.mxu0 0.0
    %2740 = vmatpush.msra.mxu0 0.0
    %2741 = vmatpush.msra.mxu0 0.0
    %2742 = vmatpush.msra.mxu0 0.0
    %2743 = vmatpush.msra.mxu0 %v2734
    %2744 = vmatpush.msra.mxu0 %v2733
    %2745 = vmatpush.msra.mxu0 %v2732
    %2746 = vmatpush.msra.mxu0 %v2731
    %2747 = vmatpush.msra.mxu0 %v2730
    %2748 = vmatpush.msra.mxu0 %v2729
    %2749 = vmatpush.msra.mxu0 %v2728
    %2750 = vmatpush.msra.mxu0 %v2727
    %2751 = vmatmul.f32.gmra.mxu0 %v1732
    %v2752 = vpop.f32.mrf.mxu0
    %v2753 = vadd.f32 0.0, %v2752
    %2754 = vmatmul.f32.gmra.mxu0 %v1735
    %v2755 = vpop.f32.mrf.mxu0
    %v2756 = vadd.f32 0.0, %v2755
    %2757 = vmatmul.f32.gmra.mxu0 %v1738
    %v2758 = vpop.f32.mrf.mxu0
    %v2759 = vadd.f32 0.0, %v2758
    %2760 = vmatmul.f32.gmra.mxu0 %v1741
    %v2761 = vpop.f32.mrf.mxu0
    %v2762 = vadd.f32 0.0, %v2761
    %2763 = vdwg.mxu0
    %v2764 = vadd.f32 %v2608, %v2753
    %v2765 = vadd.f32 %v2609, %v2756
    %v2766 = vadd.f32 %v2610, %v2759
    %v2767 = vadd.f32 %v2611, %v2762
    %2768 = vmatpush.msra.mxu0 0.0
    %2769 = vmatpush.msra.mxu0 0.0
    %2770 = vmatpush.msra.mxu0 0.0
    %2771 = vmatpush.msra.mxu0 0.0
    %2772 = vmatpush.msra.mxu0 0.0
    %2773 = vmatpush.msra.mxu0 0.0
    %2774 = vmatpush.msra.mxu0 0.0
    %2775 = vmatpush.msra.mxu0 0.0
    %2776 = vmatpush.msra.mxu0 %v2734
    %2777 = vmatpush.msra.mxu0 %v2733
    %2778 = vmatpush.msra.mxu0 %v2732
    %2779 = vmatpush.msra.mxu0 %v2731
    %2780 = vmatpush.msra.mxu0 %v2730
    %2781 = vmatpush.msra.mxu0 %v2729
    %2782 = vmatpush.msra.mxu0 %v2728
    %2783 = vmatpush.msra.mxu0 %v2727
    %2784 = vmatmul.f32.gmra.mxu0 %v1818
    %v2785 = vpop.f32.mrf.mxu0
    %v2786 = vadd.f32 0.0, %v2785
    %2787 = vmatmul.f32.gmra.mxu0 %v1821
    %v2788 = vpop.f32.mrf.mxu0
    %v2789 = vadd.f32 0.0, %v2788
    %2790 = vmatmul.f32.gmra.mxu0 %v1824
    %v2791 = vpop.f32.mrf.mxu0
    %v2792 = vadd.f32 0.0, %v2791
    %2793 = vmatmul.f32.gmra.mxu0 %v1827
    %v2794 = vpop.f32.mrf.mxu0
    %v2795 = vadd.f32 0.0, %v2794
    %2796 = vdwg.mxu0
    %v2797 = vadd.f32 %v2641, %v2786
    %v2798 = vadd.f32 %v2642, %v2789
    %v2799 = vadd.f32 %v2643, %v2792
    %v2800 = vadd.f32 %v2644, %v2795
    %2801 = vmatpush.msra.mxu0 0.0
    %2802 = vmatpush.msra.mxu0 0.0
    %2803 = vmatpush.msra.mxu0 0.0
    %2804 = vmatpush.msra.mxu0 0.0
    %2805 = vmatpush.msra.mxu0 0.0
    %2806 = vmatpush.msra.mxu0 0.0
    %2807 = vmatpush.msra.mxu0 0.0
    %2808 = vmatpush.msra.mxu0 0.0
    %2809 = vmatpush.msra.mxu0 %v2734
    %2810 = vmatpush.msra.mxu0 %v2733
    %2811 = vmatpush.msra.mxu0 %v2732
    %2812 = vmatpush.msra.mxu0 %v2731
    %2813 = vmatpush.msra.mxu0 %v2730
    %2814 = vmatpush.msra.mxu0 %v2729
    %2815 = vmatpush.msra.mxu0 %v2728
    %2816 = vmatpush.msra.mxu0 %v2727
    %2817 = vmatmul.f32.gmra.mxu0 %v2371
    %v2818 = vpop.f32.mrf.mxu0
    %v2819 = vadd.f32 0.0, %v2818
    %2820 = vmatmul.f32.gmra.mxu0 %v2374
    %v2821 = vpop.f32.mrf.mxu0
    %v2822 = vadd.f32 0.0, %v2821
    %2823 = vmatmul.f32.gmra.mxu0 %v2377
    %v2824 = vpop.f32.mrf.mxu0
    %v2825 = vadd.f32 0.0, %v2824
    %2826 = vmatmul.f32.gmra.mxu0 %v2380
    %v2827 = vpop.f32.mrf.mxu0
    %v2828 = vadd.f32 0.0, %v2827
    %2829 = vdwg.mxu0
    %v2830 = vadd.f32 %v2674, %v2819
    %v2831 = vadd.f32 %v2675, %v2822
    %v2832 = vadd.f32 %v2676, %v2825
    %v2833 = vadd.f32 %v2677, %v2828
    %v2834 = vld [vmem:[#allocation2 + $0xf8] sm:$0xff]
    %v2835 = vld [vmem:[#allocation2 + $0x100] sm:$0xff]
    %v2836 = vld [vmem:[#allocation2 + $0x108] sm:$0xff]
    %v2837 = vld [vmem:[#allocation2 + $0x110] sm:$0xff]
    %v2839 = vsel %vm403, %v2834, 0
    %v2842 = vsel %vm403, %v2835, 0
    %v2845 = vsel %vm403, %v2836, 0
    %v2848 = vsel %vm403, %v2837, 0
    %2850 = vmatpush.msra.mxu0 0.0
    %2851 = vmatpush.msra.mxu0 0.0
    %2852 = vmatpush.msra.mxu0 0.0
    %2853 = vmatpush.msra.mxu0 0.0
    %2854 = vmatpush.msra.mxu0 0.0
    %2855 = vmatpush.msra.mxu0 0.0
    %2856 = vmatpush.msra.mxu0 0.0
    %2857 = vmatpush.msra.mxu0 0.0
    %2858 = vmatpush.msra.mxu0 %v2734
    %2859 = vmatpush.msra.mxu0 %v2733
    %2860 = vmatpush.msra.mxu0 %v2732
    %2861 = vmatpush.msra.mxu0 %v2731
    %2862 = vmatpush.msra.mxu0 %v2730
    %2863 = vmatpush.msra.mxu0 %v2729
    %2864 = vmatpush.msra.mxu0 %v2728
    %2865 = vmatpush.msra.mxu0 %v2727
    %2866 = vmatmul.f32.gmra.mxu0 %v2839
    %v2867 = vpop.f32.mrf.mxu0
    %v2868 = vadd.f32 0.0, %v2867
    %2869 = vmatmul.f32.gmra.mxu0 %v2842
    %v2870 = vpop.f32.mrf.mxu0
    %v2871 = vadd.f32 0.0, %v2870
    %2872 = vmatmul.f32.gmra.mxu0 %v2845
    %v2873 = vpop.f32.mrf.mxu0
    %v2874 = vadd.f32 0.0, %v2873
    %2875 = vmatmul.f32.gmra.mxu0 %v2848
    %v2876 = vpop.f32.mrf.mxu0
    %v2877 = vadd.f32 0.0, %v2876
    %2878 = vdwg.mxu0
    %v2879 = vadd.f32 %v2723, %v2868
    %v2880 = vadd.f32 %v2724, %v2871
    %v2881 = vadd.f32 %v2725, %v2874
    %v2882 = vadd.f32 %v2726, %v2877
    %v2883 = vld [vmem:[%s3 + $0x200] sm:$0xff]
    %v2884 = vld [vmem:[%s3 + $0x208] sm:$0xff]
    %v2885 = vld [vmem:[%s3 + $0x210] sm:$0xff]
    %v2886 = vld [vmem:[%s3 + $0x218] sm:$0xff]
    %v2887 = vld [vmem:[%s3 + $0x220] sm:$0xff]
    %v2888 = vld [vmem:[%s3 + $0x228] sm:$0xff]
    %v2889 = vld [vmem:[%s3 + $0x230] sm:$0xff]
    %v2890 = vld [vmem:[%s3 + $0x238] sm:$0xff]
    %2891 = vmatpush.msra.mxu0 0.0
    %2892 = vmatpush.msra.mxu0 0.0
    %2893 = vmatpush.msra.mxu0 0.0
    %2894 = vmatpush.msra.mxu0 0.0
    %2895 = vmatpush.msra.mxu0 0.0
    %2896 = vmatpush.msra.mxu0 0.0
    %2897 = vmatpush.msra.mxu0 0.0
    %2898 = vmatpush.msra.mxu0 0.0
    %2899 = vmatpush.msra.mxu0 %v2890
    %2900 = vmatpush.msra.mxu0 %v2889
    %2901 = vmatpush.msra.mxu0 %v2888
    %2902 = vmatpush.msra.mxu0 %v2887
    %2903 = vmatpush.msra.mxu0 %v2886
    %2904 = vmatpush.msra.mxu0 %v2885
    %2905 = vmatpush.msra.mxu0 %v2884
    %2906 = vmatpush.msra.mxu0 %v2883
    %2907 = vmatmul.f32.gmra.mxu0 %v2010
    %v2908 = vpop.f32.mrf.mxu0
    %v2909 = vadd.f32 0.0, %v2908
    %2910 = vmatmul.f32.gmra.mxu0 %v2013
    %v2911 = vpop.f32.mrf.mxu0
    %v2912 = vadd.f32 0.0, %v2911
    %2913 = vmatmul.f32.gmra.mxu0 %v2016
    %v2914 = vpop.f32.mrf.mxu0
    %v2915 = vadd.f32 0.0, %v2914
    %2916 = vmatmul.f32.gmra.mxu0 %v2019
    %v2917 = vpop.f32.mrf.mxu0
    %v2918 = vadd.f32 0.0, %v2917
    %2919 = vdwg.mxu0
    %v2920 = vadd.f32 %v2764, %v2909
    %v2921 = vadd.f32 %v2765, %v2912
    %v2922 = vadd.f32 %v2766, %v2915
    %v2923 = vadd.f32 %v2767, %v2918
    %2924 = vmatpush.msra.mxu0 0.0
    %2925 = vmatpush.msra.mxu0 0.0
    %2926 = vmatpush.msra.mxu0 0.0
    %2927 = vmatpush.msra.mxu0 0.0
    %2928 = vmatpush.msra.mxu0 0.0
    %2929 = vmatpush.msra.mxu0 0.0
    %2930 = vmatpush.msra.mxu0 0.0
    %2931 = vmatpush.msra.mxu0 0.0
    %2932 = vmatpush.msra.mxu0 %v2890
    %2933 = vmatpush.msra.mxu0 %v2889
    %2934 = vmatpush.msra.mxu0 %v2888
    %2935 = vmatpush.msra.mxu0 %v2887
    %2936 = vmatpush.msra.mxu0 %v2886
    %2937 = vmatpush.msra.mxu0 %v2885
    %2938 = vmatpush.msra.mxu0 %v2884
    %2939 = vmatpush.msra.mxu0 %v2883
    %2940 = vmatmul.f32.gmra.mxu0 %v2059
    %v2941 = vpop.f32.mrf.mxu0
    %v2942 = vadd.f32 0.0, %v2941
    %2943 = vmatmul.f32.gmra.mxu0 %v2062
    %v2944 = vpop.f32.mrf.mxu0
    %v2945 = vadd.f32 0.0, %v2944
    %2946 = vmatmul.f32.gmra.mxu0 %v2065
    %v2947 = vpop.f32.mrf.mxu0
    %v2948 = vadd.f32 0.0, %v2947
    %2949 = vmatmul.f32.gmra.mxu0 %v2068
    %v2950 = vpop.f32.mrf.mxu0
    %v2951 = vadd.f32 0.0, %v2950
    %2952 = vdwg.mxu0
    %v2953 = vadd.f32 %v2797, %v2942
    %v2954 = vadd.f32 %v2798, %v2945
    %v2955 = vadd.f32 %v2799, %v2948
    %v2956 = vadd.f32 %v2800, %v2951
    %2957 = vmatpush.msra.mxu0 0.0
    %2958 = vmatpush.msra.mxu0 0.0
    %2959 = vmatpush.msra.mxu0 0.0
    %2960 = vmatpush.msra.mxu0 0.0
    %2961 = vmatpush.msra.mxu0 0.0
    %2962 = vmatpush.msra.mxu0 0.0
    %2963 = vmatpush.msra.mxu0 0.0
    %2964 = vmatpush.msra.mxu0 0.0
    %2965 = vmatpush.msra.mxu0 %v2890
    %2966 = vmatpush.msra.mxu0 %v2889
    %2967 = vmatpush.msra.mxu0 %v2888
    %2968 = vmatpush.msra.mxu0 %v2887
    %2969 = vmatpush.msra.mxu0 %v2886
    %2970 = vmatpush.msra.mxu0 %v2885
    %2971 = vmatpush.msra.mxu0 %v2884
    %2972 = vmatpush.msra.mxu0 %v2883
    %2973 = vmatmul.f32.gmra.mxu0 %v2527
    %v2974 = vpop.f32.mrf.mxu0
    %v2975 = vadd.f32 0.0, %v2974
    %2976 = vmatmul.f32.gmra.mxu0 %v2530
    %v2977 = vpop.f32.mrf.mxu0
    %v2978 = vadd.f32 0.0, %v2977
    %2979 = vmatmul.f32.gmra.mxu0 %v2533
    %v2980 = vpop.f32.mrf.mxu0
    %v2981 = vadd.f32 0.0, %v2980
    %2982 = vmatmul.f32.gmra.mxu0 %v2536
    %v2983 = vpop.f32.mrf.mxu0
    %v2984 = vadd.f32 0.0, %v2983
    %2985 = vdwg.mxu0
    %v2986 = vadd.f32 %v2830, %v2975
    %v2987 = vadd.f32 %v2831, %v2978
    %v2988 = vadd.f32 %v2832, %v2981
    %v2989 = vadd.f32 %v2833, %v2984
    %v2990 = vld [vmem:[#allocation2 + $0x100] sm:$0xff]
    %v2991 = vld [vmem:[#allocation2 + $0x108] sm:$0xff]
    %v2992 = vld [vmem:[#allocation2 + $0x110] sm:$0xff]
    %v2993 = vld [vmem:[#allocation2 + $0x118] sm:$0xff]
    %v2995 = vsel %vm403, %v2990, 0
    %v2998 = vsel %vm403, %v2991, 0
    %v3001 = vsel %vm403, %v2992, 0
    %v3004 = vsel %vm403, %v2993, 0
    %3006 = vmatpush.msra.mxu0 0.0
    %3007 = vmatpush.msra.mxu0 0.0
    %3008 = vmatpush.msra.mxu0 0.0
    %3009 = vmatpush.msra.mxu0 0.0
    %3010 = vmatpush.msra.mxu0 0.0
    %3011 = vmatpush.msra.mxu0 0.0
    %3012 = vmatpush.msra.mxu0 0.0
    %3013 = vmatpush.msra.mxu0 0.0
    %3014 = vmatpush.msra.mxu0 %v2890
    %3015 = vmatpush.msra.mxu0 %v2889
    %3016 = vmatpush.msra.mxu0 %v2888
    %3017 = vmatpush.msra.mxu0 %v2887
    %3018 = vmatpush.msra.mxu0 %v2886
    %3019 = vmatpush.msra.mxu0 %v2885
    %3020 = vmatpush.msra.mxu0 %v2884
    %3021 = vmatpush.msra.mxu0 %v2883
    %3022 = vmatmul.f32.gmra.mxu0 %v2995
    %v3023 = vpop.f32.mrf.mxu0
    %v3024 = vadd.f32 0.0, %v3023
    %3025 = vmatmul.f32.gmra.mxu0 %v2998
    %v3026 = vpop.f32.mrf.mxu0
    %v3027 = vadd.f32 0.0, %v3026
    %3028 = vmatmul.f32.gmra.mxu0 %v3001
    %v3029 = vpop.f32.mrf.mxu0
    %v3030 = vadd.f32 0.0, %v3029
    %3031 = vmatmul.f32.gmra.mxu0 %v3004
    %v3032 = vpop.f32.mrf.mxu0
    %v3033 = vadd.f32 0.0, %v3032
    %3034 = vdwg.mxu0
    %v3035 = vadd.f32 %v2879, %v3024
    %v3036 = vadd.f32 %v2880, %v3027
    %v3037 = vadd.f32 %v2881, %v3030
    %v3038 = vadd.f32 %v2882, %v3033
    %v3039 = vld [vmem:[%s4] sm:$0x1]
    %v3040 = vmax.f32 %v2920, %v2953
    %v3041 = vmax.f32 %v2921, %v2954
    %v3042 = vmax.f32 %v2922, %v2955
    %v3043 = vmax.f32 %v2923, %v2956
    %v3044 = vmax.f32 %v3040, %v3041
    %v3046 = vperm.slane %v3039, 0
    %v3048 = vadd.f32 %v3044, %v3046
    %v3049 = vmax.f32 %v3048, 0.0
    %v3050 = vld [vmem:[%s5] sm:$0xff]
    %v3051 = vld [vmem:[%s5 + $0x8] sm:$0xff]
    %v3052 = vld [vmem:[%s5 + $0x10] sm:$0xff]
    %v3053 = vld [vmem:[%s5 + $0x18] sm:$0xff]
    %v3054 = vmax.f32 %v3042, %v3043
    %v3055 = vadd.f32 %v3054, %v3046
    %v3056 = vmax.f32 %v3055, 0.0
    %v3057 = vld [vmem:[%s5 + $0x20] sm:$0xff]
    %v3058 = vld [vmem:[%s5 + $0x28] sm:$0xff]
    %v3059 = vld [vmem:[%s5 + $0x30] sm:$0xff]
    %v3060 = vld [vmem:[%s5 + $0x38] sm:$0xff]
    %vm3061 = vcmask 261120
    %v3063 = vsel %vm3061, %v3056, 0
    %3065 = vmatpush.msra.mxu0 0.0
    %3066 = vmatpush.msra.mxu0 0.0
    %3067 = vmatpush.msra.mxu0 0.0
    %3068 = vmatpush.msra.mxu0 0.0
    %3069 = vmatpush.msra.mxu0 0.0
    %3070 = vmatpush.msra.mxu0 0.0
    %3071 = vmatpush.msra.mxu0 0.0
    %3072 = vmatpush.msra.mxu0 0.0
    %3073 = vmatpush.msra.mxu0 0.0
    %3074 = vmatpush.msra.mxu0 0.0
    %3075 = vmatpush.msra.mxu0 0.0
    %3076 = vmatpush.msra.mxu0 0.0
    %3077 = vmatpush.msra.mxu0 %v3060
    %3078 = vmatpush.msra.mxu0 %v3059
    %3079 = vmatpush.msra.mxu0 %v3058
    %3080 = vmatpush.msra.mxu0 %v3057
    %3081 = vmatmul.f32.gmra.mxu0 %v3063
    %v3082 = vpop.f32.mrf.mxu0
    %v3083 = vadd.f32 0.0, %v3082
    %3084 = vdwg.mxu0
    %v3086 = vsel %vm3061, %v3049, 0
    %3088 = vmatpush.msra.mxu0 0.0
    %3089 = vmatpush.msra.mxu0 0.0
    %3090 = vmatpush.msra.mxu0 0.0
    %3091 = vmatpush.msra.mxu0 0.0
    %3092 = vmatpush.msra.mxu0 0.0
    %3093 = vmatpush.msra.mxu0 0.0
    %3094 = vmatpush.msra.mxu0 0.0
    %3095 = vmatpush.msra.mxu0 0.0
    %3096 = vmatpush.msra.mxu0 0.0
    %3097 = vmatpush.msra.mxu0 0.0
    %3098 = vmatpush.msra.mxu0 0.0
    %3099 = vmatpush.msra.mxu0 0.0
    %3100 = vmatpush.msra.mxu0 %v3053
    %3101 = vmatpush.msra.mxu0 %v3052
    %3102 = vmatpush.msra.mxu0 %v3051
    %3103 = vmatpush.msra.mxu0 %v3050
    %3104 = vmatmul.f32.gmra.mxu0 %v3086
    %v3105 = vpop.f32.mrf.mxu0
    %v3106 = vadd.f32 %v3083, %v3105
    %3107 = vdwg.mxu0
    %v3108 = vmax.f32 %v2986, %v3035
    %v3109 = vmax.f32 %v2987, %v3036
    %v3110 = vmax.f32 %v2988, %v3037
    %v3111 = vmax.f32 %v2989, %v3038
    %v3112 = vmax.f32 %v3108, %v3109
    %v3113 = vadd.f32 %v3112, %v3046
    %v3114 = vmax.f32 %v3113, 0.0
    %v3115 = vld [vmem:[%s5 + $0x40] sm:$0xff]
    %v3116 = vld [vmem:[%s5 + $0x48] sm:$0xff]
    %v3117 = vld [vmem:[%s5 + $0x50] sm:$0xff]
    %v3118 = vld [vmem:[%s5 + $0x58] sm:$0xff]
    %v3120 = vsel %vm3061, %v3114, 0
    %3122 = vmatpush.msra.mxu0 0.0
    %3123 = vmatpush.msra.mxu0 0.0
    %3124 = vmatpush.msra.mxu0 0.0
    %3125 = vmatpush.msra.mxu0 0.0
    %3126 = vmatpush.msra.mxu0 0.0
    %3127 = vmatpush.msra.mxu0 0.0
    %3128 = vmatpush.msra.mxu0 0.0
    %3129 = vmatpush.msra.mxu0 0.0
    %3130 = vmatpush.msra.mxu0 0.0
    %3131 = vmatpush.msra.mxu0 0.0
    %3132 = vmatpush.msra.mxu0 0.0
    %3133 = vmatpush.msra.mxu0 0.0
    %3134 = vmatpush.msra.mxu0 %v3118
    %3135 = vmatpush.msra.mxu0 %v3117
    %3136 = vmatpush.msra.mxu0 %v3116
    %3137 = vmatpush.msra.mxu0 %v3115
    %3138 = vmatmul.f32.gmra.mxu0 %v3120
    %v3139 = vpop.f32.mrf.mxu0
    %v3140 = vadd.f32 0.0, %v3139
    %3141 = vdwg.mxu0
    %v3142 = vadd.f32 %v3106, %v3140
    %v3143 = vmax.f32 %v3110, %v3111
    %v3144 = vadd.f32 %v3143, %v3046
    %v3145 = vmax.f32 %v3144, 0.0
    %v3146 = vld [vmem:[%s5 + $0x60] sm:$0xff]
    %v3147 = vld [vmem:[%s5 + $0x68] sm:$0xff]
    %v3148 = vld [vmem:[%s5 + $0x70] sm:$0xff]
    %v3149 = vld [vmem:[%s5 + $0x78] sm:$0xff]
    %v3151 = vsel %vm3061, %v3145, 0
    %3153 = vmatpush.msra.mxu0 0.0
    %3154 = vmatpush.msra.mxu0 0.0
    %3155 = vmatpush.msra.mxu0 0.0
    %3156 = vmatpush.msra.mxu0 0.0
    %3157 = vmatpush.msra.mxu0 0.0
    %3158 = vmatpush.msra.mxu0 0.0
    %3159 = vmatpush.msra.mxu0 0.0
    %3160 = vmatpush.msra.mxu0 0.0
    %3161 = vmatpush.msra.mxu0 0.0
    %3162 = vmatpush.msra.mxu0 0.0
    %3163 = vmatpush.msra.mxu0 0.0
    %3164 = vmatpush.msra.mxu0 0.0
    %3165 = vmatpush.msra.mxu0 %v3149
    %3166 = vmatpush.msra.mxu0 %v3148
    %3167 = vmatpush.msra.mxu0 %v3147
    %3168 = vmatpush.msra.mxu0 %v3146
    %3169 = vmatmul.f32.gmra.mxu0 %v3151
    %v3170 = vpop.f32.mrf.mxu0
    %v3171 = vadd.f32 0.0, %v3170
    %3172 = vdwg.mxu0
    %v3173 = vadd.f32 %v3142, %v3171
    %v3174 = vld [vmem:[%s6] sm:$0x1]
    %v3176 = vperm.slane %v3174, 0
    %v3178 = vadd.f32 %v3173, %v3176
    %vm3179 = vcmask 15360
    %v3180 = vsel %vm3179, %v3178, -inf
    %3181 = vmax.xlane.f32.xlu0 %v3180
    %v3182 = vpop.xlane.xlu0 %3181
    %v3183 = vsub.f32 %v3178, %v3182
    %v3184 = vmul.f32 %v3183, 1.442695
    %v3185 = vpow.pop %v3184
    %v3186 = vsel %vm3179, %v3185, 0.0
    %3187 = vadd.xlane.f32.xlu0 %v3186
    %v3188 = vpop.xlane.xlu0 %3187
    %v3189 = vlog2.pop %v3188
    %v3190 = vmul.f32 %v3189, 0.6931472
    %v3191 = vadd.f32 %v3190, %v3182
    %v3192 = vsub.f32 %v3178, %v3191
    %vm3193 = vcmask 9216
    %3194 = vst.msk [vmem:[#allocation3] sm:$0x3] %vm3193, %v3192
    // Predicated region
    $region30: #{forward.1} parent=1 // pred_check
      _
    $region31: #{forward.1} parent=1 // pred_check_branch
      %3196 = sbr.rel (0) target = $region33
    $region32: #{forward.1} parent=1 // pred_region
      %3198 = vsyncadd [#allocation4], 0
      %s3200 = sshll.u32 [#allocation3], 4
      %s3201 = int_to_ptr.vmem [resolvable:$true] %s3200
      %s3202 = sshll.u32 %s7, 4
      %s3203 = int_to_ptr.hbm [resolvable:$true] %s3202
      %3205 = dma.vmem_to_hbm [thread:$0]  %s3201, 32, %s3203, [#allocation4]
    $region33: #{forward.1} parent=1 // pred_fallthru
      _
    // Predicated region
    $region34: #{forward.1} parent=1 // pred_check
      _
    $region35: #{forward.1} parent=1 // pred_check_branch
      %3207 = sbr.rel (0) target = $region37
    $region36: #{forward.1} parent=1 // pred_region
      %3209 = dma.done [#allocation4], 32
    $region37: #{forward.1} parent=1 // pred_fallthru
      _
    %3210 = vsyncpa [#allocation4], 1

</llo_original>
